<compile_context>
chip_gen: v5e
topology: v5e:2x2
jax: 0.10.0
libtpu: 0.0.40
codegen_flags: <defaults>
</compile_context>

<pallas_src>
import functools

import jax
import jax.numpy as jnp
from jax.experimental import pallas as pl
from jax.experimental.pallas import tpu as pltpu

EPS = 1e-5
_VMEM_TILE_BUDGET = 20 * 1024 * 1024      # conservative per-step working set (v7x-safe)
_VMEM_LIMIT_BYTES = 48 * 1024 * 1024      # explicit scoped-VMEM limit (< v7x 64 MiB)


def _round_up(x, m):
    return ((x + m - 1) // m) * m


# ----------------------------------------------------------------------------
# Fused kernel: one (batch, row-block) tile per grid step; VMEM-resident.
# ----------------------------------------------------------------------------
def make_kernel(TR, C, dz, dc, seg, H, dh):
    M = TR * C

    def kernel(zi_ref, za_ref, g_ref, b_ref,
               wi_ref, bi_ref, wa_ref, ba_ref, wf_ref, bf_ref,
               o_ref, attn_scr):
        gamma = g_ref[...]                                   # (1, dz) f32
        beta = b_ref[...]                                    # (1, dz) f32

        def layer_norm(x):                                   # two-pass (stable) variance
            mu = jnp.mean(x, axis=-1, keepdims=True)
            d = x - mu
            var = jnp.mean(d * d, axis=-1, keepdims=True)
            return d * jax.lax.rsqrt(var + EPS) * gamma + beta

        zi = layer_norm(zi_ref[0].reshape(M, dz).astype(jnp.float32)).astype(jnp.bfloat16)
        za = layer_norm(za_ref[0].reshape(M, dz).astype(jnp.float32)).astype(jnp.bfloat16)

        # Packed "fat" projections, bf16 operands, f32 accumulation.
        #   inter path: [Wq*scale | Wgate]  intra path: [Wk | Wv]   (128-aligned segments)
        y_i = jnp.dot(zi, wi_ref[...], preferred_element_type=jnp.float32) + bi_ref[...]
        y_a = jnp.dot(za, wa_ref[...], preferred_element_type=jnp.float32) + ba_ref[...]

        q = y_i[:, 0:dc].astype(jnp.bfloat16).reshape(TR, C, dc)        # scale pre-folded
        gate_lin = y_i[:, seg:seg + dc]                                  # (M, dc) f32
        k = y_a[:, 0:dc].astype(jnp.bfloat16).reshape(TR, C, dc)
        v = y_a[:, seg:seg + dc].astype(jnp.bfloat16).reshape(TR, C, dc)

        # Per-head attention (static loop, H small); results go straight into VMEM
        # scratch at static lane offsets -> no lane-wise concatenate, bounded live ranges.
        # NOTE: the PyTorch Linear_bias term is constant over the softmax axis and
        #       cancels exactly inside softmax, so it is omitted here.
        for h in range(H):
            sl = slice(h * dh, (h + 1) * dh)
            s = jnp.einsum('ljc,lic->lji', q[:, :, sl], k[:, :, sl],
                           preferred_element_type=jnp.float32)           # (TR, Cq, Ck)
            s = s - jnp.max(s, axis=-1, keepdims=True)
            p = jnp.exp(s)
            p = p * pl.reciprocal(jnp.sum(p, axis=-1, keepdims=True), approx=True)
            o_h = jnp.einsum('lji,lic->ljc', p.astype(jnp.bfloat16), v[:, :, sl],
                             preferred_element_type=jnp.float32)         # (TR, Cq, dh)
            attn_scr[:, h * dh:(h + 1) * dh] = o_h.reshape(M, dh)

        gate = pl.reciprocal(1.0 + jnp.exp(-gate_lin), approx=True)      # sigmoid (EUP)
        z = (attn_scr[...] * gate).astype(jnp.bfloat16)                  # (M, dc)

        out = jnp.dot(z, wf_ref[...], preferred_element_type=jnp.float32) + bf_ref[...]
        o_ref[0] = out.reshape(TR, C, dz).astype(o_ref.dtype)

    return kernel


# ----------------------------------------------------------------------------
# Row-block auto-sizing (conservative -> fits v7x's smaller VMEM as well).
# ----------------------------------------------------------------------------
def _pick_row_block(R, C, dz, dc, seg):
    best = 1
    for tr in range(1, R + 1):
        if R % tr:
            continue
        m = tr * C
        est = (4 * m * dz * 4            # double-buffered zi/za input blocks (f32)
               + 2 * m * dz * 4          # double-buffered output block
               + 2 * m * 2 * seg * 4     # y_i / y_a f32 activations
               + 2 * m * C * 4           # one head's scores + probs (f32)
               + 4 * m * dc * 4)         # q/k/v/gate/scratch (mixed bf16/f32, rounded up)
        if est <= _VMEM_TILE_BUDGET:
            best = tr
    return best


# ----------------------------------------------------------------------------
# One-time parameter packing (NOT in the per-call jit path).
# Weights are matmul-ready (in_features, out_features); scale folded into Wq/bq;
# segments zero-padded to 128-lane multiples; weights cast to bf16.
# ----------------------------------------------------------------------------
def pack_params(p, num_head, dim_head):
    dc = num_head * dim_head
    seg = _round_up(dc, 128)
    scale = 1.0 / float(dim_head) ** 0.5

    def pad_cols(w):
        return jnp.pad(w, ((0, 0), (0, seg - w.shape[1])))

    wi = jnp.concatenate([pad_cols(p["wq"] * scale), pad_cols(p["wg"])], axis=1)
    bi = jnp.concatenate([pad_cols(p["bq"] * scale), pad_cols(p["bg"])], axis=1)
    wa = jnp.concatenate([pad_cols(p["wk"]), pad_cols(p["wv"])], axis=1)
    ba = jnp.concatenate([pad_cols(p["bk"]), pad_cols(p["bv"])], axis=1)
    # NOTE: wb/bb (Linear_bias) deliberately not packed -- softmax-invariant (see kernel).
    return {
        "ln_g": p["ln_g"].astype(jnp.float32),
        "ln_b": p["ln_b"].astype(jnp.float32),
        "wi": wi.astype(jnp.bfloat16), "bi": bi.astype(jnp.float32),
        "wa": wa.astype(jnp.bfloat16), "ba": ba.astype(jnp.float32),
        "wf": p["wf"].astype(jnp.bfloat16), "bf": p["bf"].astype(jnp.float32),
    }


# ----------------------------------------------------------------------------
# Public wrapper: accepts (B, row, col, dz) inputs like the PyTorch module.
# ----------------------------------------------------------------------------
@functools.partial(jax.jit,
                   static_argnames=("num_head", "dim_head", "transpose", "row_block"))
def inter_cross_attention_forward(z_inter, z_intra, packed, *,
                                  num_head, dim_head, transpose=False, row_block=None):
    if transpose:                                       # glue: permute(0, 2, 1, 3)
        z_inter = jnp.swapaxes(z_inter, 1, 2)
        z_intra = jnp.swapaxes(z_intra, 1, 2)

    B, R, C, dz = z_inter.shape
    H, dh = num_head, dim_head
    dc = H * dh
    seg = packed["wi"].shape[1] // 2                    # 128-aligned segment width

    if row_block is not None:
        assert R % row_block == 0, (R, row_block)
        TR = row_block
    else:
        TR = _pick_row_block(R, C, dz, dc, seg)

    kernel = make_kernel(TR, C, dz, dc, seg, H, dh)
    out = pl.pallas_call(
        kernel,
        out_shape=jax.ShapeDtypeStruct((B, R, C, dz), jnp.float32),
        grid=(B, R // TR),
        in_specs=[
            pl.BlockSpec((1, TR, C, dz), lambda b, r: (b, r, 0, 0)),   # z_inter block
            pl.BlockSpec((1, TR, C, dz), lambda b, r: (b, r, 0, 0)),   # z_intra block
            pl.BlockSpec((1, dz), lambda b, r: (0, 0)),                # LN gamma
            pl.BlockSpec((1, dz), lambda b, r: (0, 0)),                # LN beta
            pl.BlockSpec((dz, 2 * seg), lambda b, r: (0, 0)),          # [Wq*s | Wgate]
            pl.BlockSpec((1, 2 * seg), lambda b, r: (0, 0)),
            pl.BlockSpec((dz, 2 * seg), lambda b, r: (0, 0)),          # [Wk | Wv]
            pl.BlockSpec((1, 2 * seg), lambda b, r: (0, 0)),
            pl.BlockSpec((dc, dz), lambda b, r: (0, 0)),               # W_final
            pl.BlockSpec((1, dz), lambda b, r: (0, 0)),
        ],
        out_specs=pl.BlockSpec((1, TR, C, dz), lambda b, r: (b, r, 0, 0)),
        scratch_shapes=[pltpu.VMEM((TR * C, dc), jnp.float32)],
        compiler_params=pltpu.CompilerParams(
            dimension_semantics=("parallel", "parallel"),
            vmem_limit_bytes=_VMEM_LIMIT_BYTES),
    )(z_inter, z_intra, packed["ln_g"], packed["ln_b"],
      packed["wi"], packed["bi"], packed["wa"], packed["ba"],
      packed["wf"], packed["bf"])

    if transpose:
        out = jnp.swapaxes(out, 1, 2)
    return out


# ----------------------------------------------------------------------------
# Deterministic synthetic parameters (matmul-ready layout, f32).
# ----------------------------------------------------------------------------
def init_params(key, dz, num_head, dim_head):
    dc = num_head * dim_head
    ks = jax.random.split(key, 14)

    def nrm(k, shape, scale=0.1):
        return scale * jax.random.normal(k, shape, jnp.float32)

    return {
        "ln_g": 1.0 + nrm(ks[0], (1, dz)),
        "ln_b": nrm(ks[1], (1, dz)),
        "wq": nrm(ks[2], (dz, dc)), "bq": nrm(ks[3], (1, dc)),
        "wk": nrm(ks[4], (dz, dc)), "bk": nrm(ks[5], (1, dc)),
        "wv": nrm(ks[6], (dz, dc)), "bv": nrm(ks[7], (1, dc)),
        "wb": nrm(ks[8], (dz, num_head)), "bb": nrm(ks[9], (1, num_head)),
        "wg": nrm(ks[10], (dz, dc)), "bg": nrm(ks[11], (1, dc)),
        "wf": nrm(ks[12], (dc, dz)), "bf": nrm(ks[13], (1, dz)),
    }


# ----------------------------------------------------------------------------
# Pure-JAX reference (mirrors the PyTorch forward 1:1, INCLUDING the attention bias).
# ----------------------------------------------------------------------------
def reference_forward(z_inter, z_intra, params, num_head, dim_head):
    HI = jax.lax.Precision.HIGHEST

    def ln(x):
        mu = jnp.mean(x, -1, keepdims=True)
        var = jnp.mean((x - mu) ** 2, -1, keepdims=True)
        return (x - mu) / jnp.sqrt(var + EPS) * params["ln_g"] + params["ln_b"]

    zi, za = ln(z_inter), ln(z_intra)
    B, R, C, _ = z_inter.shape
    H, dh = num_head, dim_head
    dc = H * dh

    def lin(x, w, b):
        return jnp.einsum('brcd,de->brce', x, w, precision=HI) + b

    def rs(x):
        return x.reshape(B, R, C, H, dh)

    q = rs(lin(zi, params["wq"], params["bq"]))
    k = rs(lin(za, params["wk"], params["bk"]))
    v = rs(lin(za, params["wv"], params["bv"]))
    bias = lin(zi, params["wb"], params["bb"])                      # (B,R,C,H)
    gate = jax.nn.sigmoid(rs(lin(zi, params["wg"], params["bg"])))

    scalar = 1.0 / jnp.sqrt(jnp.float32(dh))
    attn = jnp.einsum('bljhc,blihc->bljhi', q * scalar, k, precision=HI)
    attn = attn + bias[..., None]
    w = jax.nn.softmax(attn, axis=-1)
    o = jnp.einsum('bljhi,blihc->bljhc', w, v, precision=HI)
    z = (o * gate).reshape(B, R, C, dc)
    return jnp.einsum('brcd,de->brce', z, params["wf"], precision=HI) + params["bf"]


if __name__ == "__main__":
    # Module defaults: channel_z=64, num_head=4, dim_head=8 (dc=32); small spatial grid.
    B, ROW, COL, DZ = 2, 8, 16, 64
    NUM_HEAD, DIM_HEAD = 4, 8

    key = jax.random.PRNGKey(0)
    k1, k2, k3 = jax.random.split(key, 3)
    z_inter = jax.random.normal(k1, (B, ROW, COL, DZ), jnp.float32)
    z_intra = jax.random.normal(k2, (B, ROW, COL, DZ), jnp.float32)

    raw_params = init_params(k3, DZ, NUM_HEAD, DIM_HEAD)
    packed = pack_params(raw_params, NUM_HEAD, DIM_HEAD)   # one-time packing (not per call)

    # Default (heuristic) row block and an explicit smaller row block (exercises r-tiling).
    out = inter_cross_attention_forward(z_inter, z_intra, packed,
                                        num_head=NUM_HEAD, dim_head=DIM_HEAD)
    out = jax.block_until_ready(out)
    out_tiled = inter_cross_attention_forward(z_inter, z_intra, packed,
                                              num_head=NUM_HEAD, dim_head=DIM_HEAD,
                                              row_block=4)
    out_tiled = jax.block_until_ready(out_tiled)

    ref = reference_forward(z_inter, z_intra, raw_params, NUM_HEAD, DIM_HEAD)

    assert out.shape == (B, ROW, COL, DZ), out.shape
    assert bool(jnp.all(jnp.isfinite(out)))
    err = float(jnp.max(jnp.abs(out - ref)))
    err_t = float(jnp.max(jnp.abs(out_tiled - ref)))
    # bf16 MXU operands (f32 accumulation) vs f32 HIGHEST-precision reference.
    assert err < 5e-2, f"max abs err {err}"
    assert err_t < 5e-2, f"max abs err (row_block=4) {err_t}"
    print("KERNEL_OK")
</pallas_src>

<mosaic_0001>
module attributes {stable_mosaic.version = 11 : i64} {
  func.func @kernel(%arg0: i32, %arg1: i32, %arg2: memref<1x8x16x64xf32, #tpu.memory_space<vmem>>, %arg3: memref<1x8x16x64xf32, #tpu.memory_space<vmem>>, %arg4: memref<1x64xf32, #tpu.memory_space<vmem>>, %arg5: memref<1x64xf32, #tpu.memory_space<vmem>>, %arg6: memref<64x256xbf16, #tpu.memory_space<vmem>>, %arg7: memref<1x256xf32, #tpu.memory_space<vmem>>, %arg8: memref<64x256xbf16, #tpu.memory_space<vmem>>, %arg9: memref<1x256xf32, #tpu.memory_space<vmem>>, %arg10: memref<32x64xbf16, #tpu.memory_space<vmem>>, %arg11: memref<1x64xf32, #tpu.memory_space<vmem>>, %arg12: memref<1x8x16x64xf32, #tpu.memory_space<vmem>>, %arg13: memref<128x32xf32, #tpu.memory_space<vmem>>) attributes {dimension_semantics = [#tpu.dimension_semantics<parallel>, #tpu.dimension_semantics<parallel>], iteration_bounds = array<i64: 2, 1>, scalar_prefetch = 0 : i64, scratch_operands = 1 : i64, tpu.core_type = #tpu.core_type<tc>, window_params = [{transform_indices = @transform_0, window_bounds = array<i64: 1, 8, 16, 64>}, {transform_indices = @transform_1, window_bounds = array<i64: 1, 8, 16, 64>}, {pipeline_mode = #tpu.pipeline_mode<synchronous>, transform_indices = @transform_2, window_bounds = array<i64: 1, 64>}, {pipeline_mode = #tpu.pipeline_mode<synchronous>, transform_indices = @transform_3, window_bounds = array<i64: 1, 64>}, {pipeline_mode = #tpu.pipeline_mode<synchronous>, transform_indices = @transform_4, window_bounds = array<i64: 64, 256>}, {pipeline_mode = #tpu.pipeline_mode<synchronous>, transform_indices = @transform_5, window_bounds = array<i64: 1, 256>}, {pipeline_mode = #tpu.pipeline_mode<synchronous>, transform_indices = @transform_6, window_bounds = array<i64: 64, 256>}, {pipeline_mode = #tpu.pipeline_mode<synchronous>, transform_indices = @transform_7, window_bounds = array<i64: 1, 256>}, {pipeline_mode = #tpu.pipeline_mode<synchronous>, transform_indices = @transform_8, window_bounds = array<i64: 32, 64>}, {pipeline_mode = #tpu.pipeline_mode<synchronous>, transform_indices = @transform_9, window_bounds = array<i64: 1, 64>}, {transform_indices = @transform_10, window_bounds = array<i64: 1, 8, 16, 64>}]} {
    %c0 = arith.constant 0 : index
    %c0_0 = arith.constant 0 : index
    %0 = vector.load %arg4[%c0, %c0_0] : memref<1x64xf32, #tpu.memory_space<vmem>>, vector<1x64xf32>
    %c0_1 = arith.constant 0 : index
    %c0_2 = arith.constant 0 : index
    %1 = vector.load %arg5[%c0_1, %c0_2] : memref<1x64xf32, #tpu.memory_space<vmem>>, vector<1x64xf32>
    %c0_3 = arith.constant 0 : index
    %c0_4 = arith.constant 0 : index
    %c0_5 = arith.constant 0 : index
    %c0_6 = arith.constant 0 : index
    %2 = vector.load %arg2[%c0_3, %c0_4, %c0_5, %c0_6] : memref<1x8x16x64xf32, #tpu.memory_space<vmem>>, vector<1x8x16x64xf32>
    %3 = vector.shape_cast %2 : vector<1x8x16x64xf32> to vector<8x16x64xf32>
    %4 = vector.shape_cast %3 : vector<8x16x64xf32> to vector<128x64xf32>
    %cst = arith.constant dense<0.000000e+00> : vector<128xf32>
    %5 = vector.multi_reduction <add>, %4, %cst [1] : vector<128x64xf32> to vector<128xf32>
    %6 = vector.shape_cast %5 : vector<128xf32> to vector<128x1xf32>
    %cst_7 = arith.constant 6.400000e+01 : f32
    %7 = vector.broadcast %cst_7 : f32 to vector<128x1xf32>
    %8 = arith.divf %6, %7 : vector<128x1xf32>
    %9 = vector.broadcast %8 : vector<128x1xf32> to vector<128x64xf32>
    %10 = arith.subf %4, %9 : vector<128x64xf32>
    %11 = arith.mulf %10, %10 : vector<128x64xf32>
    %cst_8 = arith.constant dense<0.000000e+00> : vector<128xf32>
    %12 = vector.multi_reduction <add>, %11, %cst_8 [1] : vector<128x64xf32> to vector<128xf32>
    %13 = vector.shape_cast %12 : vector<128xf32> to vector<128x1xf32>
    %cst_9 = arith.constant 6.400000e+01 : f32
    %14 = vector.broadcast %cst_9 : f32 to vector<128x1xf32>
    %15 = arith.divf %13, %14 : vector<128x1xf32>
    %cst_10 = arith.constant 9.99999974E-6 : f32
    %16 = vector.broadcast %cst_10 : f32 to vector<128x1xf32>
    %17 = arith.addf %15, %16 : vector<128x1xf32>
    %18 = math.rsqrt %17 : vector<128x1xf32>
    %19 = vector.broadcast %18 : vector<128x1xf32> to vector<128x64xf32>
    %20 = arith.mulf %10, %19 : vector<128x64xf32>
    %21 = vector.broadcast %0 : vector<1x64xf32> to vector<128x64xf32>
    %22 = arith.mulf %20, %21 : vector<128x64xf32>
    %23 = vector.broadcast %1 : vector<1x64xf32> to vector<128x64xf32>
    %24 = arith.addf %22, %23 : vector<128x64xf32>
    %25 = arith.truncf %24 : vector<128x64xf32> to vector<128x64xbf16>
    %c0_11 = arith.constant 0 : index
    %c0_12 = arith.constant 0 : index
    %c0_13 = arith.constant 0 : index
    %c0_14 = arith.constant 0 : index
    %26 = vector.load %arg3[%c0_11, %c0_12, %c0_13, %c0_14] : memref<1x8x16x64xf32, #tpu.memory_space<vmem>>, vector<1x8x16x64xf32>
    %27 = vector.shape_cast %26 : vector<1x8x16x64xf32> to vector<8x16x64xf32>
    %28 = vector.shape_cast %27 : vector<8x16x64xf32> to vector<128x64xf32>
    %cst_15 = arith.constant dense<0.000000e+00> : vector<128xf32>
    %29 = vector.multi_reduction <add>, %28, %cst_15 [1] : vector<128x64xf32> to vector<128xf32>
    %30 = vector.shape_cast %29 : vector<128xf32> to vector<128x1xf32>
    %cst_16 = arith.constant 6.400000e+01 : f32
    %31 = vector.broadcast %cst_16 : f32 to vector<128x1xf32>
    %32 = arith.divf %30, %31 : vector<128x1xf32>
    %33 = vector.broadcast %32 : vector<128x1xf32> to vector<128x64xf32>
    %34 = arith.subf %28, %33 : vector<128x64xf32>
    %35 = arith.mulf %34, %34 : vector<128x64xf32>
    %cst_17 = arith.constant dense<0.000000e+00> : vector<128xf32>
    %36 = vector.multi_reduction <add>, %35, %cst_17 [1] : vector<128x64xf32> to vector<128xf32>
    %37 = vector.shape_cast %36 : vector<128xf32> to vector<128x1xf32>
    %cst_18 = arith.constant 6.400000e+01 : f32
    %38 = vector.broadcast %cst_18 : f32 to vector<128x1xf32>
    %39 = arith.divf %37, %38 : vector<128x1xf32>
    %cst_19 = arith.constant 9.99999974E-6 : f32
    %40 = vector.broadcast %cst_19 : f32 to vector<128x1xf32>
    %41 = arith.addf %39, %40 : vector<128x1xf32>
    %42 = math.rsqrt %41 : vector<128x1xf32>
    %43 = vector.broadcast %42 : vector<128x1xf32> to vector<128x64xf32>
    %44 = arith.mulf %34, %43 : vector<128x64xf32>
    %45 = vector.broadcast %0 : vector<1x64xf32> to vector<128x64xf32>
    %46 = arith.mulf %44, %45 : vector<128x64xf32>
    %47 = vector.broadcast %1 : vector<1x64xf32> to vector<128x64xf32>
    %48 = arith.addf %46, %47 : vector<128x64xf32>
    %49 = arith.truncf %48 : vector<128x64xf32> to vector<128x64xbf16>
    %c0_20 = arith.constant 0 : index
    %c0_21 = arith.constant 0 : index
    %50 = vector.load %arg6[%c0_20, %c0_21] : memref<64x256xbf16, #tpu.memory_space<vmem>>, vector<64x256xbf16>
    %cst_22 = arith.constant dense<0.000000e+00> : vector<128x256xf32>
    %51 = tpu.matmul %25, %50, %cst_22 {dimension_numbers = #tpu.dot_dimension_numbers<[1], [0], [0], [1], [0, 0, 1, 1], [], []>} : vector<128x64xbf16>, vector<64x256xbf16>, vector<128x256xf32> -> vector<128x256xf32>
    %c0_23 = arith.constant 0 : index
    %c0_24 = arith.constant 0 : index
    %52 = vector.load %arg7[%c0_23, %c0_24] : memref<1x256xf32, #tpu.memory_space<vmem>>, vector<1x256xf32>
    %53 = vector.broadcast %52 : vector<1x256xf32> to vector<128x256xf32>
    %54 = arith.addf %51, %53 : vector<128x256xf32>
    %c0_25 = arith.constant 0 : index
    %c0_26 = arith.constant 0 : index
    %55 = vector.load %arg8[%c0_25, %c0_26] : memref<64x256xbf16, #tpu.memory_space<vmem>>, vector<64x256xbf16>
    %cst_27 = arith.constant dense<0.000000e+00> : vector<128x256xf32>
    %56 = tpu.matmul %49, %55, %cst_27 {dimension_numbers = #tpu.dot_dimension_numbers<[1], [0], [0], [1], [0, 0, 1, 1], [], []>} : vector<128x64xbf16>, vector<64x256xbf16>, vector<128x256xf32> -> vector<128x256xf32>
    %c0_28 = arith.constant 0 : index
    %c0_29 = arith.constant 0 : index
    %57 = vector.load %arg9[%c0_28, %c0_29] : memref<1x256xf32, #tpu.memory_space<vmem>>, vector<1x256xf32>
    %58 = vector.broadcast %57 : vector<1x256xf32> to vector<128x256xf32>
    %59 = arith.addf %56, %58 : vector<128x256xf32>
    %60 = vector.extract_strided_slice %54 {offsets = [0, 0], sizes = [128, 32], strides = [1, 1]} : vector<128x256xf32> to vector<128x32xf32>
    %61 = arith.truncf %60 : vector<128x32xf32> to vector<128x32xbf16>
    %62 = vector.shape_cast %61 : vector<128x32xbf16> to vector<8x16x32xbf16>
    %63 = vector.extract_strided_slice %54 {offsets = [0, 128], sizes = [128, 32], strides = [1, 1]} : vector<128x256xf32> to vector<128x32xf32>
    %64 = vector.extract_strided_slice %59 {offsets = [0, 0], sizes = [128, 32], strides = [1, 1]} : vector<128x256xf32> to vector<128x32xf32>
    %65 = arith.truncf %64 : vector<128x32xf32> to vector<128x32xbf16>
    %66 = vector.shape_cast %65 : vector<128x32xbf16> to vector<8x16x32xbf16>
    %67 = vector.extract_strided_slice %59 {offsets = [0, 128], sizes = [128, 32], strides = [1, 1]} : vector<128x256xf32> to vector<128x32xf32>
    %68 = arith.truncf %67 : vector<128x32xf32> to vector<128x32xbf16>
    %69 = vector.shape_cast %68 : vector<128x32xbf16> to vector<8x16x32xbf16>
    %70 = vector.extract_strided_slice %62 {offsets = [0, 0, 0], sizes = [8, 16, 8], strides = [1, 1, 1]} : vector<8x16x32xbf16> to vector<8x16x8xbf16>
    %71 = vector.extract_strided_slice %66 {offsets = [0, 0, 0], sizes = [8, 16, 8], strides = [1, 1, 1]} : vector<8x16x32xbf16> to vector<8x16x8xbf16>
    "tpu.trace_start"() <{level = 10 : i32, message = "ljc,lic->lji"}> : () -> ()
    %cst_30 = arith.constant dense<0.000000e+00> : vector<8x16x16xf32>
    %72 = tpu.matmul %70, %71, %cst_30 {dimension_numbers = #tpu.dot_dimension_numbers<[2], [2], [1], [1], [0, 0, 0, 1, 1, 1], [0], [0]>} : vector<8x16x8xbf16>, vector<8x16x8xbf16>, vector<8x16x16xf32> -> vector<8x16x16xf32>
    "tpu.trace_stop"() : () -> ()
    %cst_31 = arith.constant dense<0xFF800000> : vector<8x16xf32>
    %73 = vector.multi_reduction <maximumf>, %72, %cst_31 [2] : vector<8x16x16xf32> to vector<8x16xf32>
    %74 = vector.shape_cast %73 : vector<8x16xf32> to vector<8x16x1xf32>
    %75 = vector.broadcast %74 : vector<8x16x1xf32> to vector<8x16x16xf32>
    %76 = arith.subf %72, %75 : vector<8x16x16xf32>
    %77 = math.exp %76 : vector<8x16x16xf32>
    %cst_32 = arith.constant dense<0.000000e+00> : vector<8x16xf32>
    %78 = vector.multi_reduction <add>, %77, %cst_32 [2] : vector<8x16x16xf32> to vector<8x16xf32>
    %79 = vector.shape_cast %78 : vector<8x16xf32> to vector<8x16x1xf32>
    %80 = tpu.reciprocal %79 {approx = true} : vector<8x16x1xf32> -> vector<8x16x1xf32>
    %81 = vector.broadcast %80 : vector<8x16x1xf32> to vector<8x16x16xf32>
    %82 = arith.mulf %77, %81 : vector<8x16x16xf32>
    %83 = arith.truncf %82 : vector<8x16x16xf32> to vector<8x16x16xbf16>
    %84 = vector.extract_strided_slice %69 {offsets = [0, 0, 0], sizes = [8, 16, 8], strides = [1, 1, 1]} : vector<8x16x32xbf16> to vector<8x16x8xbf16>
    "tpu.trace_start"() <{level = 10 : i32, message = "lji,lic->ljc"}> : () -> ()
    %cst_33 = arith.constant dense<0.000000e+00> : vector<8x16x8xf32>
    %85 = tpu.matmul %83, %84, %cst_33 {dimension_numbers = #tpu.dot_dimension_numbers<[2], [1], [1], [2], [0, 0, 0, 1, 1, 2], [0], [0]>} : vector<8x16x16xbf16>, vector<8x16x8xbf16>, vector<8x16x8xf32> -> vector<8x16x8xf32>
    "tpu.trace_stop"() : () -> ()
    %86 = vector.shape_cast %85 : vector<8x16x8xf32> to vector<128x8xf32>
    %c0_34 = arith.constant 0 : index
    %c0_35 = arith.constant 0 : index
    %87 = vector.load %arg13[%c0_34, %c0_35] : memref<128x32xf32, #tpu.memory_space<vmem>>, vector<128x8xf32>
    tpu.vector_store %arg13[%c0_34, %c0_35], %86 {strides = array<i32>} : memref<128x32xf32, #tpu.memory_space<vmem>>, vector<128x8xf32>,
    %88 = vector.extract_strided_slice %62 {offsets = [0, 0, 8], sizes = [8, 16, 8], strides = [1, 1, 1]} : vector<8x16x32xbf16> to vector<8x16x8xbf16>
    %89 = vector.extract_strided_slice %66 {offsets = [0, 0, 8], sizes = [8, 16, 8], strides = [1, 1, 1]} : vector<8x16x32xbf16> to vector<8x16x8xbf16>
    "tpu.trace_start"() <{level = 10 : i32, message = "ljc,lic->lji"}> : () -> ()
    %cst_36 = arith.constant dense<0.000000e+00> : vector<8x16x16xf32>
    %90 = tpu.matmul %88, %89, %cst_36 {dimension_numbers = #tpu.dot_dimension_numbers<[2], [2], [1], [1], [0, 0, 0, 1, 1, 1], [0], [0]>} : vector<8x16x8xbf16>, vector<8x16x8xbf16>, vector<8x16x16xf32> -> vector<8x16x16xf32>
    "tpu.trace_stop"() : () -> ()
    %cst_37 = arith.constant dense<0xFF800000> : vector<8x16xf32>
    %91 = vector.multi_reduction <maximumf>, %90, %cst_37 [2] : vector<8x16x16xf32> to vector<8x16xf32>
    %92 = vector.shape_cast %91 : vector<8x16xf32> to vector<8x16x1xf32>
    %93 = vector.broadcast %92 : vector<8x16x1xf32> to vector<8x16x16xf32>
    %94 = arith.subf %90, %93 : vector<8x16x16xf32>
    %95 = math.exp %94 : vector<8x16x16xf32>
    %cst_38 = arith.constant dense<0.000000e+00> : vector<8x16xf32>
    %96 = vector.multi_reduction <add>, %95, %cst_38 [2] : vector<8x16x16xf32> to vector<8x16xf32>
    %97 = vector.shape_cast %96 : vector<8x16xf32> to vector<8x16x1xf32>
    %98 = tpu.reciprocal %97 {approx = true} : vector<8x16x1xf32> -> vector<8x16x1xf32>
    %99 = vector.broadcast %98 : vector<8x16x1xf32> to vector<8x16x16xf32>
    %100 = arith.mulf %95, %99 : vector<8x16x16xf32>
    %101 = arith.truncf %100 : vector<8x16x16xf32> to vector<8x16x16xbf16>
    %102 = vector.extract_strided_slice %69 {offsets = [0, 0, 8], sizes = [8, 16, 8], strides = [1, 1, 1]} : vector<8x16x32xbf16> to vector<8x16x8xbf16>
    "tpu.trace_start"() <{level = 10 : i32, message = "lji,lic->ljc"}> : () -> ()
    %cst_39 = arith.constant dense<0.000000e+00> : vector<8x16x8xf32>
    %103 = tpu.matmul %101, %102, %cst_39 {dimension_numbers = #tpu.dot_dimension_numbers<[2], [1], [1], [2], [0, 0, 0, 1, 1, 2], [0], [0]>} : vector<8x16x16xbf16>, vector<8x16x8xbf16>, vector<8x16x8xf32> -> vector<8x16x8xf32>
    "tpu.trace_stop"() : () -> ()
    %104 = vector.shape_cast %103 : vector<8x16x8xf32> to vector<128x8xf32>
    %c0_40 = arith.constant 0 : index
    %c8 = arith.constant 8 : index
    %105 = vector.load %arg13[%c0_40, %c8] : memref<128x32xf32, #tpu.memory_space<vmem>>, vector<128x8xf32>
    tpu.vector_store %arg13[%c0_40, %c8], %104 {strides = array<i32>} : memref<128x32xf32, #tpu.memory_space<vmem>>, vector<128x8xf32>,
    %106 = vector.extract_strided_slice %62 {offsets = [0, 0, 16], sizes = [8, 16, 8], strides = [1, 1, 1]} : vector<8x16x32xbf16> to vector<8x16x8xbf16>
    %107 = vector.extract_strided_slice %66 {offsets = [0, 0, 16], sizes = [8, 16, 8], strides = [1, 1, 1]} : vector<8x16x32xbf16> to vector<8x16x8xbf16>
    "tpu.trace_start"() <{level = 10 : i32, message = "ljc,lic->lji"}> : () -> ()
    %cst_41 = arith.constant dense<0.000000e+00> : vector<8x16x16xf32>
    %108 = tpu.matmul %106, %107, %cst_41 {dimension_numbers = #tpu.dot_dimension_numbers<[2], [2], [1], [1], [0, 0, 0, 1, 1, 1], [0], [0]>} : vector<8x16x8xbf16>, vector<8x16x8xbf16>, vector<8x16x16xf32> -> vector<8x16x16xf32>
    "tpu.trace_stop"() : () -> ()
    %cst_42 = arith.constant dense<0xFF800000> : vector<8x16xf32>
    %109 = vector.multi_reduction <maximumf>, %108, %cst_42 [2] : vector<8x16x16xf32> to vector<8x16xf32>
    %110 = vector.shape_cast %109 : vector<8x16xf32> to vector<8x16x1xf32>
    %111 = vector.broadcast %110 : vector<8x16x1xf32> to vector<8x16x16xf32>
    %112 = arith.subf %108, %111 : vector<8x16x16xf32>
    %113 = math.exp %112 : vector<8x16x16xf32>
    %cst_43 = arith.constant dense<0.000000e+00> : vector<8x16xf32>
    %114 = vector.multi_reduction <add>, %113, %cst_43 [2] : vector<8x16x16xf32> to vector<8x16xf32>
    %115 = vector.shape_cast %114 : vector<8x16xf32> to vector<8x16x1xf32>
    %116 = tpu.reciprocal %115 {approx = true} : vector<8x16x1xf32> -> vector<8x16x1xf32>
    %117 = vector.broadcast %116 : vector<8x16x1xf32> to vector<8x16x16xf32>
    %118 = arith.mulf %113, %117 : vector<8x16x16xf32>
    %119 = arith.truncf %118 : vector<8x16x16xf32> to vector<8x16x16xbf16>
    %120 = vector.extract_strided_slice %69 {offsets = [0, 0, 16], sizes = [8, 16, 8], strides = [1, 1, 1]} : vector<8x16x32xbf16> to vector<8x16x8xbf16>
    "tpu.trace_start"() <{level = 10 : i32, message = "lji,lic->ljc"}> : () -> ()
    %cst_44 = arith.constant dense<0.000000e+00> : vector<8x16x8xf32>
    %121 = tpu.matmul %119, %120, %cst_44 {dimension_numbers = #tpu.dot_dimension_numbers<[2], [1], [1], [2], [0, 0, 0, 1, 1, 2], [0], [0]>} : vector<8x16x16xbf16>, vector<8x16x8xbf16>, vector<8x16x8xf32> -> vector<8x16x8xf32>
    "tpu.trace_stop"() : () -> ()
    %122 = vector.shape_cast %121 : vector<8x16x8xf32> to vector<128x8xf32>
    %c0_45 = arith.constant 0 : index
    %c16 = arith.constant 16 : index
    %123 = vector.load %arg13[%c0_45, %c16] : memref<128x32xf32, #tpu.memory_space<vmem>>, vector<128x8xf32>
    tpu.vector_store %arg13[%c0_45, %c16], %122 {strides = array<i32>} : memref<128x32xf32, #tpu.memory_space<vmem>>, vector<128x8xf32>,
    %124 = vector.extract_strided_slice %62 {offsets = [0, 0, 24], sizes = [8, 16, 8], strides = [1, 1, 1]} : vector<8x16x32xbf16> to vector<8x16x8xbf16>
    %125 = vector.extract_strided_slice %66 {offsets = [0, 0, 24], sizes = [8, 16, 8], strides = [1, 1, 1]} : vector<8x16x32xbf16> to vector<8x16x8xbf16>
    "tpu.trace_start"() <{level = 10 : i32, message = "ljc,lic->lji"}> : () -> ()
    %cst_46 = arith.constant dense<0.000000e+00> : vector<8x16x16xf32>
    %126 = tpu.matmul %124, %125, %cst_46 {dimension_numbers = #tpu.dot_dimension_numbers<[2], [2], [1], [1], [0, 0, 0, 1, 1, 1], [0], [0]>} : vector<8x16x8xbf16>, vector<8x16x8xbf16>, vector<8x16x16xf32> -> vector<8x16x16xf32>
    "tpu.trace_stop"() : () -> ()
    %cst_47 = arith.constant dense<0xFF800000> : vector<8x16xf32>
    %127 = vector.multi_reduction <maximumf>, %126, %cst_47 [2] : vector<8x16x16xf32> to vector<8x16xf32>
    %128 = vector.shape_cast %127 : vector<8x16xf32> to vector<8x16x1xf32>
    %129 = vector.broadcast %128 : vector<8x16x1xf32> to vector<8x16x16xf32>
    %130 = arith.subf %126, %129 : vector<8x16x16xf32>
    %131 = math.exp %130 : vector<8x16x16xf32>
    %cst_48 = arith.constant dense<0.000000e+00> : vector<8x16xf32>
    %132 = vector.multi_reduction <add>, %131, %cst_48 [2] : vector<8x16x16xf32> to vector<8x16xf32>
    %133 = vector.shape_cast %132 : vector<8x16xf32> to vector<8x16x1xf32>
    %134 = tpu.reciprocal %133 {approx = true} : vector<8x16x1xf32> -> vector<8x16x1xf32>
    %135 = vector.broadcast %134 : vector<8x16x1xf32> to vector<8x16x16xf32>
    %136 = arith.mulf %131, %135 : vector<8x16x16xf32>
    %137 = arith.truncf %136 : vector<8x16x16xf32> to vector<8x16x16xbf16>
    %138 = vector.extract_strided_slice %69 {offsets = [0, 0, 24], sizes = [8, 16, 8], strides = [1, 1, 1]} : vector<8x16x32xbf16> to vector<8x16x8xbf16>
    "tpu.trace_start"() <{level = 10 : i32, message = "lji,lic->ljc"}> : () -> ()
    %cst_49 = arith.constant dense<0.000000e+00> : vector<8x16x8xf32>
    %139 = tpu.matmul %137, %138, %cst_49 {dimension_numbers = #tpu.dot_dimension_numbers<[2], [1], [1], [2], [0, 0, 0, 1, 1, 2], [0], [0]>} : vector<8x16x16xbf16>, vector<8x16x8xbf16>, vector<8x16x8xf32> -> vector<8x16x8xf32>
    "tpu.trace_stop"() : () -> ()
    %140 = vector.shape_cast %139 : vector<8x16x8xf32> to vector<128x8xf32>
    %c0_50 = arith.constant 0 : index
    %c24 = arith.constant 24 : index
    %141 = vector.load %arg13[%c0_50, %c24] : memref<128x32xf32, #tpu.memory_space<vmem>>, vector<128x8xf32>
    tpu.vector_store %arg13[%c0_50, %c24], %140 {strides = array<i32>} : memref<128x32xf32, #tpu.memory_space<vmem>>, vector<128x8xf32>,
    %cst_51 = arith.constant 0.000000e+00 : f32
    %142 = vector.broadcast %cst_51 : f32 to vector<128x32xf32>
    %143 = arith.subf %142, %63 : vector<128x32xf32>
    %144 = math.exp %143 : vector<128x32xf32>
    %cst_52 = arith.constant 1.000000e+00 : f32
    %145 = vector.broadcast %cst_52 : f32 to vector<128x32xf32>
    %146 = arith.addf %145, %144 : vector<128x32xf32>
    %147 = tpu.reciprocal %146 {approx = true} : vector<128x32xf32> -> vector<128x32xf32>
    %c0_53 = arith.constant 0 : index
    %c0_54 = arith.constant 0 : index
    %148 = vector.load %arg13[%c0_53, %c0_54] : memref<128x32xf32, #tpu.memory_space<vmem>>, vector<128x32xf32>
    %149 = arith.mulf %148, %147 : vector<128x32xf32>
    %150 = arith.truncf %149 : vector<128x32xf32> to vector<128x32xbf16>
    %c0_55 = arith.constant 0 : index
    %c0_56 = arith.constant 0 : index
    %151 = vector.load %arg10[%c0_55, %c0_56] : memref<32x64xbf16, #tpu.memory_space<vmem>>, vector<32x64xbf16>
    %cst_57 = arith.constant dense<0.000000e+00> : vector<128x64xf32>
    %152 = tpu.matmul %150, %151, %cst_57 {dimension_numbers = #tpu.dot_dimension_numbers<[1], [0], [0], [1], [0, 0, 1, 1], [], []>} : vector<128x32xbf16>, vector<32x64xbf16>, vector<128x64xf32> -> vector<128x64xf32>
    %c0_58 = arith.constant 0 : index
    %c0_59 = arith.constant 0 : index
    %153 = vector.load %arg11[%c0_58, %c0_59] : memref<1x64xf32, #tpu.memory_space<vmem>>, vector<1x64xf32>
    %154 = vector.broadcast %153 : vector<1x64xf32> to vector<128x64xf32>
    %155 = arith.addf %152, %154 : vector<128x64xf32>
    %156 = vector.shape_cast %155 : vector<128x64xf32> to vector<8x16x64xf32>
    %c0_60 = arith.constant 0 : index
    %c0_61 = arith.constant 0 : index
    %c0_62 = arith.constant 0 : index
    %c0_63 = arith.constant 0 : index
    %157 = vector.load %arg12[%c0_60, %c0_61, %c0_62, %c0_63] : memref<1x8x16x64xf32, #tpu.memory_space<vmem>>, vector<1x8x16x64xf32>
    %158 = vector.shape_cast %157 : vector<1x8x16x64xf32> to vector<8x16x64xf32>
    %159 = vector.shape_cast %156 : vector<8x16x64xf32> to vector<1x8x16x64xf32>
    tpu.vector_store %arg12[%c0_60, %c0_61, %c0_62, %c0_63], %159 {strides = array<i32>} : memref<1x8x16x64xf32, #tpu.memory_space<vmem>>, vector<1x8x16x64xf32>,
    return
  }
  func.func @transform_0(%arg0: i32, %arg1: i32) -> (i32, i32, i32, i32) {
    %c0_i32 = arith.constant 0 : i32
    %c0_i32_0 = arith.constant 0 : i32
    %c0_i32_1 = arith.constant 0 : i32
    return %arg0, %arg1, %c0_i32, %c0_i32_0 : i32, i32, i32, i32
  }
  func.func @transform_1(%arg0: i32, %arg1: i32) -> (i32, i32, i32, i32) {
    %c0_i32 = arith.constant 0 : i32
    %c0_i32_0 = arith.constant 0 : i32
    %c0_i32_1 = arith.constant 0 : i32
    return %arg0, %arg1, %c0_i32, %c0_i32_0 : i32, i32, i32, i32
  }
  func.func @transform_2(%arg0: i32, %arg1: i32) -> (i32, i32) {
    %c0_i32 = arith.constant 0 : i32
    %c0_i32_0 = arith.constant 0 : i32
    %c0_i32_1 = arith.constant 0 : i32
    return %c0_i32, %c0_i32_0 : i32, i32
  }
  func.func @transform_3(%arg0: i32, %arg1: i32) -> (i32, i32) {
    %c0_i32 = arith.constant 0 : i32
    %c0_i32_0 = arith.constant 0 : i32
    %c0_i32_1 = arith.constant 0 : i32
    return %c0_i32, %c0_i32_0 : i32, i32
  }
  func.func @transform_4(%arg0: i32, %arg1: i32) -> (i32, i32) {
    %c0_i32 = arith.constant 0 : i32
    %c0_i32_0 = arith.constant 0 : i32
    %c0_i32_1 = arith.constant 0 : i32
    return %c0_i32, %c0_i32_0 : i32, i32
  }
  func.func @transform_5(%arg0: i32, %arg1: i32) -> (i32, i32) {
    %c0_i32 = arith.constant 0 : i32
    %c0_i32_0 = arith.constant 0 : i32
    %c0_i32_1 = arith.constant 0 : i32
    return %c0_i32, %c0_i32_0 : i32, i32
  }
  func.func @transform_6(%arg0: i32, %arg1: i32) -> (i32, i32) {
    %c0_i32 = arith.constant 0 : i32
    %c0_i32_0 = arith.constant 0 : i32
    %c0_i32_1 = arith.constant 0 : i32
    return %c0_i32, %c0_i32_0 : i32, i32
  }
  func.func @transform_7(%arg0: i32, %arg1: i32) -> (i32, i32) {
    %c0_i32 = arith.constant 0 : i32
    %c0_i32_0 = arith.constant 0 : i32
    %c0_i32_1 = arith.constant 0 : i32
    return %c0_i32, %c0_i32_0 : i32, i32
  }
  func.func @transform_8(%arg0: i32, %arg1: i32) -> (i32, i32) {
    %c0_i32 = arith.constant 0 : i32
    %c0_i32_0 = arith.constant 0 : i32
    %c0_i32_1 = arith.constant 0 : i32
    return %c0_i32, %c0_i32_0 : i32, i32
  }
  func.func @transform_9(%arg0: i32, %arg1: i32) -> (i32, i32) {
    %c0_i32 = arith.constant 0 : i32
    %c0_i32_0 = arith.constant 0 : i32
    %c0_i32_1 = arith.constant 0 : i32
    return %c0_i32, %c0_i32_0 : i32, i32
  }
  func.func @transform_10(%arg0: i32, %arg1: i32) -> (i32, i32, i32, i32) {
    %c0_i32 = arith.constant 0 : i32
    %c0_i32_0 = arith.constant 0 : i32
    %c0_i32_1 = arith.constant 0 : i32
    return %arg0, %arg1, %c0_i32, %c0_i32_0 : i32, i32, i32, i32
  }
}

</mosaic_0001>

<llo_original>
// kernel: inter_cross_attention_forward.1
$region0: #{inter_cross_attention_forward.1}
  #allocation0 [shape = 'u32[]', space=smem, size = 0x4, offset = 0x4, fixed_abs, tag = 'smem constant byte address 0x4 - core index']
  #allocation1 [shape = 'u32[72,128]{1,0:T(1,128)}', space=vmem, size = 0x9000, scoped, tag = 'internal scratch']
  #allocation2 [shape = 'f32[128,32]{1,0:T(8,128)}', space=vmem, size = 0x10000, scoped, tag = 'scratch operand']
  %s0 = inlined_call_operand.hbm [shape: f32[2,8,16,64], index: 0, kind: input, shape index: {}]
  %s1 = inlined_call_operand.hbm [shape: f32[2,8,16,64], index: 1, kind: input, shape index: {}]
  %s2 = inlined_call_operand.vmem [shape: f32[1,64], index: 2, kind: input, shape index: {}]
  %s3 = inlined_call_operand.vmem [shape: f32[1,64], index: 3, kind: input, shape index: {}]
  %s4 = inlined_call_operand.hbm [shape: bf16[64,256], index: 4, kind: input, shape index: {}]
  %s5 = inlined_call_operand.vmem [shape: f32[1,256], index: 5, kind: input, shape index: {}]
  %s6 = inlined_call_operand.hbm [shape: bf16[64,256], index: 6, kind: input, shape index: {}]
  %s7 = inlined_call_operand.hbm [shape: f32[1,256], index: 7, kind: input, shape index: {}]
  %s8 = inlined_call_operand.hbm [shape: bf16[32,64], index: 8, kind: input, shape index: {}]
  %s9 = inlined_call_operand.hbm [shape: f32[1,64], index: 9, kind: input, shape index: {}]
  %s10 = inlined_call_operand.hbm [shape: f32[2,8,16,64], index: 10, kind: output, shape index: {}]
  %s11 = sld [smem:[#allocation0]]
  $region101: #{inter_cross_attention_forward.1} parent=0
    _
  %s13 = ssub.s32 1, %s11
  %s14 = scalar_select 0, %s13, %s11
  $region1: #{inter_cross_attention_forward.1} parent=0
    #allocation3 [shape = 'u8[131072]{0}', space=vmem, size = 0x20000, scoped, tag = 'input window, operand 0']
    #allocation4 [shape = 's32[2]{0}', space=sflag, size = 0x8, scoped, tag = 'scoped memory for inter_cross_attention_forward.1']
    #allocation5 [shape = 's32[2]{0}', space=sflag, size = 0x8, scoped, tag = 'scoped memory for inter_cross_attention_forward.1']
    #allocation6 [shape = 'u8[131072]{0}', space=vmem, size = 0x20000, scoped, tag = 'input window, operand 1']
    #allocation7 [shape = 's32[2]{0}', space=sflag, size = 0x8, scoped, tag = 'scoped memory for inter_cross_attention_forward.1']
    #allocation8 [shape = 'u8[32768]{0}', space=vmem, size = 0x8000, scoped, tag = 'input window, operand 4, single buffered']
    #allocation9 [shape = 'u8[32768]{0}', space=vmem, size = 0x8000, scoped, tag = 'input window, operand 6, single buffered']
    #allocation10 [shape = 's32[1]{0}', space=sflag, size = 0x4, scoped, tag = 'scoped memory for inter_cross_attention_forward.1']
    #allocation11 [shape = 'u8[1024]{0}', space=vmem, size = 0x400, scoped, tag = 'input window, operand 7, single buffered']
    #allocation12 [shape = 'u8[8192]{0}', space=vmem, size = 0x2000, scoped, tag = 'input window, operand 8, single buffered']
    #allocation13 [shape = 's32[1]{0}', space=sflag, size = 0x4, scoped, tag = 'scoped memory for inter_cross_attention_forward.1']
    #allocation14 [shape = 'u8[512]{0}', space=vmem, size = 0x400, scoped, tag = 'input window, operand 9, single buffered']
    #allocation15 [shape = 'u8[131072]{0}', space=vmem, size = 0x20000, scoped, tag = 'output window, operand 0']
    %15 = vsyncpa [#allocation4], 0
    %s16 = scalar_lea.sflag [#allocation4], 1
    %17 = vsyncpa %s16, 0
    %18 = vsyncpa [#allocation7], 0
    %s19 = scalar_lea.sflag [#allocation7], 1
    %20 = vsyncpa %s19, 0
    %21 = vsyncpa [#allocation10], 0
    %22 = vsyncpa [#allocation13], 0
    %23 = vsyncpa [#allocation5], 0
    %s24 = scalar_lea.sflag [#allocation5], 1
    %25 = vsyncpa %s24, 0
    loop: start=0, step=1, limit=4
    $region2: #{inter_cross_attention_forward.1} parent=1 // loop_pre_header
      _
    $region3: #{inter_cross_attention_forward.1} parent=1 // loop_header
      %s27 = sphi 0, %s31
      %p28 = scmp.ge.s32.totalorder %s27, 4
      %s34 = sphi 0, %s46
      %s35 = sphi 0, %s42
      %s36 = sphi 0, %s34
      %s37 = sphi 0, %s35
      %s38 = sphi 0, %s36
      %s39 = sphi 0, %s37
      %s51 = sphi 0, %s53
      %s54 = sphi 0, %s51
      %s55 = sphi 0, %s54
      %s71 = sphi 0, %s55
      %s79 = sphi 0, %s81
      %s82 = sphi 0, %s79
      %s83 = sphi 0, %s82
      %s99 = sphi 0, %s83
      %s103 = sphi 0, %s103
      %s105 = sphi 0, %s103
      %s106 = sphi 0, %s105
      %s120 = sphi 0, %s106
      %s124 = sphi 0, %s124
      %s126 = sphi 0, %s124
      %s127 = sphi 0, %s126
      %s141 = sphi 0, %s127
      %s145 = sphi 0, %s145
      %s147 = sphi 0, %s145
      %s148 = sphi 0, %s147
      %s162 = sphi 0, %s148
      %s166 = sphi 0, %s166
      %s168 = sphi 0, %s166
      %s169 = sphi 0, %s168
      %s183 = sphi 0, %s169
      %s187 = sphi 0, %s187
      %s189 = sphi 0, %s187
      %s190 = sphi 0, %s189
      %s204 = sphi 0, %s190
      %s208 = sphi 0, %s208
      %s210 = sphi 0, %s208
      %s211 = sphi 0, %s210
      %s225 = sphi 0, %s211
      %s229 = sphi 0, %s229
      %s231 = sphi 0, %s229
      %s232 = sphi 0, %s231
      %s246 = sphi 0, %s232
      %s250 = sphi 0, %s250
      %s252 = sphi 0, %s250
      %s253 = sphi 0, %s252
      %s267 = sphi 0, %s253
      %s275 = sphi 0, %s277
      %s278 = sphi 0, %s275
      %s279 = sphi 0, %s278
      %s295 = sphi 0, %s279
    $region4: #{inter_cross_attention_forward.1} parent=1 // loop_header_branch
      %30 = sbr.rel (%p28) target = $region8
    $region5: #{inter_cross_attention_forward.1} parent=1 // loop_body
      %s32 = ssub.s32 %s27, 1
      %s33 = ssub.s32 %s27, 2
      %s40 = sadd.s32 1, %s35
      %p41 = scmp.ge.s32.totalorder %s40, 1
      %s42 = scalar_select %p41, 0, %s40
      %s43 = sadd.s32 1, %s34
      %s44 = scalar_select %p41, %s43, %s34
      %p45 = scmp.ge.s32.totalorder %s44, 2
      %s46 = scalar_select %p45, 0, %s44
      %s47 = ssub.s32 %s34, %s46
      %s48 = ssub.s32 %s35, %s42
      %s49 = sor.u32 %s47, %s48
      %p50 = scmp.eq.s32.totalorder %s49, 0
      %s52 = sadd.s32 %s51, 1
      %s53 = scalar_select %p50, %s51, %s52
      %p56 = pneg %p50
      %p57 = scmp.eq.s32.totalorder %s27, 1
      %p58 = por %p56, %p57
      %p59 = scmp.ne.s32.totalorder %s51, %s54
      %p60 = scmp.eq.s32.totalorder %s27, 0
      %p61 = por %p59, %p60
      %p62 = scmp.ne.s32.totalorder %s51, %s54
      %p63 = scmp.eq.s32.totalorder %s32, 1
      %p64 = por %p62, %p63
      %p65 = scmp.ne.s32.totalorder %s54, %s55
      %p66 = scmp.eq.s32.totalorder %s32, 0
      %p67 = por %p65, %p66
      %p68 = scmp.ne.s32.totalorder %s54, %s55
      %p69 = scmp.eq.s32.totalorder %s33, 1
      %p70 = por %p68, %p69
      %p72 = scmp.ne.s32.totalorder %s55, %s71
      %p73 = scmp.eq.s32.totalorder %s33, 0
      %p74 = por %p72, %p73
      %s75 = ssub.s32 %s34, %s46
      %s76 = ssub.s32 %s35, %s42
      %s77 = sor.u32 %s75, %s76
      %p78 = scmp.eq.s32.totalorder %s77, 0
      %s80 = sadd.s32 %s79, 1
      %s81 = scalar_select %p78, %s79, %s80
      %p84 = pneg %p78
      %p85 = scmp.eq.s32.totalorder %s27, 1
      %p86 = por %p84, %p85
      %p87 = scmp.ne.s32.totalorder %s79, %s82
      %p88 = scmp.eq.s32.totalorder %s27, 0
      %p89 = por %p87, %p88
      %p90 = scmp.ne.s32.totalorder %s79, %s82
      %p91 = scmp.eq.s32.totalorder %s32, 1
      %p92 = por %p90, %p91
      %p93 = scmp.ne.s32.totalorder %s82, %s83
      %p94 = scmp.eq.s32.totalorder %s32, 0
      %p95 = por %p93, %p94
      %p96 = scmp.ne.s32.totalorder %s82, %s83
      %p97 = scmp.eq.s32.totalorder %s33, 1
      %p98 = por %p96, %p97
      %p100 = scmp.ne.s32.totalorder %s83, %s99
      %p101 = scmp.eq.s32.totalorder %s33, 0
      %p102 = por %p100, %p101
      %s104 = sadd.s32 %s103, 1
      %p107 = scmp.eq.s32.totalorder %s27, 1
      %p108 = scmp.ne.s32.totalorder %s103, %s105
      %p109 = scmp.eq.s32.totalorder %s27, 0
      %p110 = por %p108, %p109
      %p111 = scmp.ne.s32.totalorder %s103, %s105
      %p112 = scmp.eq.s32.totalorder %s32, 1
      %p113 = por %p111, %p112
      %p114 = scmp.ne.s32.totalorder %s105, %s106
      %p115 = scmp.eq.s32.totalorder %s32, 0
      %p116 = por %p114, %p115
      %p117 = scmp.ne.s32.totalorder %s105, %s106
      %p118 = scmp.eq.s32.totalorder %s33, 1
      %p119 = por %p117, %p118
      %p121 = scmp.ne.s32.totalorder %s106, %s120
      %p122 = scmp.eq.s32.totalorder %s33, 0
      %p123 = por %p121, %p122
      %s125 = sadd.s32 %s124, 1
      %p128 = scmp.eq.s32.totalorder %s27, 1
      %p129 = scmp.ne.s32.totalorder %s124, %s126
      %p130 = scmp.eq.s32.totalorder %s27, 0
      %p131 = por %p129, %p130
      %p132 = scmp.ne.s32.totalorder %s124, %s126
      %p133 = scmp.eq.s32.totalorder %s32, 1
      %p134 = por %p132, %p133
      %p135 = scmp.ne.s32.totalorder %s126, %s127
      %p136 = scmp.eq.s32.totalorder %s32, 0
      %p137 = por %p135, %p136
      %p138 = scmp.ne.s32.totalorder %s126, %s127
      %p139 = scmp.eq.s32.totalorder %s33, 1
      %p140 = por %p138, %p139
      %p142 = scmp.ne.s32.totalorder %s127, %s141
      %p143 = scmp.eq.s32.totalorder %s33, 0
      %p144 = por %p142, %p143
      %s146 = sadd.s32 %s145, 1
      %p149 = scmp.eq.s32.totalorder %s27, 1
      %p150 = scmp.ne.s32.totalorder %s145, %s147
      %p151 = scmp.eq.s32.totalorder %s27, 0
      %p152 = por %p150, %p151
      %p153 = scmp.ne.s32.totalorder %s145, %s147
      %p154 = scmp.eq.s32.totalorder %s32, 1
      %p155 = por %p153, %p154
      %p156 = scmp.ne.s32.totalorder %s147, %s148
      %p157 = scmp.eq.s32.totalorder %s32, 0
      %p158 = por %p156, %p157
      %p159 = scmp.ne.s32.totalorder %s147, %s148
      %p160 = scmp.eq.s32.totalorder %s33, 1
      %p161 = por %p159, %p160
      %p163 = scmp.ne.s32.totalorder %s148, %s162
      %p164 = scmp.eq.s32.totalorder %s33, 0
      %p165 = por %p163, %p164
      %s167 = sadd.s32 %s166, 1
      %p170 = scmp.eq.s32.totalorder %s27, 1
      %p171 = scmp.ne.s32.totalorder %s166, %s168
      %p172 = scmp.eq.s32.totalorder %s27, 0
      %p173 = por %p171, %p172
      %p174 = scmp.ne.s32.totalorder %s166, %s168
      %p175 = scmp.eq.s32.totalorder %s32, 1
      %p176 = por %p174, %p175
      %p177 = scmp.ne.s32.totalorder %s168, %s169
      %p178 = scmp.eq.s32.totalorder %s32, 0
      %p179 = por %p177, %p178
      %p180 = scmp.ne.s32.totalorder %s168, %s169
      %p181 = scmp.eq.s32.totalorder %s33, 1
      %p182 = por %p180, %p181
      %p184 = scmp.ne.s32.totalorder %s169, %s183
      %p185 = scmp.eq.s32.totalorder %s33, 0
      %p186 = por %p184, %p185
      %s188 = sadd.s32 %s187, 1
      %p191 = scmp.eq.s32.totalorder %s27, 1
      %p192 = scmp.ne.s32.totalorder %s187, %s189
      %p193 = scmp.eq.s32.totalorder %s27, 0
      %p194 = por %p192, %p193
      %p195 = scmp.ne.s32.totalorder %s187, %s189
      %p196 = scmp.eq.s32.totalorder %s32, 1
      %p197 = por %p195, %p196
      %p198 = scmp.ne.s32.totalorder %s189, %s190
      %p199 = scmp.eq.s32.totalorder %s32, 0
      %p200 = por %p198, %p199
      %p201 = scmp.ne.s32.totalorder %s189, %s190
      %p202 = scmp.eq.s32.totalorder %s33, 1
      %p203 = por %p201, %p202
      %p205 = scmp.ne.s32.totalorder %s190, %s204
      %p206 = scmp.eq.s32.totalorder %s33, 0
      %p207 = por %p205, %p206
      %s209 = sadd.s32 %s208, 1
      %p212 = scmp.eq.s32.totalorder %s27, 1
      %p213 = scmp.ne.s32.totalorder %s208, %s210
      %p214 = scmp.eq.s32.totalorder %s27, 0
      %p215 = por %p213, %p214
      %p216 = scmp.ne.s32.totalorder %s208, %s210
      %p217 = scmp.eq.s32.totalorder %s32, 1
      %p218 = por %p216, %p217
      %p219 = scmp.ne.s32.totalorder %s210, %s211
      %p220 = scmp.eq.s32.totalorder %s32, 0
      %p221 = por %p219, %p220
      %p222 = scmp.ne.s32.totalorder %s210, %s211
      %p223 = scmp.eq.s32.totalorder %s33, 1
      %p224 = por %p222, %p223
      %p226 = scmp.ne.s32.totalorder %s211, %s225
      %p227 = scmp.eq.s32.totalorder %s33, 0
      %p228 = por %p226, %p227
      %s230 = sadd.s32 %s229, 1
      %p233 = scmp.eq.s32.totalorder %s27, 1
      %p234 = scmp.ne.s32.totalorder %s229, %s231
      %p235 = scmp.eq.s32.totalorder %s27, 0
      %p236 = por %p234, %p235
      %p237 = scmp.ne.s32.totalorder %s229, %s231
      %p238 = scmp.eq.s32.totalorder %s32, 1
      %p239 = por %p237, %p238
      %p240 = scmp.ne.s32.totalorder %s231, %s232
      %p241 = scmp.eq.s32.totalorder %s32, 0
      %p242 = por %p240, %p241
      %p243 = scmp.ne.s32.totalorder %s231, %s232
      %p244 = scmp.eq.s32.totalorder %s33, 1
      %p245 = por %p243, %p244
      %p247 = scmp.ne.s32.totalorder %s232, %s246
      %p248 = scmp.eq.s32.totalorder %s33, 0
      %p249 = por %p247, %p248
      %s251 = sadd.s32 %s250, 1
      %p254 = scmp.eq.s32.totalorder %s27, 1
      %p255 = scmp.ne.s32.totalorder %s250, %s252
      %p256 = scmp.eq.s32.totalorder %s27, 0
      %p257 = por %p255, %p256
      %p258 = scmp.ne.s32.totalorder %s250, %s252
      %p259 = scmp.eq.s32.totalorder %s32, 1
      %p260 = por %p258, %p259
      %p261 = scmp.ne.s32.totalorder %s252, %s253
      %p262 = scmp.eq.s32.totalorder %s32, 0
      %p263 = por %p261, %p262
      %p264 = scmp.ne.s32.totalorder %s252, %s253
      %p265 = scmp.eq.s32.totalorder %s33, 1
      %p266 = por %p264, %p265
      %p268 = scmp.ne.s32.totalorder %s253, %s267
      %p269 = scmp.eq.s32.totalorder %s33, 0
      %p270 = por %p268, %p269
      %s271 = ssub.s32 %s34, %s46
      %s272 = ssub.s32 %s35, %s42
      %s273 = sor.u32 %s271, %s272
      %p274 = scmp.eq.s32.totalorder %s273, 0
      %s276 = sadd.s32 %s275, 1
      %s277 = scalar_select %p274, %s275, %s276
      %p280 = pneg %p274
      %p281 = scmp.eq.s32.totalorder %s27, 1
      %p282 = por %p280, %p281
      %p283 = scmp.ne.s32.totalorder %s275, %s278
      %p284 = scmp.eq.s32.totalorder %s27, 0
      %p285 = por %p283, %p284
      %p286 = scmp.ne.s32.totalorder %s275, %s278
      %p287 = scmp.eq.s32.totalorder %s32, 1
      %p288 = por %p286, %p287
      %p289 = scmp.ne.s32.totalorder %s278, %s279
      %p290 = scmp.eq.s32.totalorder %s32, 0
      %p291 = por %p289, %p290
      %p292 = scmp.ne.s32.totalorder %s278, %s279
      %p293 = scmp.eq.s32.totalorder %s33, 1
      %p294 = por %p292, %p293
      %p296 = scmp.ne.s32.totalorder %s279, %s295
      %p297 = scmp.eq.s32.totalorder %s33, 0
      %p298 = por %p296, %p297
      %p299 = scmp.le.s32.totalorder 1, %s27
      %p300 = scmp.lt.s32.totalorder %s27, 3
      %p301 = pnand %p299, %p300
      %p302 = pneg %p301
      // Predicated region
      $region9: #{inter_cross_attention_forward.1} parent=5 // pred_check
        _
      $region10: #{inter_cross_attention_forward.1} parent=5 // pred_check_branch
        %304 = sbr.rel (%p301) target = $region12
      $region11: #{inter_cross_attention_forward.1} parent=5 // pred_region
        %s305 = ssub.s32 %s27, 1
        // Predicated region
        $region13: #{inter_cross_attention_forward.1} parent=11 // pred_check
          %p306 = pneg %p116
        $region14: #{inter_cross_attention_forward.1} parent=11 // pred_check_branch
          %308 = sbr.rel (%p306) target = $region16
        $region15: #{inter_cross_attention_forward.1} parent=11 // pred_region
          _
        $region16: #{inter_cross_attention_forward.1} parent=11 // pred_fallthru
          _
        // Predicated region
        $region17: #{inter_cross_attention_forward.1} parent=11 // pred_check
          %p309 = pneg %p137
        $region18: #{inter_cross_attention_forward.1} parent=11 // pred_check_branch
          %311 = sbr.rel (%p309) target = $region20
        $region19: #{inter_cross_attention_forward.1} parent=11 // pred_region
          _
        $region20: #{inter_cross_attention_forward.1} parent=11 // pred_fallthru
          _
        // Predicated region
        $region21: #{inter_cross_attention_forward.1} parent=11 // pred_check
          %p312 = pneg %p158
        $region22: #{inter_cross_attention_forward.1} parent=11 // pred_check_branch
          %314 = sbr.rel (%p312) target = $region24
        $region23: #{inter_cross_attention_forward.1} parent=11 // pred_region
          %316 = vsyncadd [#allocation7], 0
          %s317 = sshll.u32 %s4, 4
          %s318 = int_to_ptr.hbm [resolvable:$true] %s317
          %s319 = sshll.u32 [#allocation8], 4
          %s320 = int_to_ptr.vmem [resolvable:$true] %s319
          %325 = dma.hbm_to_vmem [thread:$0]  %s318, 1024, %s320, [#allocation7], 128, 128, 8
        $region24: #{inter_cross_attention_forward.1} parent=11 // pred_fallthru
          _
        // Predicated region
        $region25: #{inter_cross_attention_forward.1} parent=11 // pred_check
          %p326 = pneg %p179
        $region26: #{inter_cross_attention_forward.1} parent=11 // pred_check_branch
          %328 = sbr.rel (%p326) target = $region28
        $region27: #{inter_cross_attention_forward.1} parent=11 // pred_region
          _
        $region28: #{inter_cross_attention_forward.1} parent=11 // pred_fallthru
          _
        // Predicated region
        $region29: #{inter_cross_attention_forward.1} parent=11 // pred_check
          %p329 = pneg %p200
        $region30: #{inter_cross_attention_forward.1} parent=11 // pred_check_branch
          %331 = sbr.rel (%p329) target = $region32
        $region31: #{inter_cross_attention_forward.1} parent=11 // pred_region
          %333 = vsyncadd [#allocation10], 0
          %s334 = sshll.u32 %s6, 4
          %s335 = int_to_ptr.hbm [resolvable:$true] %s334
          %s336 = sshll.u32 [#allocation9], 4
          %s337 = int_to_ptr.vmem [resolvable:$true] %s336
          %342 = dma.hbm_to_vmem [thread:$0]  %s335, 1024, %s337, [#allocation10], 128, 128, 8
        $region32: #{inter_cross_attention_forward.1} parent=11 // pred_fallthru
          _
        // Predicated region
        $region33: #{inter_cross_attention_forward.1} parent=11 // pred_check
          %p343 = pneg %p221
        $region34: #{inter_cross_attention_forward.1} parent=11 // pred_check_branch
          %345 = sbr.rel (%p343) target = $region36
        $region35: #{inter_cross_attention_forward.1} parent=11 // pred_region
          %347 = vsyncadd [#allocation10], 0
          %s349 = sshll.u32 %s7, 4
          %s350 = int_to_ptr.hbm [resolvable:$true] %s349
          %s351 = sshll.u32 [#allocation11], 4
          %s352 = int_to_ptr.vmem [resolvable:$true] %s351
          %354 = dma.hbm_to_vmem [thread:$0]  %s350, 32, %s352, [#allocation10]
        $region36: #{inter_cross_attention_forward.1} parent=11 // pred_fallthru
          _
        // Predicated region
        $region37: #{inter_cross_attention_forward.1} parent=11 // pred_check
          %p355 = pneg %p242
        $region38: #{inter_cross_attention_forward.1} parent=11 // pred_check_branch
          %357 = sbr.rel (%p355) target = $region40
        $region39: #{inter_cross_attention_forward.1} parent=11 // pred_region
          %359 = vsyncadd [#allocation13], 0
          %s360 = sshll.u32 %s8, 4
          %s361 = int_to_ptr.hbm [resolvable:$true] %s360
          %s362 = sshll.u32 [#allocation12], 4
          %s363 = int_to_ptr.vmem [resolvable:$true] %s362
          %368 = dma.hbm_to_vmem [thread:$0]  %s361, 256, %s363, [#allocation13], 64, 64, 4
        $region40: #{inter_cross_attention_forward.1} parent=11 // pred_fallthru
          _
        // Predicated region
        $region41: #{inter_cross_attention_forward.1} parent=11 // pred_check
          %p369 = pneg %p263
        $region42: #{inter_cross_attention_forward.1} parent=11 // pred_check_branch
          %371 = sbr.rel (%p369) target = $region44
        $region43: #{inter_cross_attention_forward.1} parent=11 // pred_region
          %373 = vsyncadd [#allocation13], 0
          %s375 = sshll.u32 %s9, 4
          %s376 = int_to_ptr.hbm [resolvable:$true] %s375
          %s377 = sshll.u32 [#allocation14], 4
          %s378 = int_to_ptr.vmem [resolvable:$true] %s377
          %380 = dma.hbm_to_vmem [thread:$0]  %s376, 16, %s378, [#allocation13]
        $region44: #{inter_cross_attention_forward.1} parent=11 // pred_fallthru
          _
      $region12: #{inter_cross_attention_forward.1} parent=5 // pred_fallthru
        _
      %p381 = scmp.lt.s32.totalorder %s27, 2
      // Predicated region
      $region45: #{inter_cross_attention_forward.1} parent=5 // pred_check
        %p382 = pneg %p381
      $region46: #{inter_cross_attention_forward.1} parent=5 // pred_check_branch
        %384 = sbr.rel (%p382) target = $region48
      $region47: #{inter_cross_attention_forward.1} parent=5 // pred_region
        // Predicated region
        $region49: #{inter_cross_attention_forward.1} parent=47 // pred_check
          %p385 = pneg %p61
        $region50: #{inter_cross_attention_forward.1} parent=47 // pred_check_branch
          %387 = sbr.rel (%p385) target = $region52
        $region51: #{inter_cross_attention_forward.1} parent=47 // pred_region
          %s388 = sand.u32 %s51, 1
          %s389 = scalar_lea.sflag [#allocation4], %s388
          %s390 = sand.u32 %s51, 1
          %s391 = smul.addr %s390, 128
          %s392 = scalar_lea.vmem [#allocation3], %s391
          %s393 = smul.u32 8, %s35
          %395 = vsyncadd %s389, 0
          %s396 = smul.addr %s393, 2
          %s397 = smul.addr %s34, 16
          %s398 = sadd.s32 %s396, %s397
          %s399 = smul.addr %s398, 8
          %s400 = scalar_lea.hbm %s0, %s399
          %s401 = sshll.u32 %s400, 4
          %s402 = int_to_ptr.hbm [resolvable:$true] %s401
          %s403 = sshll.u32 %s392, 4
          %s404 = int_to_ptr.vmem [resolvable:$true] %s403
          %409 = dma.hbm_to_vmem [thread:$0]  %s402, 2048, %s404, %s389, 128, 128, 8
        $region52: #{inter_cross_attention_forward.1} parent=47 // pred_fallthru
          _
        // Predicated region
        $region53: #{inter_cross_attention_forward.1} parent=47 // pred_check
          %p410 = pneg %p89
        $region54: #{inter_cross_attention_forward.1} parent=47 // pred_check_branch
          %412 = sbr.rel (%p410) target = $region56
        $region55: #{inter_cross_attention_forward.1} parent=47 // pred_region
          %s413 = sand.u32 %s27, 1
          %s414 = scalar_lea.sflag [#allocation7], %s413
          %s415 = sand.u32 %s79, 1
          %s416 = smul.addr %s415, 128
          %s417 = scalar_lea.vmem [#allocation6], %s416
          %s418 = smul.u32 8, %s35
          %420 = vsyncadd %s414, 0
          %s421 = smul.addr %s418, 2
          %s422 = smul.addr %s34, 16
          %s423 = sadd.s32 %s421, %s422
          %s424 = smul.addr %s423, 8
          %s425 = scalar_lea.hbm %s1, %s424
          %s426 = sshll.u32 %s425, 4
          %s427 = int_to_ptr.hbm [resolvable:$true] %s426
          %s428 = sshll.u32 %s417, 4
          %s429 = int_to_ptr.vmem [resolvable:$true] %s428
          %434 = dma.hbm_to_vmem [thread:$0]  %s427, 2048, %s429, %s414, 128, 128, 8
        $region56: #{inter_cross_attention_forward.1} parent=47 // pred_fallthru
          _
      $region48: #{inter_cross_attention_forward.1} parent=5 // pred_fallthru
        _
      %p435 = scmp.le.s32.totalorder 1, %s27
      %p436 = scmp.lt.s32.totalorder %s27, 3
      %p437 = pnand %p435, %p436
      %p438 = pneg %p437
      // Predicated region
      $region57: #{inter_cross_attention_forward.1} parent=5 // pred_check
        _
      $region58: #{inter_cross_attention_forward.1} parent=5 // pred_check_branch
        %440 = sbr.rel (%p437) target = $region60
      $region59: #{inter_cross_attention_forward.1} parent=5 // pred_region
        %s441 = ssub.s32 %s27, 1
        %s442 = sand.u32 %s54, 1
        %s443 = scalar_lea.sflag [#allocation4], %s442
        %s444 = sand.u32 %s54, 1
        %s445 = smul.addr %s444, 128
        %s446 = scalar_lea.vmem [#allocation3], %s445
        // Predicated region
        $region61: #{inter_cross_attention_forward.1} parent=59 // pred_check
          %p447 = pneg %p67
        $region62: #{inter_cross_attention_forward.1} parent=59 // pred_check_branch
          %449 = sbr.rel (%p447) target = $region64
        $region63: #{inter_cross_attention_forward.1} parent=59 // pred_region
          %451 = dma.done %s443, 2048
        $region64: #{inter_cross_attention_forward.1} parent=59 // pred_fallthru
          _
        %s452 = sand.u32 %s32, 1
        %s453 = scalar_lea.sflag [#allocation7], %s452
        %s454 = sand.u32 %s82, 1
        %s455 = smul.addr %s454, 128
        %s456 = scalar_lea.vmem [#allocation6], %s455
        // Predicated region
        $region65: #{inter_cross_attention_forward.1} parent=59 // pred_check
          %p457 = pneg %p95
        $region66: #{inter_cross_attention_forward.1} parent=59 // pred_check_branch
          %459 = sbr.rel (%p457) target = $region68
        $region67: #{inter_cross_attention_forward.1} parent=59 // pred_region
          %461 = dma.done %s453, 2048
        $region68: #{inter_cross_attention_forward.1} parent=59 // pred_fallthru
          _
        // Predicated region
        $region69: #{inter_cross_attention_forward.1} parent=59 // pred_check
          %p462 = pneg %p158
        $region70: #{inter_cross_attention_forward.1} parent=59 // pred_check_branch
          %464 = sbr.rel (%p462) target = $region72
        $region71: #{inter_cross_attention_forward.1} parent=59 // pred_region
          %466 = dma.done [#allocation7], 1024
        $region72: #{inter_cross_attention_forward.1} parent=59 // pred_fallthru
          _
        // Predicated region
        $region73: #{inter_cross_attention_forward.1} parent=59 // pred_check
          %p467 = pneg %p200
        $region74: #{inter_cross_attention_forward.1} parent=59 // pred_check_branch
          %469 = sbr.rel (%p467) target = $region76
        $region75: #{inter_cross_attention_forward.1} parent=59 // pred_region
          %471 = dma.done [#allocation10], 1024
        $region76: #{inter_cross_attention_forward.1} parent=59 // pred_fallthru
          _
        // Predicated region
        $region77: #{inter_cross_attention_forward.1} parent=59 // pred_check
          %p472 = pneg %p221
        $region78: #{inter_cross_attention_forward.1} parent=59 // pred_check_branch
          %474 = sbr.rel (%p472) target = $region80
        $region79: #{inter_cross_attention_forward.1} parent=59 // pred_region
          %476 = dma.done [#allocation10], 32
        $region80: #{inter_cross_attention_forward.1} parent=59 // pred_fallthru
          _
        // Predicated region
        $region81: #{inter_cross_attention_forward.1} parent=59 // pred_check
          %p477 = pneg %p242
        $region82: #{inter_cross_attention_forward.1} parent=59 // pred_check_branch
          %479 = sbr.rel (%p477) target = $region84
        $region83: #{inter_cross_attention_forward.1} parent=59 // pred_region
          %481 = dma.done [#allocation13], 256
        $region84: #{inter_cross_attention_forward.1} parent=59 // pred_fallthru
          _
        // Predicated region
        $region85: #{inter_cross_attention_forward.1} parent=59 // pred_check
          %p482 = pneg %p263
        $region86: #{inter_cross_attention_forward.1} parent=59 // pred_check_branch
          %484 = sbr.rel (%p482) target = $region88
        $region87: #{inter_cross_attention_forward.1} parent=59 // pred_region
          %486 = dma.done [#allocation13], 16
        $region88: #{inter_cross_attention_forward.1} parent=59 // pred_fallthru
          _
        %s487 = sand.u32 %s54, 1
        %s488 = scalar_lea.sflag [#allocation4], %s487
        %s489 = sand.u32 %s54, 1
        %s490 = smul.addr %s489, 128
        %s491 = scalar_lea.vmem [#allocation3], %s490
        %p492 = pneg %p67
        %p493 = pneg %p64
        %s494 = sand.u32 %s32, 1
        %s495 = scalar_lea.sflag [#allocation7], %s494
        %s496 = sand.u32 %s82, 1
        %s497 = smul.addr %s496, 128
        %s498 = scalar_lea.vmem [#allocation6], %s497
        %p499 = pneg %p95
        %p500 = pneg %p92
        %p501 = pneg %p116
        %p502 = pneg %p113
        %p503 = pneg %p137
        %p504 = pneg %p134
        %p505 = pneg %p158
        %p506 = pneg %p155
        %p507 = pneg %p179
        %p508 = pneg %p176
        %p509 = pneg %p200
        %p510 = pneg %p197
        %p511 = pneg %p221
        %p512 = pneg %p218
        %p513 = pneg %p242
        %p514 = pneg %p239
        %p515 = pneg %p263
        %p516 = pneg %p260
        %p517 = pneg %p291
        %p518 = pneg %p288
        %s519 = sand.u32 %s278, 1
        %s520 = scalar_lea.sflag [#allocation5], %s519
        %s521 = sand.u32 %s278, 1
        %s522 = smul.addr %s521, 128
        %s523 = scalar_lea.vmem [#allocation15], %s522
        %s524 = smul.u32 8, %s37
        %s525 = smul.u32 8, %s37
        %s526 = smul.u32 8, %s37
        %v528 = vld [vmem:[%s2] sm:$0x1]
        %v529 = vld [vmem:[%s3] sm:$0x1]
        %v530 = vld [vmem:[%s446] sm:$0xff]
        %v531 = vld [vmem:[%s446 + $0x8] sm:$0xff]
        %v532 = vld [vmem:[%s446 + $0x10] sm:$0xff]
        %v533 = vld [vmem:[%s446 + $0x18] sm:$0xff]
        %v534 = vld [vmem:[%s446 + $0x20] sm:$0xff]
        %v535 = vld [vmem:[%s446 + $0x28] sm:$0xff]
        %v536 = vld [vmem:[%s446 + $0x30] sm:$0xff]
        %v537 = vld [vmem:[%s446 + $0x38] sm:$0xff]
        %v538 = vld [vmem:[%s446 + $0x40] sm:$0xff]
        %v539 = vld [vmem:[%s446 + $0x48] sm:$0xff]
        %v540 = vld [vmem:[%s446 + $0x50] sm:$0xff]
        %v541 = vld [vmem:[%s446 + $0x58] sm:$0xff]
        %v542 = vld [vmem:[%s446 + $0x60] sm:$0xff]
        %v543 = vld [vmem:[%s446 + $0x68] sm:$0xff]
        %v544 = vld [vmem:[%s446 + $0x70] sm:$0xff]
        %v545 = vld [vmem:[%s446 + $0x78] sm:$0xff]
        %vm546 = vcmask 523264
        %v547 = vsel %vm546, %v530, 0.0
        %548 = vadd.xlane.f32.xlu0 %v547
        %v549 = vpop.xlane.xlu0 %548
        %v550 = vsel %vm546, %v531, 0.0
        %551 = vadd.xlane.f32.xlu0 %v550
        %v552 = vpop.xlane.xlu0 %551
        %v553 = vsel %vm546, %v532, 0.0
        %554 = vadd.xlane.f32.xlu0 %v553
        %v555 = vpop.xlane.xlu0 %554
        %v556 = vsel %vm546, %v533, 0.0
        %557 = vadd.xlane.f32.xlu0 %v556
        %v558 = vpop.xlane.xlu0 %557
        %v559 = vsel %vm546, %v534, 0.0
        %560 = vadd.xlane.f32.xlu0 %v559
        %v561 = vpop.xlane.xlu0 %560
        %v562 = vsel %vm546, %v535, 0.0
        %563 = vadd.xlane.f32.xlu0 %v562
        %v564 = vpop.xlane.xlu0 %563
        %v565 = vsel %vm546, %v536, 0.0
        %566 = vadd.xlane.f32.xlu0 %v565
        %v567 = vpop.xlane.xlu0 %566
        %v568 = vsel %vm546, %v537, 0.0
        %569 = vadd.xlane.f32.xlu0 %v568
        %v570 = vpop.xlane.xlu0 %569
        %v571 = vsel %vm546, %v538, 0.0
        %572 = vadd.xlane.f32.xlu0 %v571
        %v573 = vpop.xlane.xlu0 %572
        %v574 = vsel %vm546, %v539, 0.0
        %575 = vadd.xlane.f32.xlu0 %v574
        %v576 = vpop.xlane.xlu0 %575
        %v577 = vsel %vm546, %v540, 0.0
        %578 = vadd.xlane.f32.xlu0 %v577
        %v579 = vpop.xlane.xlu0 %578
        %v580 = vsel %vm546, %v541, 0.0
        %581 = vadd.xlane.f32.xlu0 %v580
        %v582 = vpop.xlane.xlu0 %581
        %v583 = vsel %vm546, %v542, 0.0
        %584 = vadd.xlane.f32.xlu0 %v583
        %v585 = vpop.xlane.xlu0 %584
        %v586 = vsel %vm546, %v543, 0.0
        %587 = vadd.xlane.f32.xlu0 %v586
        %v588 = vpop.xlane.xlu0 %587
        %v589 = vsel %vm546, %v544, 0.0
        %590 = vadd.xlane.f32.xlu0 %v589
        %v591 = vpop.xlane.xlu0 %590
        %v592 = vsel %vm546, %v545, 0.0
        %593 = vadd.xlane.f32.xlu0 %v592
        %v594 = vpop.xlane.xlu0 %593
        %v595 = vrcp.pop 64.0
        %v596 = vmul.f32 64.0, %v595
        %v597 = vsub.f32 1.0, %v596
        %v598 = vmul.f32 %v595, %v597
        %v599 = vadd.f32 %v595, %v598
        %vm600 = vweird.f32 %v595
        %v601 = vsel %vm600, %v595, %v599
        %v602 = vmul.f32 %v549, %v601
        %v603 = vmul.f32 %v552, %v601
        %v604 = vmul.f32 %v555, %v601
        %v605 = vmul.f32 %v558, %v601
        %v606 = vmul.f32 %v561, %v601
        %v607 = vmul.f32 %v564, %v601
        %v608 = vmul.f32 %v567, %v601
        %v609 = vmul.f32 %v570, %v601
        %v610 = vmul.f32 %v573, %v601
        %v611 = vmul.f32 %v576, %v601
        %v612 = vmul.f32 %v579, %v601
        %v613 = vmul.f32 %v582, %v601
        %v614 = vmul.f32 %v585, %v601
        %v615 = vmul.f32 %v588, %v601
        %v616 = vmul.f32 %v591, %v601
        %v617 = vmul.f32 %v594, %v601
        %v618 = vsub.f32 %v530, %v602
        %v619 = vsub.f32 %v531, %v603
        %v620 = vsub.f32 %v532, %v604
        %v621 = vsub.f32 %v533, %v605
        %v622 = vsub.f32 %v534, %v606
        %v623 = vsub.f32 %v535, %v607
        %v624 = vsub.f32 %v536, %v608
        %v625 = vsub.f32 %v537, %v609
        %v626 = vsub.f32 %v538, %v610
        %v627 = vsub.f32 %v539, %v611
        %v628 = vsub.f32 %v540, %v612
        %v629 = vsub.f32 %v541, %v613
        %v630 = vsub.f32 %v542, %v614
        %v631 = vsub.f32 %v543, %v615
        %v632 = vsub.f32 %v544, %v616
        %v633 = vsub.f32 %v545, %v617
        %v634 = vmul.f32 %v618, %v618
        %v635 = vmul.f32 %v619, %v619
        %v636 = vmul.f32 %v620, %v620
        %v637 = vmul.f32 %v621, %v621
        %v638 = vmul.f32 %v622, %v622
        %v639 = vmul.f32 %v623, %v623
        %v640 = vmul.f32 %v624, %v624
        %v641 = vmul.f32 %v625, %v625
        %v642 = vmul.f32 %v626, %v626
        %v643 = vmul.f32 %v627, %v627
        %v644 = vmul.f32 %v628, %v628
        %v645 = vmul.f32 %v629, %v629
        %v646 = vmul.f32 %v630, %v630
        %v647 = vmul.f32 %v631, %v631
        %v648 = vmul.f32 %v632, %v632
        %v649 = vmul.f32 %v633, %v633
        %v650 = vsel %vm546, %v634, 0.0
        %651 = vadd.xlane.f32.xlu0 %v650
        %v652 = vpop.xlane.xlu0 %651
        %v653 = vsel %vm546, %v635, 0.0
        %654 = vadd.xlane.f32.xlu0 %v653
        %v655 = vpop.xlane.xlu0 %654
        %v656 = vsel %vm546, %v636, 0.0
        %657 = vadd.xlane.f32.xlu0 %v656
        %v658 = vpop.xlane.xlu0 %657
        %v659 = vsel %vm546, %v637, 0.0
        %660 = vadd.xlane.f32.xlu0 %v659
        %v661 = vpop.xlane.xlu0 %660
        %v662 = vsel %vm546, %v638, 0.0
        %663 = vadd.xlane.f32.xlu0 %v662
        %v664 = vpop.xlane.xlu0 %663
        %v665 = vsel %vm546, %v639, 0.0
        %666 = vadd.xlane.f32.xlu0 %v665
        %v667 = vpop.xlane.xlu0 %666
        %v668 = vsel %vm546, %v640, 0.0
        %669 = vadd.xlane.f32.xlu0 %v668
        %v670 = vpop.xlane.xlu0 %669
        %v671 = vsel %vm546, %v641, 0.0
        %672 = vadd.xlane.f32.xlu0 %v671
        %v673 = vpop.xlane.xlu0 %672
        %v674 = vsel %vm546, %v642, 0.0
        %675 = vadd.xlane.f32.xlu0 %v674
        %v676 = vpop.xlane.xlu0 %675
        %v677 = vsel %vm546, %v643, 0.0
        %678 = vadd.xlane.f32.xlu0 %v677
        %v679 = vpop.xlane.xlu0 %678
        %v680 = vsel %vm546, %v644, 0.0
        %681 = vadd.xlane.f32.xlu0 %v680
        %v682 = vpop.xlane.xlu0 %681
        %v683 = vsel %vm546, %v645, 0.0
        %684 = vadd.xlane.f32.xlu0 %v683
        %v685 = vpop.xlane.xlu0 %684
        %v686 = vsel %vm546, %v646, 0.0
        %687 = vadd.xlane.f32.xlu0 %v686
        %v688 = vpop.xlane.xlu0 %687
        %v689 = vsel %vm546, %v647, 0.0
        %690 = vadd.xlane.f32.xlu0 %v689
        %v691 = vpop.xlane.xlu0 %690
        %v692 = vsel %vm546, %v648, 0.0
        %693 = vadd.xlane.f32.xlu0 %v692
        %v694 = vpop.xlane.xlu0 %693
        %v695 = vsel %vm546, %v649, 0.0
        %696 = vadd.xlane.f32.xlu0 %v695
        %v697 = vpop.xlane.xlu0 %696
        %v698 = vmul.f32 %v652, %v601
        %v699 = vmul.f32 %v655, %v601
        %v700 = vmul.f32 %v658, %v601
        %v701 = vmul.f32 %v661, %v601
        %v702 = vmul.f32 %v664, %v601
        %v703 = vmul.f32 %v667, %v601
        %v704 = vmul.f32 %v670, %v601
        %v705 = vmul.f32 %v673, %v601
        %v706 = vmul.f32 %v676, %v601
        %v707 = vmul.f32 %v679, %v601
        %v708 = vmul.f32 %v682, %v601
        %v709 = vmul.f32 %v685, %v601
        %v710 = vmul.f32 %v688, %v601
        %v711 = vmul.f32 %v691, %v601
        %v712 = vmul.f32 %v694, %v601
        %v713 = vmul.f32 %v697, %v601
        %v714 = vadd.f32 %v698, 1e-05
        %v715 = vadd.f32 %v699, 1e-05
        %v716 = vadd.f32 %v700, 1e-05
        %v717 = vadd.f32 %v701, 1e-05
        %v718 = vadd.f32 %v702, 1e-05
        %v719 = vadd.f32 %v703, 1e-05
        %v720 = vadd.f32 %v704, 1e-05
        %v721 = vadd.f32 %v705, 1e-05
        %v722 = vadd.f32 %v706, 1e-05
        %v723 = vadd.f32 %v707, 1e-05
        %v724 = vadd.f32 %v708, 1e-05
        %v725 = vadd.f32 %v709, 1e-05
        %v726 = vadd.f32 %v710, 1e-05
        %v727 = vadd.f32 %v711, 1e-05
        %v728 = vadd.f32 %v712, 1e-05
        %v729 = vadd.f32 %v713, 1e-05
        %v730 = vrsqrt.pop %v714
        %v731 = vmul.f32 %v730, %v714
        %v732 = vmul.f32 %v731, %v730
        %v733 = vmul.f32 0.5, %v732
        %v734 = vsub.f32 1.5, %v733
        %v735 = vmul.f32 %v730, %v734
        %vm736 = vweird.f32 %v714
        %vm737 = vweird.f32 %v730
        %vm738 = vmor %vm736, %vm737
        %v739 = vsel %vm738, %v730, %v735
        %v740 = vrsqrt.pop %v715
        %v741 = vmul.f32 %v740, %v715
        %v742 = vmul.f32 %v741, %v740
        %v743 = vmul.f32 0.5, %v742
        %v744 = vsub.f32 1.5, %v743
        %v745 = vmul.f32 %v740, %v744
        %vm746 = vweird.f32 %v715
        %vm747 = vweird.f32 %v740
        %vm748 = vmor %vm746, %vm747
        %v749 = vsel %vm748, %v740, %v745
        %v750 = vrsqrt.pop %v716
        %v751 = vmul.f32 %v750, %v716
        %v752 = vmul.f32 %v751, %v750
        %v753 = vmul.f32 0.5, %v752
        %v754 = vsub.f32 1.5, %v753
        %v755 = vmul.f32 %v750, %v754
        %vm756 = vweird.f32 %v716
        %vm757 = vweird.f32 %v750
        %vm758 = vmor %vm756, %vm757
        %v759 = vsel %vm758, %v750, %v755
        %v760 = vrsqrt.pop %v717
        %v761 = vmul.f32 %v760, %v717
        %v762 = vmul.f32 %v761, %v760
        %v763 = vmul.f32 0.5, %v762
        %v764 = vsub.f32 1.5, %v763
        %v765 = vmul.f32 %v760, %v764
        %vm766 = vweird.f32 %v717
        %vm767 = vweird.f32 %v760
        %vm768 = vmor %vm766, %vm767
        %v769 = vsel %vm768, %v760, %v765
        %v770 = vrsqrt.pop %v718
        %v771 = vmul.f32 %v770, %v718
        %v772 = vmul.f32 %v771, %v770
        %v773 = vmul.f32 0.5, %v772
        %v774 = vsub.f32 1.5, %v773
        %v775 = vmul.f32 %v770, %v774
        %vm776 = vweird.f32 %v718
        %vm777 = vweird.f32 %v770
        %vm778 = vmor %vm776, %vm777
        %v779 = vsel %vm778, %v770, %v775
        %v780 = vrsqrt.pop %v719
        %v781 = vmul.f32 %v780, %v719
        %v782 = vmul.f32 %v781, %v780
        %v783 = vmul.f32 0.5, %v782
        %v784 = vsub.f32 1.5, %v783
        %v785 = vmul.f32 %v780, %v784
        %vm786 = vweird.f32 %v719
        %vm787 = vweird.f32 %v780
        %vm788 = vmor %vm786, %vm787
        %v789 = vsel %vm788, %v780, %v785
        %v790 = vrsqrt.pop %v720
        %v791 = vmul.f32 %v790, %v720
        %v792 = vmul.f32 %v791, %v790
        %v793 = vmul.f32 0.5, %v792
        %v794 = vsub.f32 1.5, %v793
        %v795 = vmul.f32 %v790, %v794
        %vm796 = vweird.f32 %v720
        %vm797 = vweird.f32 %v790
        %vm798 = vmor %vm796, %vm797
        %v799 = vsel %vm798, %v790, %v795
        %v800 = vrsqrt.pop %v721
        %v801 = vmul.f32 %v800, %v721
        %v802 = vmul.f32 %v801, %v800
        %v803 = vmul.f32 0.5, %v802
        %v804 = vsub.f32 1.5, %v803
        %v805 = vmul.f32 %v800, %v804
        %vm806 = vweird.f32 %v721
        %vm807 = vweird.f32 %v800
        %vm808 = vmor %vm806, %vm807
        %v809 = vsel %vm808, %v800, %v805
        %v810 = vrsqrt.pop %v722
        %v811 = vmul.f32 %v810, %v722
        %v812 = vmul.f32 %v811, %v810
        %v813 = vmul.f32 0.5, %v812
        %v814 = vsub.f32 1.5, %v813
        %v815 = vmul.f32 %v810, %v814
        %vm816 = vweird.f32 %v722
        %vm817 = vweird.f32 %v810
        %vm818 = vmor %vm816, %vm817
        %v819 = vsel %vm818, %v810, %v815
        %v820 = vrsqrt.pop %v723
        %v821 = vmul.f32 %v820, %v723
        %v822 = vmul.f32 %v821, %v820
        %v823 = vmul.f32 0.5, %v822
        %v824 = vsub.f32 1.5, %v823
        %v825 = vmul.f32 %v820, %v824
        %vm826 = vweird.f32 %v723
        %vm827 = vweird.f32 %v820
        %vm828 = vmor %vm826, %vm827
        %v829 = vsel %vm828, %v820, %v825
        %v830 = vrsqrt.pop %v724
        %v831 = vmul.f32 %v830, %v724
        %v832 = vmul.f32 %v831, %v830
        %v833 = vmul.f32 0.5, %v832
        %v834 = vsub.f32 1.5, %v833
        %v835 = vmul.f32 %v830, %v834
        %vm836 = vweird.f32 %v724
        %vm837 = vweird.f32 %v830
        %vm838 = vmor %vm836, %vm837
        %v839 = vsel %vm838, %v830, %v835
        %v840 = vrsqrt.pop %v725
        %v841 = vmul.f32 %v840, %v725
        %v842 = vmul.f32 %v841, %v840
        %v843 = vmul.f32 0.5, %v842
        %v844 = vsub.f32 1.5, %v843
        %v845 = vmul.f32 %v840, %v844
        %vm846 = vweird.f32 %v725
        %vm847 = vweird.f32 %v840
        %vm848 = vmor %vm846, %vm847
        %v849 = vsel %vm848, %v840, %v845
        %v850 = vrsqrt.pop %v726
        %v851 = vmul.f32 %v850, %v726
        %v852 = vmul.f32 %v851, %v850
        %v853 = vmul.f32 0.5, %v852
        %v854 = vsub.f32 1.5, %v853
        %v855 = vmul.f32 %v850, %v854
        %vm856 = vweird.f32 %v726
        %vm857 = vweird.f32 %v850
        %vm858 = vmor %vm856, %vm857
        %v859 = vsel %vm858, %v850, %v855
        %v860 = vrsqrt.pop %v727
        %v861 = vmul.f32 %v860, %v727
        %v862 = vmul.f32 %v861, %v860
        %v863 = vmul.f32 0.5, %v862
        %v864 = vsub.f32 1.5, %v863
        %v865 = vmul.f32 %v860, %v864
        %vm866 = vweird.f32 %v727
        %vm867 = vweird.f32 %v860
        %vm868 = vmor %vm866, %vm867
        %v869 = vsel %vm868, %v860, %v865
        %v870 = vrsqrt.pop %v728
        %v871 = vmul.f32 %v870, %v728
        %v872 = vmul.f32 %v871, %v870
        %v873 = vmul.f32 0.5, %v872
        %v874 = vsub.f32 1.5, %v873
        %v875 = vmul.f32 %v870, %v874
        %vm876 = vweird.f32 %v728
        %vm877 = vweird.f32 %v870
        %vm878 = vmor %vm876, %vm877
        %v879 = vsel %vm878, %v870, %v875
        %v880 = vrsqrt.pop %v729
        %v881 = vmul.f32 %v880, %v729
        %v882 = vmul.f32 %v881, %v880
        %v883 = vmul.f32 0.5, %v882
        %v884 = vsub.f32 1.5, %v883
        %v885 = vmul.f32 %v880, %v884
        %vm886 = vweird.f32 %v729
        %vm887 = vweird.f32 %v880
        %vm888 = vmor %vm886, %vm887
        %v889 = vsel %vm888, %v880, %v885
        %v890 = vmul.f32 %v618, %v739
        %v891 = vmul.f32 %v619, %v749
        %v892 = vmul.f32 %v620, %v759
        %v893 = vmul.f32 %v621, %v769
        %v894 = vmul.f32 %v622, %v779
        %v895 = vmul.f32 %v623, %v789
        %v896 = vmul.f32 %v624, %v799
        %v897 = vmul.f32 %v625, %v809
        %v898 = vmul.f32 %v626, %v819
        %v899 = vmul.f32 %v627, %v829
        %v900 = vmul.f32 %v628, %v839
        %v901 = vmul.f32 %v629, %v849
        %v902 = vmul.f32 %v630, %v859
        %v903 = vmul.f32 %v631, %v869
        %v904 = vmul.f32 %v632, %v879
        %v905 = vmul.f32 %v633, %v889
        %v907 = vperm.slane %v528, 0
        %v909 = vmul.f32 %v890, %v907
        %v910 = vmul.f32 %v891, %v907
        %v911 = vmul.f32 %v892, %v907
        %v912 = vmul.f32 %v893, %v907
        %v913 = vmul.f32 %v894, %v907
        %v914 = vmul.f32 %v895, %v907
        %v915 = vmul.f32 %v896, %v907
        %v916 = vmul.f32 %v897, %v907
        %v917 = vmul.f32 %v898, %v907
        %v918 = vmul.f32 %v899, %v907
        %v919 = vmul.f32 %v900, %v907
        %v920 = vmul.f32 %v901, %v907
        %v921 = vmul.f32 %v902, %v907
        %v922 = vmul.f32 %v903, %v907
        %v923 = vmul.f32 %v904, %v907
        %v924 = vmul.f32 %v905, %v907
        %v926 = vperm.slane %v529, 0
        %v928 = vadd.f32 %v909, %v926
        %v929 = vadd.f32 %v910, %v926
        %v930 = vadd.f32 %v911, %v926
        %v931 = vadd.f32 %v912, %v926
        %v932 = vadd.f32 %v913, %v926
        %v933 = vadd.f32 %v914, %v926
        %v934 = vadd.f32 %v915, %v926
        %v935 = vadd.f32 %v916, %v926
        %v936 = vadd.f32 %v917, %v926
        %v937 = vadd.f32 %v918, %v926
        %v938 = vadd.f32 %v919, %v926
        %v939 = vadd.f32 %v920, %v926
        %v940 = vadd.f32 %v921, %v926
        %v941 = vadd.f32 %v922, %v926
        %v942 = vadd.f32 %v923, %v926
        %v943 = vadd.f32 %v924, %v926
        %v944 = vpack.c.bf16 %v929, %v928
        %v945 = vpack.c.bf16 %v931, %v930
        %v946 = vpack.c.bf16 %v933, %v932
        %v947 = vpack.c.bf16 %v935, %v934
        %v948 = vpack.c.bf16 %v937, %v936
        %v949 = vpack.c.bf16 %v939, %v938
        %v950 = vpack.c.bf16 %v941, %v940
        %v951 = vpack.c.bf16 %v943, %v942
        %v952 = vld [vmem:[%s456] sm:$0xff]
        %v953 = vld [vmem:[%s456 + $0x8] sm:$0xff]
        %v954 = vld [vmem:[%s456 + $0x10] sm:$0xff]
        %v955 = vld [vmem:[%s456 + $0x18] sm:$0xff]
        %v956 = vld [vmem:[%s456 + $0x20] sm:$0xff]
        %v957 = vld [vmem:[%s456 + $0x28] sm:$0xff]
        %v958 = vld [vmem:[%s456 + $0x30] sm:$0xff]
        %v959 = vld [vmem:[%s456 + $0x38] sm:$0xff]
        %v960 = vld [vmem:[%s456 + $0x40] sm:$0xff]
        %v961 = vld [vmem:[%s456 + $0x48] sm:$0xff]
        %v962 = vld [vmem:[%s456 + $0x50] sm:$0xff]
        %v963 = vld [vmem:[%s456 + $0x58] sm:$0xff]
        %v964 = vld [vmem:[%s456 + $0x60] sm:$0xff]
        %v965 = vld [vmem:[%s456 + $0x68] sm:$0xff]
        %v966 = vld [vmem:[%s456 + $0x70] sm:$0xff]
        %v967 = vld [vmem:[%s456 + $0x78] sm:$0xff]
        %v968 = vsel %vm546, %v952, 0.0
        %969 = vadd.xlane.f32.xlu0 %v968
        %v970 = vpop.xlane.xlu0 %969
        %v971 = vsel %vm546, %v953, 0.0
        %972 = vadd.xlane.f32.xlu0 %v971
        %v973 = vpop.xlane.xlu0 %972
        %v974 = vsel %vm546, %v954, 0.0
        %975 = vadd.xlane.f32.xlu0 %v974
        %v976 = vpop.xlane.xlu0 %975
        %v977 = vsel %vm546, %v955, 0.0
        %978 = vadd.xlane.f32.xlu0 %v977
        %v979 = vpop.xlane.xlu0 %978
        %v980 = vsel %vm546, %v956, 0.0
        %981 = vadd.xlane.f32.xlu0 %v980
        %v982 = vpop.xlane.xlu0 %981
        %v983 = vsel %vm546, %v957, 0.0
        %984 = vadd.xlane.f32.xlu0 %v983
        %v985 = vpop.xlane.xlu0 %984
        %v986 = vsel %vm546, %v958, 0.0
        %987 = vadd.xlane.f32.xlu0 %v986
        %v988 = vpop.xlane.xlu0 %987
        %v989 = vsel %vm546, %v959, 0.0
        %990 = vadd.xlane.f32.xlu0 %v989
        %v991 = vpop.xlane.xlu0 %990
        %v992 = vsel %vm546, %v960, 0.0
        %993 = vadd.xlane.f32.xlu0 %v992
        %v994 = vpop.xlane.xlu0 %993
        %v995 = vsel %vm546, %v961, 0.0
        %996 = vadd.xlane.f32.xlu0 %v995
        %v997 = vpop.xlane.xlu0 %996
        %v998 = vsel %vm546, %v962, 0.0
        %999 = vadd.xlane.f32.xlu0 %v998
        %v1000 = vpop.xlane.xlu0 %999
        %v1001 = vsel %vm546, %v963, 0.0
        %1002 = vadd.xlane.f32.xlu0 %v1001
        %v1003 = vpop.xlane.xlu0 %1002
        %v1004 = vsel %vm546, %v964, 0.0
        %1005 = vadd.xlane.f32.xlu0 %v1004
        %v1006 = vpop.xlane.xlu0 %1005
        %v1007 = vsel %vm546, %v965, 0.0
        %1008 = vadd.xlane.f32.xlu0 %v1007
        %v1009 = vpop.xlane.xlu0 %1008
        %v1010 = vsel %vm546, %v966, 0.0
        %1011 = vadd.xlane.f32.xlu0 %v1010
        %v1012 = vpop.xlane.xlu0 %1011
        %v1013 = vsel %vm546, %v967, 0.0
        %1014 = vadd.xlane.f32.xlu0 %v1013
        %v1015 = vpop.xlane.xlu0 %1014
        %v1016 = vmul.f32 %v970, %v601
        %v1017 = vmul.f32 %v973, %v601
        %v1018 = vmul.f32 %v976, %v601
        %v1019 = vmul.f32 %v979, %v601
        %v1020 = vmul.f32 %v982, %v601
        %v1021 = vmul.f32 %v985, %v601
        %v1022 = vmul.f32 %v988, %v601
        %v1023 = vmul.f32 %v991, %v601
        %v1024 = vmul.f32 %v994, %v601
        %v1025 = vmul.f32 %v997, %v601
        %v1026 = vmul.f32 %v1000, %v601
        %v1027 = vmul.f32 %v1003, %v601
        %v1028 = vmul.f32 %v1006, %v601
        %v1029 = vmul.f32 %v1009, %v601
        %v1030 = vmul.f32 %v1012, %v601
        %v1031 = vmul.f32 %v1015, %v601
        %v1032 = vsub.f32 %v952, %v1016
        %v1033 = vsub.f32 %v953, %v1017
        %v1034 = vsub.f32 %v954, %v1018
        %v1035 = vsub.f32 %v955, %v1019
        %v1036 = vsub.f32 %v956, %v1020
        %v1037 = vsub.f32 %v957, %v1021
        %v1038 = vsub.f32 %v958, %v1022
        %v1039 = vsub.f32 %v959, %v1023
        %v1040 = vsub.f32 %v960, %v1024
        %v1041 = vsub.f32 %v961, %v1025
        %v1042 = vsub.f32 %v962, %v1026
        %v1043 = vsub.f32 %v963, %v1027
        %v1044 = vsub.f32 %v964, %v1028
        %v1045 = vsub.f32 %v965, %v1029
        %v1046 = vsub.f32 %v966, %v1030
        %v1047 = vsub.f32 %v967, %v1031
        %v1048 = vmul.f32 %v1032, %v1032
        %v1049 = vmul.f32 %v1033, %v1033
        %v1050 = vmul.f32 %v1034, %v1034
        %v1051 = vmul.f32 %v1035, %v1035
        %v1052 = vmul.f32 %v1036, %v1036
        %v1053 = vmul.f32 %v1037, %v1037
        %v1054 = vmul.f32 %v1038, %v1038
        %v1055 = vmul.f32 %v1039, %v1039
        %v1056 = vmul.f32 %v1040, %v1040
        %v1057 = vmul.f32 %v1041, %v1041
        %v1058 = vmul.f32 %v1042, %v1042
        %v1059 = vmul.f32 %v1043, %v1043
        %v1060 = vmul.f32 %v1044, %v1044
        %v1061 = vmul.f32 %v1045, %v1045
        %v1062 = vmul.f32 %v1046, %v1046
        %v1063 = vmul.f32 %v1047, %v1047
        %v1064 = vsel %vm546, %v1048, 0.0
        %1065 = vadd.xlane.f32.xlu0 %v1064
        %v1066 = vpop.xlane.xlu0 %1065
        %v1067 = vsel %vm546, %v1049, 0.0
        %1068 = vadd.xlane.f32.xlu0 %v1067
        %v1069 = vpop.xlane.xlu0 %1068
        %v1070 = vsel %vm546, %v1050, 0.0
        %1071 = vadd.xlane.f32.xlu0 %v1070
        %v1072 = vpop.xlane.xlu0 %1071
        %v1073 = vsel %vm546, %v1051, 0.0
        %1074 = vadd.xlane.f32.xlu0 %v1073
        %v1075 = vpop.xlane.xlu0 %1074
        %v1076 = vsel %vm546, %v1052, 0.0
        %1077 = vadd.xlane.f32.xlu0 %v1076
        %v1078 = vpop.xlane.xlu0 %1077
        %v1079 = vsel %vm546, %v1053, 0.0
        %1080 = vadd.xlane.f32.xlu0 %v1079
        %v1081 = vpop.xlane.xlu0 %1080
        %v1082 = vsel %vm546, %v1054, 0.0
        %1083 = vadd.xlane.f32.xlu0 %v1082
        %v1084 = vpop.xlane.xlu0 %1083
        %v1085 = vsel %vm546, %v1055, 0.0
        %1086 = vadd.xlane.f32.xlu0 %v1085
        %v1087 = vpop.xlane.xlu0 %1086
        %v1088 = vsel %vm546, %v1056, 0.0
        %1089 = vadd.xlane.f32.xlu0 %v1088
        %v1090 = vpop.xlane.xlu0 %1089
        %v1091 = vsel %vm546, %v1057, 0.0
        %1092 = vadd.xlane.f32.xlu0 %v1091
        %v1093 = vpop.xlane.xlu0 %1092
        %v1094 = vsel %vm546, %v1058, 0.0
        %1095 = vadd.xlane.f32.xlu0 %v1094
        %v1096 = vpop.xlane.xlu0 %1095
        %v1097 = vsel %vm546, %v1059, 0.0
        %1098 = vadd.xlane.f32.xlu0 %v1097
        %v1099 = vpop.xlane.xlu0 %1098
        %v1100 = vsel %vm546, %v1060, 0.0
        %1101 = vadd.xlane.f32.xlu0 %v1100
        %v1102 = vpop.xlane.xlu0 %1101
        %v1103 = vsel %vm546, %v1061, 0.0
        %1104 = vadd.xlane.f32.xlu0 %v1103
        %v1105 = vpop.xlane.xlu0 %1104
        %v1106 = vsel %vm546, %v1062, 0.0
        %1107 = vadd.xlane.f32.xlu0 %v1106
        %v1108 = vpop.xlane.xlu0 %1107
        %v1109 = vsel %vm546, %v1063, 0.0
        %1110 = vadd.xlane.f32.xlu0 %v1109
        %v1111 = vpop.xlane.xlu0 %1110
        %v1112 = vmul.f32 %v1066, %v601
        %v1113 = vmul.f32 %v1069, %v601
        %v1114 = vmul.f32 %v1072, %v601
        %v1115 = vmul.f32 %v1075, %v601
        %v1116 = vmul.f32 %v1078, %v601
        %v1117 = vmul.f32 %v1081, %v601
        %v1118 = vmul.f32 %v1084, %v601
        %v1119 = vmul.f32 %v1087, %v601
        %v1120 = vmul.f32 %v1090, %v601
        %v1121 = vmul.f32 %v1093, %v601
        %v1122 = vmul.f32 %v1096, %v601
        %v1123 = vmul.f32 %v1099, %v601
        %v1124 = vmul.f32 %v1102, %v601
        %v1125 = vmul.f32 %v1105, %v601
        %v1126 = vmul.f32 %v1108, %v601
        %v1127 = vmul.f32 %v1111, %v601
        %v1128 = vadd.f32 %v1112, 1e-05
        %v1129 = vadd.f32 %v1113, 1e-05
        %v1130 = vadd.f32 %v1114, 1e-05
        %v1131 = vadd.f32 %v1115, 1e-05
        %v1132 = vadd.f32 %v1116, 1e-05
        %v1133 = vadd.f32 %v1117, 1e-05
        %v1134 = vadd.f32 %v1118, 1e-05
        %v1135 = vadd.f32 %v1119, 1e-05
        %v1136 = vadd.f32 %v1120, 1e-05
        %v1137 = vadd.f32 %v1121, 1e-05
        %v1138 = vadd.f32 %v1122, 1e-05
        %v1139 = vadd.f32 %v1123, 1e-05
        %v1140 = vadd.f32 %v1124, 1e-05
        %v1141 = vadd.f32 %v1125, 1e-05
        %v1142 = vadd.f32 %v1126, 1e-05
        %v1143 = vadd.f32 %v1127, 1e-05
        %v1144 = vrsqrt.pop %v1128
        %v1145 = vmul.f32 %v1144, %v1128
        %v1146 = vmul.f32 %v1145, %v1144
        %v1147 = vmul.f32 0.5, %v1146
        %v1148 = vsub.f32 1.5, %v1147
        %v1149 = vmul.f32 %v1144, %v1148
        %vm1150 = vweird.f32 %v1128
        %vm1151 = vweird.f32 %v1144
        %vm1152 = vmor %vm1150, %vm1151
        %v1153 = vsel %vm1152, %v1144, %v1149
        %v1154 = vrsqrt.pop %v1129
        %v1155 = vmul.f32 %v1154, %v1129
        %v1156 = vmul.f32 %v1155, %v1154
        %v1157 = vmul.f32 0.5, %v1156
        %v1158 = vsub.f32 1.5, %v1157
        %v1159 = vmul.f32 %v1154, %v1158
        %vm1160 = vweird.f32 %v1129
        %vm1161 = vweird.f32 %v1154
        %vm1162 = vmor %vm1160, %vm1161
        %v1163 = vsel %vm1162, %v1154, %v1159
        %v1164 = vrsqrt.pop %v1130
        %v1165 = vmul.f32 %v1164, %v1130
        %v1166 = vmul.f32 %v1165, %v1164
        %v1167 = vmul.f32 0.5, %v1166
        %v1168 = vsub.f32 1.5, %v1167
        %v1169 = vmul.f32 %v1164, %v1168
        %vm1170 = vweird.f32 %v1130
        %vm1171 = vweird.f32 %v1164
        %vm1172 = vmor %vm1170, %vm1171
        %v1173 = vsel %vm1172, %v1164, %v1169
        %v1174 = vrsqrt.pop %v1131
        %v1175 = vmul.f32 %v1174, %v1131
        %v1176 = vmul.f32 %v1175, %v1174
        %v1177 = vmul.f32 0.5, %v1176
        %v1178 = vsub.f32 1.5, %v1177
        %v1179 = vmul.f32 %v1174, %v1178
        %vm1180 = vweird.f32 %v1131
        %vm1181 = vweird.f32 %v1174
        %vm1182 = vmor %vm1180, %vm1181
        %v1183 = vsel %vm1182, %v1174, %v1179
        %v1184 = vrsqrt.pop %v1132
        %v1185 = vmul.f32 %v1184, %v1132
        %v1186 = vmul.f32 %v1185, %v1184
        %v1187 = vmul.f32 0.5, %v1186
        %v1188 = vsub.f32 1.5, %v1187
        %v1189 = vmul.f32 %v1184, %v1188
        %vm1190 = vweird.f32 %v1132
        %vm1191 = vweird.f32 %v1184
        %vm1192 = vmor %vm1190, %vm1191
        %v1193 = vsel %vm1192, %v1184, %v1189
        %v1194 = vrsqrt.pop %v1133
        %v1195 = vmul.f32 %v1194, %v1133
        %v1196 = vmul.f32 %v1195, %v1194
        %v1197 = vmul.f32 0.5, %v1196
        %v1198 = vsub.f32 1.5, %v1197
        %v1199 = vmul.f32 %v1194, %v1198
        %vm1200 = vweird.f32 %v1133
        %vm1201 = vweird.f32 %v1194
        %vm1202 = vmor %vm1200, %vm1201
        %v1203 = vsel %vm1202, %v1194, %v1199
        %v1204 = vrsqrt.pop %v1134
        %v1205 = vmul.f32 %v1204, %v1134
        %v1206 = vmul.f32 %v1205, %v1204
        %v1207 = vmul.f32 0.5, %v1206
        %v1208 = vsub.f32 1.5, %v1207
        %v1209 = vmul.f32 %v1204, %v1208
        %vm1210 = vweird.f32 %v1134
        %vm1211 = vweird.f32 %v1204
        %vm1212 = vmor %vm1210, %vm1211
        %v1213 = vsel %vm1212, %v1204, %v1209
        %v1214 = vrsqrt.pop %v1135
        %v1215 = vmul.f32 %v1214, %v1135
        %v1216 = vmul.f32 %v1215, %v1214
        %v1217 = vmul.f32 0.5, %v1216
        %v1218 = vsub.f32 1.5, %v1217
        %v1219 = vmul.f32 %v1214, %v1218
        %vm1220 = vweird.f32 %v1135
        %vm1221 = vweird.f32 %v1214
        %vm1222 = vmor %vm1220, %vm1221
        %v1223 = vsel %vm1222, %v1214, %v1219
        %v1224 = vrsqrt.pop %v1136
        %v1225 = vmul.f32 %v1224, %v1136
        %v1226 = vmul.f32 %v1225, %v1224
        %v1227 = vmul.f32 0.5, %v1226
        %v1228 = vsub.f32 1.5, %v1227
        %v1229 = vmul.f32 %v1224, %v1228
        %vm1230 = vweird.f32 %v1136
        %vm1231 = vweird.f32 %v1224
        %vm1232 = vmor %vm1230, %vm1231
        %v1233 = vsel %vm1232, %v1224, %v1229
        %v1234 = vrsqrt.pop %v1137
        %v1235 = vmul.f32 %v1234, %v1137
        %v1236 = vmul.f32 %v1235, %v1234
        %v1237 = vmul.f32 0.5, %v1236
        %v1238 = vsub.f32 1.5, %v1237
        %v1239 = vmul.f32 %v1234, %v1238
        %vm1240 = vweird.f32 %v1137
        %vm1241 = vweird.f32 %v1234
        %vm1242 = vmor %vm1240, %vm1241
        %v1243 = vsel %vm1242, %v1234, %v1239
        %v1244 = vrsqrt.pop %v1138
        %v1245 = vmul.f32 %v1244, %v1138
        %v1246 = vmul.f32 %v1245, %v1244
        %v1247 = vmul.f32 0.5, %v1246
        %v1248 = vsub.f32 1.5, %v1247
        %v1249 = vmul.f32 %v1244, %v1248
        %vm1250 = vweird.f32 %v1138
        %vm1251 = vweird.f32 %v1244
        %vm1252 = vmor %vm1250, %vm1251
        %v1253 = vsel %vm1252, %v1244, %v1249
        %v1254 = vrsqrt.pop %v1139
        %v1255 = vmul.f32 %v1254, %v1139
        %v1256 = vmul.f32 %v1255, %v1254
        %v1257 = vmul.f32 0.5, %v1256
        %v1258 = vsub.f32 1.5, %v1257
        %v1259 = vmul.f32 %v1254, %v1258
        %vm1260 = vweird.f32 %v1139
        %vm1261 = vweird.f32 %v1254
        %vm1262 = vmor %vm1260, %vm1261
        %v1263 = vsel %vm1262, %v1254, %v1259
        %v1264 = vrsqrt.pop %v1140
        %v1265 = vmul.f32 %v1264, %v1140
        %v1266 = vmul.f32 %v1265, %v1264
        %v1267 = vmul.f32 0.5, %v1266
        %v1268 = vsub.f32 1.5, %v1267
        %v1269 = vmul.f32 %v1264, %v1268
        %vm1270 = vweird.f32 %v1140
        %vm1271 = vweird.f32 %v1264
        %vm1272 = vmor %vm1270, %vm1271
        %v1273 = vsel %vm1272, %v1264, %v1269
        %v1274 = vrsqrt.pop %v1141
        %v1275 = vmul.f32 %v1274, %v1141
        %v1276 = vmul.f32 %v1275, %v1274
        %v1277 = vmul.f32 0.5, %v1276
        %v1278 = vsub.f32 1.5, %v1277
        %v1279 = vmul.f32 %v1274, %v1278
        %vm1280 = vweird.f32 %v1141
        %vm1281 = vweird.f32 %v1274
        %vm1282 = vmor %vm1280, %vm1281
        %v1283 = vsel %vm1282, %v1274, %v1279
        %v1284 = vrsqrt.pop %v1142
        %v1285 = vmul.f32 %v1284, %v1142
        %v1286 = vmul.f32 %v1285, %v1284
        %v1287 = vmul.f32 0.5, %v1286
        %v1288 = vsub.f32 1.5, %v1287
        %v1289 = vmul.f32 %v1284, %v1288
        %vm1290 = vweird.f32 %v1142
        %vm1291 = vweird.f32 %v1284
        %vm1292 = vmor %vm1290, %vm1291
        %v1293 = vsel %vm1292, %v1284, %v1289
        %v1294 = vrsqrt.pop %v1143
        %v1295 = vmul.f32 %v1294, %v1143
        %v1296 = vmul.f32 %v1295, %v1294
        %v1297 = vmul.f32 0.5, %v1296
        %v1298 = vsub.f32 1.5, %v1297
        %v1299 = vmul.f32 %v1294, %v1298
        %vm1300 = vweird.f32 %v1143
        %vm1301 = vweird.f32 %v1294
        %vm1302 = vmor %vm1300, %vm1301
        %v1303 = vsel %vm1302, %v1294, %v1299
        %v1304 = vmul.f32 %v1032, %v1153
        %v1305 = vmul.f32 %v1033, %v1163
        %v1306 = vmul.f32 %v1034, %v1173
        %v1307 = vmul.f32 %v1035, %v1183
        %v1308 = vmul.f32 %v1036, %v1193
        %v1309 = vmul.f32 %v1037, %v1203
        %v1310 = vmul.f32 %v1038, %v1213
        %v1311 = vmul.f32 %v1039, %v1223
        %v1312 = vmul.f32 %v1040, %v1233
        %v1313 = vmul.f32 %v1041, %v1243
        %v1314 = vmul.f32 %v1042, %v1253
        %v1315 = vmul.f32 %v1043, %v1263
        %v1316 = vmul.f32 %v1044, %v1273
        %v1317 = vmul.f32 %v1045, %v1283
        %v1318 = vmul.f32 %v1046, %v1293
        %v1319 = vmul.f32 %v1047, %v1303
        %v1320 = vmul.f32 %v1304, %v907
        %v1321 = vmul.f32 %v1305, %v907
        %v1322 = vmul.f32 %v1306, %v907
        %v1323 = vmul.f32 %v1307, %v907
        %v1324 = vmul.f32 %v1308, %v907
        %v1325 = vmul.f32 %v1309, %v907
        %v1326 = vmul.f32 %v1310, %v907
        %v1327 = vmul.f32 %v1311, %v907
        %v1328 = vmul.f32 %v1312, %v907
        %v1329 = vmul.f32 %v1313, %v907
        %v1330 = vmul.f32 %v1314, %v907
        %v1331 = vmul.f32 %v1315, %v907
        %v1332 = vmul.f32 %v1316, %v907
        %v1333 = vmul.f32 %v1317, %v907
        %v1334 = vmul.f32 %v1318, %v907
        %v1335 = vmul.f32 %v1319, %v907
        %v1336 = vadd.f32 %v1320, %v926
        %v1337 = vadd.f32 %v1321, %v926
        %v1338 = vadd.f32 %v1322, %v926
        %v1339 = vadd.f32 %v1323, %v926
        %v1340 = vadd.f32 %v1324, %v926
        %v1341 = vadd.f32 %v1325, %v926
        %v1342 = vadd.f32 %v1326, %v926
        %v1343 = vadd.f32 %v1327, %v926
        %v1344 = vadd.f32 %v1328, %v926
        %v1345 = vadd.f32 %v1329, %v926
        %v1346 = vadd.f32 %v1330, %v926
        %v1347 = vadd.f32 %v1331, %v926
        %v1348 = vadd.f32 %v1332, %v926
        %v1349 = vadd.f32 %v1333, %v926
        %v1350 = vadd.f32 %v1334, %v926
        %v1351 = vadd.f32 %v1335, %v926
        %v1352 = vpack.c.bf16 %v1337, %v1336
        %v1353 = vpack.c.bf16 %v1339, %v1338
        %v1354 = vpack.c.bf16 %v1341, %v1340
        %v1355 = vpack.c.bf16 %v1343, %v1342
        %v1356 = vpack.c.bf16 %v1345, %v1344
        %v1357 = vpack.c.bf16 %v1347, %v1346
        %v1358 = vpack.c.bf16 %v1349, %v1348
        %v1359 = vpack.c.bf16 %v1351, %v1350
        %v1360 = vld [vmem:[#allocation8] sm:$0xff]
        %v1361 = vld [vmem:[#allocation8 + $0x8] sm:$0xff]
        %v1362 = vld [vmem:[#allocation8 + $0x10] sm:$0xff]
        %v1363 = vld [vmem:[#allocation8 + $0x18] sm:$0xff]
        %v1364 = vld [vmem:[#allocation8 + $0x20] sm:$0xff]
        %v1365 = vld [vmem:[#allocation8 + $0x28] sm:$0xff]
        %v1366 = vld [vmem:[#allocation8 + $0x30] sm:$0xff]
        %v1367 = vld [vmem:[#allocation8 + $0x38] sm:$0xff]
        %v1368 = vld [vmem:[%s5] sm:$0x3]
        %v1370 = vperm.slane %v1368, 0
        %v1371 = vperm.slane %v1368, 1
        %v1382 = vunpack.c.l.b16 %v1360
        %v1383 = vunpack.c.h.b16 %v1360
        %v1384 = vunpack.c.l.b16 %v1361
        %v1385 = vunpack.c.h.b16 %v1361
        %v1386 = vunpack.c.l.b16 %v1362
        %v1387 = vunpack.c.h.b16 %v1362
        %v1388 = vunpack.c.l.b16 %v1363
        %v1389 = vunpack.c.h.b16 %v1363
        %v1390 = vunpack.c.l.b16 %v1364
        %v1391 = vunpack.c.h.b16 %v1364
        %v1392 = vunpack.c.l.b16 %v1365
        %v1393 = vunpack.c.h.b16 %v1365
        %v1394 = vunpack.c.l.b16 %v1366
        %v1395 = vunpack.c.h.b16 %v1366
        %v1396 = vunpack.c.l.b16 %v1367
        %v1397 = vunpack.c.h.b16 %v1367
        %v1398 = vpack.c.b16 %v1384, %v1382
        %v1399 = vpack.c.b16 %v1385, %v1383
        %v1400 = vpack.c.b16 %v1388, %v1386
        %v1401 = vpack.c.b16 %v1389, %v1387
        %v1402 = vpack.c.b16 %v1392, %v1390
        %v1403 = vpack.c.b16 %v1393, %v1391
        %v1404 = vpack.c.b16 %v1396, %v1394
        %v1405 = vpack.c.b16 %v1397, %v1395
        %v1415 = vsel %vm546, %v944, 0
        %v1418 = vsel %vm546, %v945, 0
        %v1421 = vsel %vm546, %v946, 0
        %v1424 = vsel %vm546, %v947, 0
        %v1427 = vsel %vm546, %v948, 0
        %v1430 = vsel %vm546, %v949, 0
        %v1433 = vsel %vm546, %v950, 0
        %v1436 = vsel %vm546, %v951, 0
        %1438 = vmatpush.bf16.msra.mxu0 0
        %1439 = vmatpush.bf16.msra.mxu0 0
        %1440 = vmatpush.bf16.msra.mxu0 0
        %1441 = vmatpush.bf16.msra.mxu0 0
        %1442 = vmatpush.bf16.msra.mxu0 %v1404
        %1443 = vmatpush.bf16.msra.mxu0 %v1402
        %1444 = vmatpush.bf16.msra.mxu0 %v1400
        %1445 = vmatpush.bf16.msra.mxu0 %v1398
        %1446 = vmatmul.bf16.gmra.mxu0 %v1415
        %v1447 = vpop.f32.mrf.mxu0
        %v1448 = vadd.f32 %v1370, %v1447
        %v1449 = vpop.f32.mrf.mxu0
        %v1450 = vadd.f32 %v1370, %v1449
        %1451 = vmatmul.bf16.gmra.mxu0 %v1418
        %v1452 = vpop.f32.mrf.mxu0
        %v1453 = vadd.f32 %v1370, %v1452
        %v1454 = vpop.f32.mrf.mxu0
        %v1455 = vadd.f32 %v1370, %v1454
        %1456 = vmatmul.bf16.gmra.mxu0 %v1421
        %v1457 = vpop.f32.mrf.mxu0
        %v1458 = vadd.f32 %v1370, %v1457
        %v1459 = vpop.f32.mrf.mxu0
        %v1460 = vadd.f32 %v1370, %v1459
        %1461 = vmatmul.bf16.gmra.mxu0 %v1424
        %v1462 = vpop.f32.mrf.mxu0
        %v1463 = vadd.f32 %v1370, %v1462
        %v1464 = vpop.f32.mrf.mxu0
        %v1465 = vadd.f32 %v1370, %v1464
        %1466 = vmatmul.bf16.gmra.mxu0 %v1427
        %v1467 = vpop.f32.mrf.mxu0
        %v1468 = vadd.f32 %v1370, %v1467
        %v1469 = vpop.f32.mrf.mxu0
        %v1470 = vadd.f32 %v1370, %v1469
        %1471 = vmatmul.bf16.gmra.mxu0 %v1430
        %v1472 = vpop.f32.mrf.mxu0
        %v1473 = vadd.f32 %v1370, %v1472
        %v1474 = vpop.f32.mrf.mxu0
        %v1475 = vadd.f32 %v1370, %v1474
        %1476 = vmatmul.bf16.gmra.mxu0 %v1433
        %v1477 = vpop.f32.mrf.mxu0
        %v1478 = vadd.f32 %v1370, %v1477
        %v1479 = vpop.f32.mrf.mxu0
        %v1480 = vadd.f32 %v1370, %v1479
        %1481 = vmatmul.bf16.gmra.mxu0 %v1436
        %v1482 = vpop.f32.mrf.mxu0
        %v1483 = vadd.f32 %v1370, %v1482
        %v1484 = vpop.f32.mrf.mxu0
        %v1485 = vadd.f32 %v1370, %v1484
        %1486 = vdwg.mxu0
        %1487 = vmatpush.bf16.msra.mxu0 0
        %1488 = vmatpush.bf16.msra.mxu0 0
        %1489 = vmatpush.bf16.msra.mxu0 0
        %1490 = vmatpush.bf16.msra.mxu0 0
        %1491 = vmatpush.bf16.msra.mxu0 %v1405
        %1492 = vmatpush.bf16.msra.mxu0 %v1403
        %1493 = vmatpush.bf16.msra.mxu0 %v1401
        %1494 = vmatpush.bf16.msra.mxu0 %v1399
        %1495 = vmatmul.bf16.gmra.mxu0 %v1415
        %v1496 = vpop.f32.mrf.mxu0
        %v1497 = vadd.f32 %v1371, %v1496
        %v1498 = vpop.f32.mrf.mxu0
        %v1499 = vadd.f32 %v1371, %v1498
        %1500 = vmatmul.bf16.gmra.mxu0 %v1418
        %v1501 = vpop.f32.mrf.mxu0
        %v1502 = vadd.f32 %v1371, %v1501
        %v1503 = vpop.f32.mrf.mxu0
        %v1504 = vadd.f32 %v1371, %v1503
        %1505 = vmatmul.bf16.gmra.mxu0 %v1421
        %v1506 = vpop.f32.mrf.mxu0
        %v1507 = vadd.f32 %v1371, %v1506
        %v1508 = vpop.f32.mrf.mxu0
        %v1509 = vadd.f32 %v1371, %v1508
        %1510 = vmatmul.bf16.gmra.mxu0 %v1424
        %v1511 = vpop.f32.mrf.mxu0
        %v1512 = vadd.f32 %v1371, %v1511
        %v1513 = vpop.f32.mrf.mxu0
        %v1514 = vadd.f32 %v1371, %v1513
        %1515 = vmatmul.bf16.gmra.mxu0 %v1427
        %v1516 = vpop.f32.mrf.mxu0
        %v1517 = vadd.f32 %v1371, %v1516
        %v1518 = vpop.f32.mrf.mxu0
        %v1519 = vadd.f32 %v1371, %v1518
        %1520 = vmatmul.bf16.gmra.mxu0 %v1430
        %v1521 = vpop.f32.mrf.mxu0
        %v1522 = vadd.f32 %v1371, %v1521
        %v1523 = vpop.f32.mrf.mxu0
        %v1524 = vadd.f32 %v1371, %v1523
        %1525 = vmatmul.bf16.gmra.mxu0 %v1433
        %v1526 = vpop.f32.mrf.mxu0
        %v1527 = vadd.f32 %v1371, %v1526
        %v1528 = vpop.f32.mrf.mxu0
        %v1529 = vadd.f32 %v1371, %v1528
        %1530 = vmatmul.bf16.gmra.mxu0 %v1436
        %v1531 = vpop.f32.mrf.mxu0
        %v1532 = vadd.f32 %v1371, %v1531
        %v1533 = vpop.f32.mrf.mxu0
        %v1534 = vadd.f32 %v1371, %v1533
        %1535 = vdwg.mxu0
        %v1536 = vld [vmem:[#allocation9] sm:$0xff]
        %v1537 = vld [vmem:[#allocation9 + $0x8] sm:$0xff]
        %v1538 = vld [vmem:[#allocation9 + $0x10] sm:$0xff]
        %v1539 = vld [vmem:[#allocation9 + $0x18] sm:$0xff]
        %v1540 = vld [vmem:[#allocation9 + $0x20] sm:$0xff]
        %v1541 = vld [vmem:[#allocation9 + $0x28] sm:$0xff]
        %v1542 = vld [vmem:[#allocation9 + $0x30] sm:$0xff]
        %v1543 = vld [vmem:[#allocation9 + $0x38] sm:$0xff]
        %v1544 = vld [vmem:[#allocation11] sm:$0x3]
        %v1546 = vperm.slane %v1544, 0
        %v1547 = vperm.slane %v1544, 1
        %v1558 = vunpack.c.l.b16 %v1536
        %v1559 = vunpack.c.h.b16 %v1536
        %v1560 = vunpack.c.l.b16 %v1537
        %v1561 = vunpack.c.h.b16 %v1537
        %v1562 = vunpack.c.l.b16 %v1538
        %v1563 = vunpack.c.h.b16 %v1538
        %v1564 = vunpack.c.l.b16 %v1539
        %v1565 = vunpack.c.h.b16 %v1539
        %v1566 = vunpack.c.l.b16 %v1540
        %v1567 = vunpack.c.h.b16 %v1540
        %v1568 = vunpack.c.l.b16 %v1541
        %v1569 = vunpack.c.h.b16 %v1541
        %v1570 = vunpack.c.l.b16 %v1542
        %v1571 = vunpack.c.h.b16 %v1542
        %v1572 = vunpack.c.l.b16 %v1543
        %v1573 = vunpack.c.h.b16 %v1543
        %v1574 = vpack.c.b16 %v1560, %v1558
        %v1575 = vpack.c.b16 %v1561, %v1559
        %v1576 = vpack.c.b16 %v1564, %v1562
        %v1577 = vpack.c.b16 %v1565, %v1563
        %v1578 = vpack.c.b16 %v1568, %v1566
        %v1579 = vpack.c.b16 %v1569, %v1567
        %v1580 = vpack.c.b16 %v1572, %v1570
        %v1581 = vpack.c.b16 %v1573, %v1571
        %v1591 = vsel %vm546, %v1352, 0
        %v1594 = vsel %vm546, %v1353, 0
        %v1597 = vsel %vm546, %v1354, 0
        %v1600 = vsel %vm546, %v1355, 0
        %v1603 = vsel %vm546, %v1356, 0
        %v1606 = vsel %vm546, %v1357, 0
        %v1609 = vsel %vm546, %v1358, 0
        %v1612 = vsel %vm546, %v1359, 0
        %1614 = vmatpush.bf16.msra.mxu0 0
        %1615 = vmatpush.bf16.msra.mxu0 0
        %1616 = vmatpush.bf16.msra.mxu0 0
        %1617 = vmatpush.bf16.msra.mxu0 0
        %1618 = vmatpush.bf16.msra.mxu0 %v1580
        %1619 = vmatpush.bf16.msra.mxu0 %v1578
        %1620 = vmatpush.bf16.msra.mxu0 %v1576
        %1621 = vmatpush.bf16.msra.mxu0 %v1574
        %1622 = vmatmul.bf16.gmra.mxu0 %v1591
        %v1623 = vpop.f32.mrf.mxu0
        %v1624 = vadd.f32 %v1546, %v1623
        %v1625 = vpop.f32.mrf.mxu0
        %v1626 = vadd.f32 %v1546, %v1625
        %1627 = vmatmul.bf16.gmra.mxu0 %v1594
        %v1628 = vpop.f32.mrf.mxu0
        %v1629 = vadd.f32 %v1546, %v1628
        %v1630 = vpop.f32.mrf.mxu0
        %v1631 = vadd.f32 %v1546, %v1630
        %1632 = vmatmul.bf16.gmra.mxu0 %v1597
        %v1633 = vpop.f32.mrf.mxu0
        %v1634 = vadd.f32 %v1546, %v1633
        %v1635 = vpop.f32.mrf.mxu0
        %v1636 = vadd.f32 %v1546, %v1635
        %1637 = vmatmul.bf16.gmra.mxu0 %v1600
        %v1638 = vpop.f32.mrf.mxu0
        %v1639 = vadd.f32 %v1546, %v1638
        %v1640 = vpop.f32.mrf.mxu0
        %v1641 = vadd.f32 %v1546, %v1640
        %1642 = vmatmul.bf16.gmra.mxu0 %v1603
        %v1643 = vpop.f32.mrf.mxu0
        %v1644 = vadd.f32 %v1546, %v1643
        %v1645 = vpop.f32.mrf.mxu0
        %v1646 = vadd.f32 %v1546, %v1645
        %1647 = vmatmul.bf16.gmra.mxu0 %v1606
        %v1648 = vpop.f32.mrf.mxu0
        %v1649 = vadd.f32 %v1546, %v1648
        %v1650 = vpop.f32.mrf.mxu0
        %v1651 = vadd.f32 %v1546, %v1650
        %1652 = vmatmul.bf16.gmra.mxu0 %v1609
        %v1653 = vpop.f32.mrf.mxu0
        %v1654 = vadd.f32 %v1546, %v1653
        %v1655 = vpop.f32.mrf.mxu0
        %v1656 = vadd.f32 %v1546, %v1655
        %1657 = vmatmul.bf16.gmra.mxu0 %v1612
        %v1658 = vpop.f32.mrf.mxu0
        %v1659 = vadd.f32 %v1546, %v1658
        %v1660 = vpop.f32.mrf.mxu0
        %v1661 = vadd.f32 %v1546, %v1660
        %1662 = vdwg.mxu0
        %1663 = vmatpush.bf16.msra.mxu0 0
        %1664 = vmatpush.bf16.msra.mxu0 0
        %1665 = vmatpush.bf16.msra.mxu0 0
        %1666 = vmatpush.bf16.msra.mxu0 0
        %1667 = vmatpush.bf16.msra.mxu0 %v1581
        %1668 = vmatpush.bf16.msra.mxu0 %v1579
        %1669 = vmatpush.bf16.msra.mxu0 %v1577
        %1670 = vmatpush.bf16.msra.mxu0 %v1575
        %1671 = vmatmul.bf16.gmra.mxu0 %v1591
        %v1672 = vpop.f32.mrf.mxu0
        %v1673 = vadd.f32 %v1547, %v1672
        %v1674 = vpop.f32.mrf.mxu0
        %v1675 = vadd.f32 %v1547, %v1674
        %1676 = vmatmul.bf16.gmra.mxu0 %v1594
        %v1677 = vpop.f32.mrf.mxu0
        %v1678 = vadd.f32 %v1547, %v1677
        %v1679 = vpop.f32.mrf.mxu0
        %v1680 = vadd.f32 %v1547, %v1679
        %1681 = vmatmul.bf16.gmra.mxu0 %v1597
        %v1682 = vpop.f32.mrf.mxu0
        %v1683 = vadd.f32 %v1547, %v1682
        %v1684 = vpop.f32.mrf.mxu0
        %v1685 = vadd.f32 %v1547, %v1684
        %1686 = vmatmul.bf16.gmra.mxu0 %v1600
        %v1687 = vpop.f32.mrf.mxu0
        %v1688 = vadd.f32 %v1547, %v1687
        %v1689 = vpop.f32.mrf.mxu0
        %v1690 = vadd.f32 %v1547, %v1689
        %1691 = vmatmul.bf16.gmra.mxu0 %v1603
        %v1692 = vpop.f32.mrf.mxu0
        %v1693 = vadd.f32 %v1547, %v1692
        %v1694 = vpop.f32.mrf.mxu0
        %v1695 = vadd.f32 %v1547, %v1694
        %1696 = vmatmul.bf16.gmra.mxu0 %v1606
        %v1697 = vpop.f32.mrf.mxu0
        %v1698 = vadd.f32 %v1547, %v1697
        %v1699 = vpop.f32.mrf.mxu0
        %v1700 = vadd.f32 %v1547, %v1699
        %1701 = vmatmul.bf16.gmra.mxu0 %v1609
        %v1702 = vpop.f32.mrf.mxu0
        %v1703 = vadd.f32 %v1547, %v1702
        %v1704 = vpop.f32.mrf.mxu0
        %v1705 = vadd.f32 %v1547, %v1704
        %1706 = vmatmul.bf16.gmra.mxu0 %v1612
        %v1707 = vpop.f32.mrf.mxu0
        %v1708 = vadd.f32 %v1547, %v1707
        %v1709 = vpop.f32.mrf.mxu0
        %v1710 = vadd.f32 %v1547, %v1709
        %1711 = vdwg.mxu0
        %v1712 = vpack.c.bf16 %v1448, %v1448
        %v1713 = vpack.c.bf16 %v1450, %v1450
        %v1714 = vpack.c.bf16 %v1453, %v1453
        %v1715 = vpack.c.bf16 %v1455, %v1455
        %v1716 = vpack.c.bf16 %v1458, %v1458
        %v1717 = vpack.c.bf16 %v1460, %v1460
        %v1718 = vpack.c.bf16 %v1463, %v1463
        %v1719 = vpack.c.bf16 %v1465, %v1465
        %v1720 = vpack.c.bf16 %v1468, %v1468
        %v1721 = vpack.c.bf16 %v1470, %v1470
        %v1722 = vpack.c.bf16 %v1473, %v1473
        %v1723 = vpack.c.bf16 %v1475, %v1475
        %v1724 = vpack.c.bf16 %v1478, %v1478
        %v1725 = vpack.c.bf16 %v1480, %v1480
        %v1726 = vpack.c.bf16 %v1483, %v1483
        %v1727 = vpack.c.bf16 %v1485, %v1485
        %v1728 = vpack.c.bf16 %v1624, %v1624
        %v1729 = vpack.c.bf16 %v1626, %v1626
        %v1730 = vpack.c.bf16 %v1629, %v1629
        %v1731 = vpack.c.bf16 %v1631, %v1631
        %v1732 = vpack.c.bf16 %v1634, %v1634
        %v1733 = vpack.c.bf16 %v1636, %v1636
        %v1734 = vpack.c.bf16 %v1639, %v1639
        %v1735 = vpack.c.bf16 %v1641, %v1641
        %v1736 = vpack.c.bf16 %v1644, %v1644
        %v1737 = vpack.c.bf16 %v1646, %v1646
        %v1738 = vpack.c.bf16 %v1649, %v1649
        %v1739 = vpack.c.bf16 %v1651, %v1651
        %v1740 = vpack.c.bf16 %v1654, %v1654
        %v1741 = vpack.c.bf16 %v1656, %v1656
        %v1742 = vpack.c.bf16 %v1659, %v1659
        %v1743 = vpack.c.bf16 %v1661, %v1661
        %v1744 = vpack.c.bf16 %v1673, %v1673
        %v1745 = vpack.c.bf16 %v1675, %v1675
        %v1746 = vpack.c.bf16 %v1678, %v1678
        %v1747 = vpack.c.bf16 %v1680, %v1680
        %v1748 = vpack.c.bf16 %v1683, %v1683
        %v1749 = vpack.c.bf16 %v1685, %v1685
        %v1750 = vpack.c.bf16 %v1688, %v1688
        %v1751 = vpack.c.bf16 %v1690, %v1690
        %v1752 = vpack.c.bf16 %v1693, %v1693
        %v1753 = vpack.c.bf16 %v1695, %v1695
        %v1754 = vpack.c.bf16 %v1698, %v1698
        %v1755 = vpack.c.bf16 %v1700, %v1700
        %v1756 = vpack.c.bf16 %v1703, %v1703
        %v1757 = vpack.c.bf16 %v1705, %v1705
        %v1758 = vpack.c.bf16 %v1708, %v1708
        %v1759 = vpack.c.bf16 %v1710, %v1710
        %v1762 = vunpack.c.l.b16 %v1712
        %v1763 = vunpack.c.l.b16 %v1713
        %v1764 = vpack.c.b16 %v1763, %v1762
        %v1767 = vunpack.c.l.b16 %v1728
        %v1768 = vunpack.c.l.b16 %v1729
        %v1769 = vpack.c.b16 %v1768, %v1767
        %vm1770 = vcmask 64512
        %v1772 = vsel %vm1770, %v1764, 0
        %v1775 = vsel %vm1770, %v1769, 0
        %1777 = vmatpush.bf16.xpose.msra.mxu0 0
        %1778 = vmatpush.bf16.xpose.msra.mxu0 0
        %1779 = vmatpush.bf16.xpose.msra.mxu0 0
        %1780 = vmatpush.bf16.xpose.msra.mxu0 0
        %1781 = vmatpush.bf16.xpose.msra.mxu0 0
        %1782 = vmatpush.bf16.xpose.msra.mxu0 0
        %1783 = vmatpush.bf16.xpose.msra.mxu0 0
        %1784 = vmatpush.bf16.xpose.msra.mxu0 %v1775
        %1785 = vmatmul.bf16.gmra.mxu0 %v1772
        %v1786 = vpop.f32.mrf.mxu0
        %v1787 = vadd.f32 0.0, %v1786
        %v1788 = vpop.f32.mrf.mxu0
        %v1789 = vadd.f32 0.0, %v1788
        %1790 = vdwg.mxu0
        %v1793 = vunpack.c.l.b16 %v1714
        %v1794 = vunpack.c.l.b16 %v1715
        %v1795 = vpack.c.b16 %v1794, %v1793
        %v1798 = vunpack.c.l.b16 %v1730
        %v1799 = vunpack.c.l.b16 %v1731
        %v1800 = vpack.c.b16 %v1799, %v1798
        %v1802 = vsel %vm1770, %v1795, 0
        %v1805 = vsel %vm1770, %v1800, 0
        %1807 = vmatpush.bf16.xpose.msra.mxu0 0
        %1808 = vmatpush.bf16.xpose.msra.mxu0 0
        %1809 = vmatpush.bf16.xpose.msra.mxu0 0
        %1810 = vmatpush.bf16.xpose.msra.mxu0 0
        %1811 = vmatpush.bf16.xpose.msra.mxu0 0
        %1812 = vmatpush.bf16.xpose.msra.mxu0 0
        %1813 = vmatpush.bf16.xpose.msra.mxu0 0
        %1814 = vmatpush.bf16.xpose.msra.mxu0 %v1805
        %1815 = vmatmul.bf16.gmra.mxu0 %v1802
        %v1816 = vpop.f32.mrf.mxu0
        %v1817 = vadd.f32 0.0, %v1816
        %v1818 = vpop.f32.mrf.mxu0
        %v1819 = vadd.f32 0.0, %v1818
        %1820 = vdwg.mxu0
        %v1823 = vunpack.c.l.b16 %v1716
        %v1824 = vunpack.c.l.b16 %v1717
        %v1825 = vpack.c.b16 %v1824, %v1823
        %v1828 = vunpack.c.l.b16 %v1732
        %v1829 = vunpack.c.l.b16 %v1733
        %v1830 = vpack.c.b16 %v1829, %v1828
        %v1832 = vsel %vm1770, %v1825, 0
        %v1835 = vsel %vm1770, %v1830, 0
        %1837 = vmatpush.bf16.xpose.msra.mxu0 0
        %1838 = vmatpush.bf16.xpose.msra.mxu0 0
        %1839 = vmatpush.bf16.xpose.msra.mxu0 0
        %1840 = vmatpush.bf16.xpose.msra.mxu0 0
        %1841 = vmatpush.bf16.xpose.msra.mxu0 0
        %1842 = vmatpush.bf16.xpose.msra.mxu0 0
        %1843 = vmatpush.bf16.xpose.msra.mxu0 0
        %1844 = vmatpush.bf16.xpose.msra.mxu0 %v1835
        %1845 = vmatmul.bf16.gmra.mxu0 %v1832
        %v1846 = vpop.f32.mrf.mxu0
        %v1847 = vadd.f32 0.0, %v1846
        %v1848 = vpop.f32.mrf.mxu0
        %v1849 = vadd.f32 0.0, %v1848
        %1850 = vdwg.mxu0
        %v1853 = vunpack.c.l.b16 %v1718
        %v1854 = vunpack.c.l.b16 %v1719
        %v1855 = vpack.c.b16 %v1854, %v1853
        %v1858 = vunpack.c.l.b16 %v1734
        %v1859 = vunpack.c.l.b16 %v1735
        %v1860 = vpack.c.b16 %v1859, %v1858
        %v1862 = vsel %vm1770, %v1855, 0
        %v1865 = vsel %vm1770, %v1860, 0
        %1867 = vmatpush.bf16.xpose.msra.mxu0 0
        %1868 = vmatpush.bf16.xpose.msra.mxu0 0
        %1869 = vmatpush.bf16.xpose.msra.mxu0 0
        %1870 = vmatpush.bf16.xpose.msra.mxu0 0
        %1871 = vmatpush.bf16.xpose.msra.mxu0 0
        %1872 = vmatpush.bf16.xpose.msra.mxu0 0
        %1873 = vmatpush.bf16.xpose.msra.mxu0 0
        %1874 = vmatpush.bf16.xpose.msra.mxu0 %v1865
        %1875 = vmatmul.bf16.gmra.mxu0 %v1862
        %v1876 = vpop.f32.mrf.mxu0
        %v1877 = vadd.f32 0.0, %v1876
        %v1878 = vpop.f32.mrf.mxu0
        %v1879 = vadd.f32 0.0, %v1878
        %1880 = vdwg.mxu0
        %v1883 = vunpack.c.l.b16 %v1720
        %v1884 = vunpack.c.l.b16 %v1721
        %v1885 = vpack.c.b16 %v1884, %v1883
        %v1888 = vunpack.c.l.b16 %v1736
        %v1889 = vunpack.c.l.b16 %v1737
        %v1890 = vpack.c.b16 %v1889, %v1888
        %v1892 = vsel %vm1770, %v1885, 0
        %v1895 = vsel %vm1770, %v1890, 0
        %1897 = vmatpush.bf16.xpose.msra.mxu0 0
        %1898 = vmatpush.bf16.xpose.msra.mxu0 0
        %1899 = vmatpush.bf16.xpose.msra.mxu0 0
        %1900 = vmatpush.bf16.xpose.msra.mxu0 0
        %1901 = vmatpush.bf16.xpose.msra.mxu0 0
        %1902 = vmatpush.bf16.xpose.msra.mxu0 0
        %1903 = vmatpush.bf16.xpose.msra.mxu0 0
        %1904 = vmatpush.bf16.xpose.msra.mxu0 %v1895
        %1905 = vmatmul.bf16.gmra.mxu0 %v1892
        %v1906 = vpop.f32.mrf.mxu0
        %v1907 = vadd.f32 0.0, %v1906
        %v1908 = vpop.f32.mrf.mxu0
        %v1909 = vadd.f32 0.0, %v1908
        %1910 = vdwg.mxu0
        %v1913 = vunpack.c.l.b16 %v1722
        %v1914 = vunpack.c.l.b16 %v1723
        %v1915 = vpack.c.b16 %v1914, %v1913
        %v1918 = vunpack.c.l.b16 %v1738
        %v1919 = vunpack.c.l.b16 %v1739
        %v1920 = vpack.c.b16 %v1919, %v1918
        %v1922 = vsel %vm1770, %v1915, 0
        %v1925 = vsel %vm1770, %v1920, 0
        %1927 = vmatpush.bf16.xpose.msra.mxu0 0
        %1928 = vmatpush.bf16.xpose.msra.mxu0 0
        %1929 = vmatpush.bf16.xpose.msra.mxu0 0
        %1930 = vmatpush.bf16.xpose.msra.mxu0 0
        %1931 = vmatpush.bf16.xpose.msra.mxu0 0
        %1932 = vmatpush.bf16.xpose.msra.mxu0 0
        %1933 = vmatpush.bf16.xpose.msra.mxu0 0
        %1934 = vmatpush.bf16.xpose.msra.mxu0 %v1925
        %1935 = vmatmul.bf16.gmra.mxu0 %v1922
        %v1936 = vpop.f32.mrf.mxu0
        %v1937 = vadd.f32 0.0, %v1936
        %v1938 = vpop.f32.mrf.mxu0
        %v1939 = vadd.f32 0.0, %v1938
        %1940 = vdwg.mxu0
        %v1943 = vunpack.c.l.b16 %v1724
        %v1944 = vunpack.c.l.b16 %v1725
        %v1945 = vpack.c.b16 %v1944, %v1943
        %v1948 = vunpack.c.l.b16 %v1740
        %v1949 = vunpack.c.l.b16 %v1741
        %v1950 = vpack.c.b16 %v1949, %v1948
        %v1952 = vsel %vm1770, %v1945, 0
        %v1955 = vsel %vm1770, %v1950, 0
        %1957 = vmatpush.bf16.xpose.msra.mxu0 0
        %1958 = vmatpush.bf16.xpose.msra.mxu0 0
        %1959 = vmatpush.bf16.xpose.msra.mxu0 0
        %1960 = vmatpush.bf16.xpose.msra.mxu0 0
        %1961 = vmatpush.bf16.xpose.msra.mxu0 0
        %1962 = vmatpush.bf16.xpose.msra.mxu0 0
        %1963 = vmatpush.bf16.xpose.msra.mxu0 0
        %1964 = vmatpush.bf16.xpose.msra.mxu0 %v1955
        %1965 = vmatmul.bf16.gmra.mxu0 %v1952
        %v1966 = vpop.f32.mrf.mxu0
        %v1967 = vadd.f32 0.0, %v1966
        %v1968 = vpop.f32.mrf.mxu0
        %v1969 = vadd.f32 0.0, %v1968
        %1970 = vdwg.mxu0
        %v1973 = vunpack.c.l.b16 %v1726
        %v1974 = vunpack.c.l.b16 %v1727
        %v1975 = vpack.c.b16 %v1974, %v1973
        %v1978 = vunpack.c.l.b16 %v1742
        %v1979 = vunpack.c.l.b16 %v1743
        %v1980 = vpack.c.b16 %v1979, %v1978
        %v1982 = vsel %vm1770, %v1975, 0
        %v1985 = vsel %vm1770, %v1980, 0
        %1987 = vmatpush.bf16.xpose.msra.mxu0 0
        %1988 = vmatpush.bf16.xpose.msra.mxu0 0
        %1989 = vmatpush.bf16.xpose.msra.mxu0 0
        %1990 = vmatpush.bf16.xpose.msra.mxu0 0
        %1991 = vmatpush.bf16.xpose.msra.mxu0 0
        %1992 = vmatpush.bf16.xpose.msra.mxu0 0
        %1993 = vmatpush.bf16.xpose.msra.mxu0 0
        %1994 = vmatpush.bf16.xpose.msra.mxu0 %v1985
        %1995 = vmatmul.bf16.gmra.mxu0 %v1982
        %v1996 = vpop.f32.mrf.mxu0
        %v1997 = vadd.f32 0.0, %v1996
        %v1998 = vpop.f32.mrf.mxu0
        %v1999 = vadd.f32 0.0, %v1998
        %2000 = vdwg.mxu0
        %vm2001 = vcmask 130048
        %v2002 = vsel %vm2001, %v1787, -inf
        %2003 = vmax.xlane.f32.xlu0 %v2002
        %v2004 = vpop.xlane.xlu0 %2003
        %v2005 = vsel %vm2001, %v1789, -inf
        %2006 = vmax.xlane.f32.xlu0 %v2005
        %v2007 = vpop.xlane.xlu0 %2006
        %v2008 = vsel %vm2001, %v1817, -inf
        %2009 = vmax.xlane.f32.xlu0 %v2008
        %v2010 = vpop.xlane.xlu0 %2009
        %v2011 = vsel %vm2001, %v1819, -inf
        %2012 = vmax.xlane.f32.xlu0 %v2011
        %v2013 = vpop.xlane.xlu0 %2012
        %v2014 = vsel %vm2001, %v1847, -inf
        %2015 = vmax.xlane.f32.xlu0 %v2014
        %v2016 = vpop.xlane.xlu0 %2015
        %v2017 = vsel %vm2001, %v1849, -inf
        %2018 = vmax.xlane.f32.xlu0 %v2017
        %v2019 = vpop.xlane.xlu0 %2018
        %v2020 = vsel %vm2001, %v1877, -inf
        %2021 = vmax.xlane.f32.xlu0 %v2020
        %v2022 = vpop.xlane.xlu0 %2021
        %v2023 = vsel %vm2001, %v1879, -inf
        %2024 = vmax.xlane.f32.xlu0 %v2023
        %v2025 = vpop.xlane.xlu0 %2024
        %v2026 = vsel %vm2001, %v1907, -inf
        %2027 = vmax.xlane.f32.xlu0 %v2026
        %v2028 = vpop.xlane.xlu0 %2027
        %v2029 = vsel %vm2001, %v1909, -inf
        %2030 = vmax.xlane.f32.xlu0 %v2029
        %v2031 = vpop.xlane.xlu0 %2030
        %v2032 = vsel %vm2001, %v1937, -inf
        %2033 = vmax.xlane.f32.xlu0 %v2032
        %v2034 = vpop.xlane.xlu0 %2033
        %v2035 = vsel %vm2001, %v1939, -inf
        %2036 = vmax.xlane.f32.xlu0 %v2035
        %v2037 = vpop.xlane.xlu0 %2036
        %v2038 = vsel %vm2001, %v1967, -inf
        %2039 = vmax.xlane.f32.xlu0 %v2038
        %v2040 = vpop.xlane.xlu0 %2039
        %v2041 = vsel %vm2001, %v1969, -inf
        %2042 = vmax.xlane.f32.xlu0 %v2041
        %v2043 = vpop.xlane.xlu0 %2042
        %v2044 = vsel %vm2001, %v1997, -inf
        %2045 = vmax.xlane.f32.xlu0 %v2044
        %v2046 = vpop.xlane.xlu0 %2045
        %v2047 = vsel %vm2001, %v1999, -inf
        %2048 = vmax.xlane.f32.xlu0 %v2047
        %v2049 = vpop.xlane.xlu0 %2048
        %v2050 = vsub.f32 %v1787, %v2004
        %v2051 = vsub.f32 %v1789, %v2007
        %v2052 = vsub.f32 %v1817, %v2010
        %v2053 = vsub.f32 %v1819, %v2013
        %v2054 = vsub.f32 %v1847, %v2016
        %v2055 = vsub.f32 %v1849, %v2019
        %v2056 = vsub.f32 %v1877, %v2022
        %v2057 = vsub.f32 %v1879, %v2025
        %v2058 = vsub.f32 %v1907, %v2028
        %v2059 = vsub.f32 %v1909, %v2031
        %v2060 = vsub.f32 %v1937, %v2034
        %v2061 = vsub.f32 %v1939, %v2037
        %v2062 = vsub.f32 %v1967, %v2040
        %v2063 = vsub.f32 %v1969, %v2043
        %v2064 = vsub.f32 %v1997, %v2046
        %v2065 = vsub.f32 %v1999, %v2049
        %v2066 = vmul.f32 %v2050, 1.442695
        %v2067 = vpow.pop %v2066
        %v2068 = vmul.f32 %v2051, 1.442695
        %v2069 = vpow.pop %v2068
        %v2070 = vmul.f32 %v2052, 1.442695
        %v2071 = vpow.pop %v2070
        %v2072 = vmul.f32 %v2053, 1.442695
        %v2073 = vpow.pop %v2072
        %v2074 = vmul.f32 %v2054, 1.442695
        %v2075 = vpow.pop %v2074
        %v2076 = vmul.f32 %v2055, 1.442695
        %v2077 = vpow.pop %v2076
        %v2078 = vmul.f32 %v2056, 1.442695
        %v2079 = vpow.pop %v2078
        %v2080 = vmul.f32 %v2057, 1.442695
        %v2081 = vpow.pop %v2080
        %v2082 = vmul.f32 %v2058, 1.442695
        %v2083 = vpow.pop %v2082
        %v2084 = vmul.f32 %v2059, 1.442695
        %v2085 = vpow.pop %v2084
        %v2086 = vmul.f32 %v2060, 1.442695
        %v2087 = vpow.pop %v2086
        %v2088 = vmul.f32 %v2061, 1.442695
        %v2089 = vpow.pop %v2088
        %v2090 = vmul.f32 %v2062, 1.442695
        %v2091 = vpow.pop %v2090
        %v2092 = vmul.f32 %v2063, 1.442695
        %v2093 = vpow.pop %v2092
        %v2094 = vmul.f32 %v2064, 1.442695
        %v2095 = vpow.pop %v2094
        %v2096 = vmul.f32 %v2065, 1.442695
        %v2097 = vpow.pop %v2096
        %v2098 = vsel %vm2001, %v2067, 0.0
        %2099 = vadd.xlane.f32.xlu0 %v2098
        %v2100 = vpop.xlane.xlu0 %2099
        %v2101 = vsel %vm2001, %v2069, 0.0
        %2102 = vadd.xlane.f32.xlu0 %v2101
        %v2103 = vpop.xlane.xlu0 %2102
        %v2104 = vsel %vm2001, %v2071, 0.0
        %2105 = vadd.xlane.f32.xlu0 %v2104
        %v2106 = vpop.xlane.xlu0 %2105
        %v2107 = vsel %vm2001, %v2073, 0.0
        %2108 = vadd.xlane.f32.xlu0 %v2107
        %v2109 = vpop.xlane.xlu0 %2108
        %v2110 = vsel %vm2001, %v2075, 0.0
        %2111 = vadd.xlane.f32.xlu0 %v2110
        %v2112 = vpop.xlane.xlu0 %2111
        %v2113 = vsel %vm2001, %v2077, 0.0
        %2114 = vadd.xlane.f32.xlu0 %v2113
        %v2115 = vpop.xlane.xlu0 %2114
        %v2116 = vsel %vm2001, %v2079, 0.0
        %2117 = vadd.xlane.f32.xlu0 %v2116
        %v2118 = vpop.xlane.xlu0 %2117
        %v2119 = vsel %vm2001, %v2081, 0.0
        %2120 = vadd.xlane.f32.xlu0 %v2119
        %v2121 = vpop.xlane.xlu0 %2120
        %v2122 = vsel %vm2001, %v2083, 0.0
        %2123 = vadd.xlane.f32.xlu0 %v2122
        %v2124 = vpop.xlane.xlu0 %2123
        %v2125 = vsel %vm2001, %v2085, 0.0
        %2126 = vadd.xlane.f32.xlu0 %v2125
        %v2127 = vpop.xlane.xlu0 %2126
        %v2128 = vsel %vm2001, %v2087, 0.0
        %2129 = vadd.xlane.f32.xlu0 %v2128
        %v2130 = vpop.xlane.xlu0 %2129
        %v2131 = vsel %vm2001, %v2089, 0.0
        %2132 = vadd.xlane.f32.xlu0 %v2131
        %v2133 = vpop.xlane.xlu0 %2132
        %v2134 = vsel %vm2001, %v2091, 0.0
        %2135 = vadd.xlane.f32.xlu0 %v2134
        %v2136 = vpop.xlane.xlu0 %2135
        %v2137 = vsel %vm2001, %v2093, 0.0
        %2138 = vadd.xlane.f32.xlu0 %v2137
        %v2139 = vpop.xlane.xlu0 %2138
        %v2140 = vsel %vm2001, %v2095, 0.0
        %2141 = vadd.xlane.f32.xlu0 %v2140
        %v2142 = vpop.xlane.xlu0 %2141
        %v2143 = vsel %vm2001, %v2097, 0.0
        %2144 = vadd.xlane.f32.xlu0 %v2143
        %v2145 = vpop.xlane.xlu0 %2144
        %v2146 = vrcp.pop %v2100
        %v2147 = vrcp.pop %v2103
        %v2148 = vrcp.pop %v2106
        %v2149 = vrcp.pop %v2109
        %v2150 = vrcp.pop %v2112
        %v2151 = vrcp.pop %v2115
        %v2152 = vrcp.pop %v2118
        %v2153 = vrcp.pop %v2121
        %v2154 = vrcp.pop %v2124
        %v2155 = vrcp.pop %v2127
        %v2156 = vrcp.pop %v2130
        %v2157 = vrcp.pop %v2133
        %v2158 = vrcp.pop %v2136
        %v2159 = vrcp.pop %v2139
        %v2160 = vrcp.pop %v2142
        %v2161 = vrcp.pop %v2145
        %v2162 = vmul.f32 %v2067, %v2146
        %v2163 = vmul.f32 %v2069, %v2147
        %v2164 = vmul.f32 %v2071, %v2148
        %v2165 = vmul.f32 %v2073, %v2149
        %v2166 = vmul.f32 %v2075, %v2150
        %v2167 = vmul.f32 %v2077, %v2151
        %v2168 = vmul.f32 %v2079, %v2152
        %v2169 = vmul.f32 %v2081, %v2153
        %v2170 = vmul.f32 %v2083, %v2154
        %v2171 = vmul.f32 %v2085, %v2155
        %v2172 = vmul.f32 %v2087, %v2156
        %v2173 = vmul.f32 %v2089, %v2157
        %v2174 = vmul.f32 %v2091, %v2158
        %v2175 = vmul.f32 %v2093, %v2159
        %v2176 = vmul.f32 %v2095, %v2160
        %v2177 = vmul.f32 %v2097, %v2161
        %v2178 = vpack.c.bf16 %v2162, %v2162
        %v2179 = vpack.c.bf16 %v2163, %v2163
        %v2180 = vpack.c.bf16 %v2164, %v2164
        %v2181 = vpack.c.bf16 %v2165, %v2165
        %v2182 = vpack.c.bf16 %v2166, %v2166
        %v2183 = vpack.c.bf16 %v2167, %v2167
        %v2184 = vpack.c.bf16 %v2168, %v2168
        %v2185 = vpack.c.bf16 %v2169, %v2169
        %v2186 = vpack.c.bf16 %v2170, %v2170
        %v2187 = vpack.c.bf16 %v2171, %v2171
        %v2188 = vpack.c.bf16 %v2172, %v2172
        %v2189 = vpack.c.bf16 %v2173, %v2173
        %v2190 = vpack.c.bf16 %v2174, %v2174
        %v2191 = vpack.c.bf16 %v2175, %v2175
        %v2192 = vpack.c.bf16 %v2176, %v2176
        %v2193 = vpack.c.bf16 %v2177, %v2177
        %v2196 = vunpack.c.l.b16 %v2178
        %v2197 = vunpack.c.l.b16 %v2179
        %v2198 = vpack.c.b16 %v2197, %v2196
        %v2201 = vunpack.c.l.b16 %v1744
        %v2202 = vunpack.c.l.b16 %v1745
        %v2203 = vpack.c.b16 %v2202, %v2201
        %v2206 = vsel %vm2001, %v2198, 0
        %2208 = vmatpush.bf16.msra.mxu0 0
        %2209 = vmatpush.bf16.msra.mxu0 0
        %2210 = vmatpush.bf16.msra.mxu0 0
        %2211 = vmatpush.bf16.msra.mxu0 0
        %2212 = vmatpush.bf16.msra.mxu0 0
        %2213 = vmatpush.bf16.msra.mxu0 0
        %2214 = vmatpush.bf16.msra.mxu0 0
        %2215 = vmatpush.bf16.msra.mxu0 %v2203
        %2216 = vmatmul.bf16.gmra.mxu0 %v2206
        %v2217 = vpop.f32.mrf.mxu0
        %v2218 = vadd.f32 0.0, %v2217
        %v2219 = vpop.f32.mrf.mxu0
        %v2220 = vadd.f32 0.0, %v2219
        %2221 = vdwg.mxu0
        %v2224 = vunpack.c.l.b16 %v2180
        %v2225 = vunpack.c.l.b16 %v2181
        %v2226 = vpack.c.b16 %v2225, %v2224
        %v2229 = vunpack.c.l.b16 %v1746
        %v2230 = vunpack.c.l.b16 %v1747
        %v2231 = vpack.c.b16 %v2230, %v2229
        %v2234 = vsel %vm2001, %v2226, 0
        %2236 = vmatpush.bf16.msra.mxu0 0
        %2237 = vmatpush.bf16.msra.mxu0 0
        %2238 = vmatpush.bf16.msra.mxu0 0
        %2239 = vmatpush.bf16.msra.mxu0 0
        %2240 = vmatpush.bf16.msra.mxu0 0
        %2241 = vmatpush.bf16.msra.mxu0 0
        %2242 = vmatpush.bf16.msra.mxu0 0
        %2243 = vmatpush.bf16.msra.mxu0 %v2231
        %2244 = vmatmul.bf16.gmra.mxu0 %v2234
        %v2245 = vpop.f32.mrf.mxu0
        %v2246 = vadd.f32 0.0, %v2245
        %v2247 = vpop.f32.mrf.mxu0
        %v2248 = vadd.f32 0.0, %v2247
        %2249 = vdwg.mxu0
        %v2252 = vunpack.c.l.b16 %v2182
        %v2253 = vunpack.c.l.b16 %v2183
        %v2254 = vpack.c.b16 %v2253, %v2252
        %v2257 = vunpack.c.l.b16 %v1748
        %v2258 = vunpack.c.l.b16 %v1749
        %v2259 = vpack.c.b16 %v2258, %v2257
        %v2262 = vsel %vm2001, %v2254, 0
        %2264 = vmatpush.bf16.msra.mxu0 0
        %2265 = vmatpush.bf16.msra.mxu0 0
        %2266 = vmatpush.bf16.msra.mxu0 0
        %2267 = vmatpush.bf16.msra.mxu0 0
        %2268 = vmatpush.bf16.msra.mxu0 0
        %2269 = vmatpush.bf16.msra.mxu0 0
        %2270 = vmatpush.bf16.msra.mxu0 0
        %2271 = vmatpush.bf16.msra.mxu0 %v2259
        %2272 = vmatmul.bf16.gmra.mxu0 %v2262
        %v2273 = vpop.f32.mrf.mxu0
        %v2274 = vadd.f32 0.0, %v2273
        %v2275 = vpop.f32.mrf.mxu0
        %v2276 = vadd.f32 0.0, %v2275
        %2277 = vdwg.mxu0
        %v2280 = vunpack.c.l.b16 %v2184
        %v2281 = vunpack.c.l.b16 %v2185
        %v2282 = vpack.c.b16 %v2281, %v2280
        %v2285 = vunpack.c.l.b16 %v1750
        %v2286 = vunpack.c.l.b16 %v1751
        %v2287 = vpack.c.b16 %v2286, %v2285
        %v2290 = vsel %vm2001, %v2282, 0
        %2292 = vmatpush.bf16.msra.mxu0 0
        %2293 = vmatpush.bf16.msra.mxu0 0
        %2294 = vmatpush.bf16.msra.mxu0 0
        %2295 = vmatpush.bf16.msra.mxu0 0
        %2296 = vmatpush.bf16.msra.mxu0 0
        %2297 = vmatpush.bf16.msra.mxu0 0
        %2298 = vmatpush.bf16.msra.mxu0 0
        %2299 = vmatpush.bf16.msra.mxu0 %v2287
        %2300 = vmatmul.bf16.gmra.mxu0 %v2290
        %v2301 = vpop.f32.mrf.mxu0
        %v2302 = vadd.f32 0.0, %v2301
        %v2303 = vpop.f32.mrf.mxu0
        %v2304 = vadd.f32 0.0, %v2303
        %2305 = vdwg.mxu0
        %v2308 = vunpack.c.l.b16 %v2186
        %v2309 = vunpack.c.l.b16 %v2187
        %v2310 = vpack.c.b16 %v2309, %v2308
        %v2313 = vunpack.c.l.b16 %v1752
        %v2314 = vunpack.c.l.b16 %v1753
        %v2315 = vpack.c.b16 %v2314, %v2313
        %v2318 = vsel %vm2001, %v2310, 0
        %2320 = vmatpush.bf16.msra.mxu0 0
        %2321 = vmatpush.bf16.msra.mxu0 0
        %2322 = vmatpush.bf16.msra.mxu0 0
        %2323 = vmatpush.bf16.msra.mxu0 0
        %2324 = vmatpush.bf16.msra.mxu0 0
        %2325 = vmatpush.bf16.msra.mxu0 0
        %2326 = vmatpush.bf16.msra.mxu0 0
        %2327 = vmatpush.bf16.msra.mxu0 %v2315
        %2328 = vmatmul.bf16.gmra.mxu0 %v2318
        %v2329 = vpop.f32.mrf.mxu0
        %v2330 = vadd.f32 0.0, %v2329
        %v2331 = vpop.f32.mrf.mxu0
        %v2332 = vadd.f32 0.0, %v2331
        %2333 = vdwg.mxu0
        %v2336 = vunpack.c.l.b16 %v2188
        %v2337 = vunpack.c.l.b16 %v2189
        %v2338 = vpack.c.b16 %v2337, %v2336
        %v2341 = vunpack.c.l.b16 %v1754
        %v2342 = vunpack.c.l.b16 %v1755
        %v2343 = vpack.c.b16 %v2342, %v2341
        %v2346 = vsel %vm2001, %v2338, 0
        %2348 = vmatpush.bf16.msra.mxu0 0
        %2349 = vmatpush.bf16.msra.mxu0 0
        %2350 = vmatpush.bf16.msra.mxu0 0
        %2351 = vmatpush.bf16.msra.mxu0 0
        %2352 = vmatpush.bf16.msra.mxu0 0
        %2353 = vmatpush.bf16.msra.mxu0 0
        %2354 = vmatpush.bf16.msra.mxu0 0
        %2355 = vmatpush.bf16.msra.mxu0 %v2343
        %2356 = vmatmul.bf16.gmra.mxu0 %v2346
        %v2357 = vpop.f32.mrf.mxu0
        %v2358 = vadd.f32 0.0, %v2357
        %v2359 = vpop.f32.mrf.mxu0
        %v2360 = vadd.f32 0.0, %v2359
        %2361 = vdwg.mxu0
        %v2364 = vunpack.c.l.b16 %v2190
        %v2365 = vunpack.c.l.b16 %v2191
        %v2366 = vpack.c.b16 %v2365, %v2364
        %v2369 = vunpack.c.l.b16 %v1756
        %v2370 = vunpack.c.l.b16 %v1757
        %v2371 = vpack.c.b16 %v2370, %v2369
        %v2374 = vsel %vm2001, %v2366, 0
        %2376 = vmatpush.bf16.msra.mxu0 0
        %2377 = vmatpush.bf16.msra.mxu0 0
        %2378 = vmatpush.bf16.msra.mxu0 0
        %2379 = vmatpush.bf16.msra.mxu0 0
        %2380 = vmatpush.bf16.msra.mxu0 0
        %2381 = vmatpush.bf16.msra.mxu0 0
        %2382 = vmatpush.bf16.msra.mxu0 0
        %2383 = vmatpush.bf16.msra.mxu0 %v2371
        %2384 = vmatmul.bf16.gmra.mxu0 %v2374
        %v2385 = vpop.f32.mrf.mxu0
        %v2386 = vadd.f32 0.0, %v2385
        %v2387 = vpop.f32.mrf.mxu0
        %v2388 = vadd.f32 0.0, %v2387
        %2389 = vdwg.mxu0
        %v2392 = vunpack.c.l.b16 %v2192
        %v2393 = vunpack.c.l.b16 %v2193
        %v2394 = vpack.c.b16 %v2393, %v2392
        %v2397 = vunpack.c.l.b16 %v1758
        %v2398 = vunpack.c.l.b16 %v1759
        %v2399 = vpack.c.b16 %v2398, %v2397
        %v2402 = vsel %vm2001, %v2394, 0
        %2404 = vmatpush.bf16.msra.mxu0 0
        %2405 = vmatpush.bf16.msra.mxu0 0
        %2406 = vmatpush.bf16.msra.mxu0 0
        %2407 = vmatpush.bf16.msra.mxu0 0
        %2408 = vmatpush.bf16.msra.mxu0 0
        %2409 = vmatpush.bf16.msra.mxu0 0
        %2410 = vmatpush.bf16.msra.mxu0 0
        %2411 = vmatpush.bf16.msra.mxu0 %v2399
        %2412 = vmatmul.bf16.gmra.mxu0 %v2402
        %v2413 = vpop.f32.mrf.mxu0
        %v2414 = vadd.f32 0.0, %v2413
        %v2415 = vpop.f32.mrf.mxu0
        %v2416 = vadd.f32 0.0, %v2415
        %2417 = vdwg.mxu0
        %2418 = vst.msk [vmem:[#allocation2] sm:$0xff] %vm1770, %v2218
        %2419 = vst.msk [vmem:[#allocation2 + $0x8] sm:$0xff] %vm1770, %v2220
        %2420 = vst.msk [vmem:[#allocation2 + $0x10] sm:$0xff] %vm1770, %v2246
        %2421 = vst.msk [vmem:[#allocation2 + $0x18] sm:$0xff] %vm1770, %v2248
        %2422 = vst.msk [vmem:[#allocation2 + $0x20] sm:$0xff] %vm1770, %v2274
        %2423 = vst.msk [vmem:[#allocation2 + $0x28] sm:$0xff] %vm1770, %v2276
        %2424 = vst.msk [vmem:[#allocation2 + $0x30] sm:$0xff] %vm1770, %v2302
        %2425 = vst.msk [vmem:[#allocation2 + $0x38] sm:$0xff] %vm1770, %v2304
        %2426 = vst.msk [vmem:[#allocation2 + $0x40] sm:$0xff] %vm1770, %v2330
        %2427 = vst.msk [vmem:[#allocation2 + $0x48] sm:$0xff] %vm1770, %v2332
        %2428 = vst.msk [vmem:[#allocation2 + $0x50] sm:$0xff] %vm1770, %v2358
        %2429 = vst.msk [vmem:[#allocation2 + $0x58] sm:$0xff] %vm1770, %v2360
        %2430 = vst.msk [vmem:[#allocation2 + $0x60] sm:$0xff] %vm1770, %v2386
        %2431 = vst.msk [vmem:[#allocation2 + $0x68] sm:$0xff] %vm1770, %v2388
        %2432 = vst.msk [vmem:[#allocation2 + $0x70] sm:$0xff] %vm1770, %v2414
        %2433 = vst.msk [vmem:[#allocation2 + $0x78] sm:$0xff] %vm1770, %v2416
        %2434 = vrot.lane.b32.xlu0 %v1764, 120
        %v2435 = vpop.permute.xlu0 %2434
        %2436 = vrot.lane.b32.xlu0 %v1769, 120
        %v2437 = vpop.permute.xlu0 %2436
        %v2439 = vsel %vm1770, %v2435, 0
        %v2442 = vsel %vm1770, %v2437, 0
        %2444 = vmatpush.bf16.xpose.msra.mxu0 0
        %2445 = vmatpush.bf16.xpose.msra.mxu0 0
        %2446 = vmatpush.bf16.xpose.msra.mxu0 0
        %2447 = vmatpush.bf16.xpose.msra.mxu0 0
        %2448 = vmatpush.bf16.xpose.msra.mxu0 0
        %2449 = vmatpush.bf16.xpose.msra.mxu0 0
        %2450 = vmatpush.bf16.xpose.msra.mxu0 0
        %2451 = vmatpush.bf16.xpose.msra.mxu0 %v2442
        %2452 = vmatmul.bf16.gmra.mxu0 %v2439
        %v2453 = vpop.f32.mrf.mxu0
        %v2454 = vadd.f32 0.0, %v2453
        %v2455 = vpop.f32.mrf.mxu0
        %v2456 = vadd.f32 0.0, %v2455
        %2457 = vdwg.mxu0
        %2458 = vrot.lane.b32.xlu0 %v1795, 120
        %v2459 = vpop.permute.xlu0 %2458
        %2460 = vrot.lane.b32.xlu0 %v1800, 120
        %v2461 = vpop.permute.xlu0 %2460
        %v2463 = vsel %vm1770, %v2459, 0
        %v2466 = vsel %vm1770, %v2461, 0
        %2468 = vmatpush.bf16.xpose.msra.mxu0 0
        %2469 = vmatpush.bf16.xpose.msra.mxu0 0
        %2470 = vmatpush.bf16.xpose.msra.mxu0 0
        %2471 = vmatpush.bf16.xpose.msra.mxu0 0
        %2472 = vmatpush.bf16.xpose.msra.mxu0 0
        %2473 = vmatpush.bf16.xpose.msra.mxu0 0
        %2474 = vmatpush.bf16.xpose.msra.mxu0 0
        %2475 = vmatpush.bf16.xpose.msra.mxu0 %v2466
        %2476 = vmatmul.bf16.gmra.mxu0 %v2463
        %v2477 = vpop.f32.mrf.mxu0
        %v2478 = vadd.f32 0.0, %v2477
        %v2479 = vpop.f32.mrf.mxu0
        %v2480 = vadd.f32 0.0, %v2479
        %2481 = vdwg.mxu0
        %2482 = vrot.lane.b32.xlu0 %v1825, 120
        %v2483 = vpop.permute.xlu0 %2482
        %2484 = vrot.lane.b32.xlu0 %v1830, 120
        %v2485 = vpop.permute.xlu0 %2484
        %v2487 = vsel %vm1770, %v2483, 0
        %v2490 = vsel %vm1770, %v2485, 0
        %2492 = vmatpush.bf16.xpose.msra.mxu0 0
        %2493 = vmatpush.bf16.xpose.msra.mxu0 0
        %2494 = vmatpush.bf16.xpose.msra.mxu0 0
        %2495 = vmatpush.bf16.xpose.msra.mxu0 0
        %2496 = vmatpush.bf16.xpose.msra.mxu0 0
        %2497 = vmatpush.bf16.xpose.msra.mxu0 0
        %2498 = vmatpush.bf16.xpose.msra.mxu0 0
        %2499 = vmatpush.bf16.xpose.msra.mxu0 %v2490
        %2500 = vmatmul.bf16.gmra.mxu0 %v2487
        %v2501 = vpop.f32.mrf.mxu0
        %v2502 = vadd.f32 0.0, %v2501
        %v2503 = vpop.f32.mrf.mxu0
        %v2504 = vadd.f32 0.0, %v2503
        %2505 = vdwg.mxu0
        %2506 = vrot.lane.b32.xlu0 %v1855, 120
        %v2507 = vpop.permute.xlu0 %2506
        %2508 = vrot.lane.b32.xlu0 %v1860, 120
        %v2509 = vpop.permute.xlu0 %2508
        %v2511 = vsel %vm1770, %v2507, 0
        %v2514 = vsel %vm1770, %v2509, 0
        %2516 = vmatpush.bf16.xpose.msra.mxu0 0
        %2517 = vmatpush.bf16.xpose.msra.mxu0 0
        %2518 = vmatpush.bf16.xpose.msra.mxu0 0
        %2519 = vmatpush.bf16.xpose.msra.mxu0 0
        %2520 = vmatpush.bf16.xpose.msra.mxu0 0
        %2521 = vmatpush.bf16.xpose.msra.mxu0 0
        %2522 = vmatpush.bf16.xpose.msra.mxu0 0
        %2523 = vmatpush.bf16.xpose.msra.mxu0 %v2514
        %2524 = vmatmul.bf16.gmra.mxu0 %v2511
        %v2525 = vpop.f32.mrf.mxu0
        %v2526 = vadd.f32 0.0, %v2525
        %v2527 = vpop.f32.mrf.mxu0
        %v2528 = vadd.f32 0.0, %v2527
        %2529 = vdwg.mxu0
        %2530 = vrot.lane.b32.xlu0 %v1885, 120
        %v2531 = vpop.permute.xlu0 %2530
        %2532 = vrot.lane.b32.xlu0 %v1890, 120
        %v2533 = vpop.permute.xlu0 %2532
        %v2535 = vsel %vm1770, %v2531, 0
        %v2538 = vsel %vm1770, %v2533, 0
        %2540 = vmatpush.bf16.xpose.msra.mxu0 0
        %2541 = vmatpush.bf16.xpose.msra.mxu0 0
        %2542 = vmatpush.bf16.xpose.msra.mxu0 0
        %2543 = vmatpush.bf16.xpose.msra.mxu0 0
        %2544 = vmatpush.bf16.xpose.msra.mxu0 0
        %2545 = vmatpush.bf16.xpose.msra.mxu0 0
        %2546 = vmatpush.bf16.xpose.msra.mxu0 0
        %2547 = vmatpush.bf16.xpose.msra.mxu0 %v2538
        %2548 = vmatmul.bf16.gmra.mxu0 %v2535
        %v2549 = vpop.f32.mrf.mxu0
        %v2550 = vadd.f32 0.0, %v2549
        %v2551 = vpop.f32.mrf.mxu0
        %v2552 = vadd.f32 0.0, %v2551
        %2553 = vdwg.mxu0
        %2554 = vrot.lane.b32.xlu0 %v1915, 120
        %v2555 = vpop.permute.xlu0 %2554
        %2556 = vrot.lane.b32.xlu0 %v1920, 120
        %v2557 = vpop.permute.xlu0 %2556
        %v2559 = vsel %vm1770, %v2555, 0
        %v2562 = vsel %vm1770, %v2557, 0
        %2564 = vmatpush.bf16.xpose.msra.mxu0 0
        %2565 = vmatpush.bf16.xpose.msra.mxu0 0
        %2566 = vmatpush.bf16.xpose.msra.mxu0 0
        %2567 = vmatpush.bf16.xpose.msra.mxu0 0
        %2568 = vmatpush.bf16.xpose.msra.mxu0 0
        %2569 = vmatpush.bf16.xpose.msra.mxu0 0
        %2570 = vmatpush.bf16.xpose.msra.mxu0 0
        %2571 = vmatpush.bf16.xpose.msra.mxu0 %v2562
        %2572 = vmatmul.bf16.gmra.mxu0 %v2559
        %v2573 = vpop.f32.mrf.mxu0
        %v2574 = vadd.f32 0.0, %v2573
        %v2575 = vpop.f32.mrf.mxu0
        %v2576 = vadd.f32 0.0, %v2575
        %2577 = vdwg.mxu0
        %2578 = vrot.lane.b32.xlu0 %v1945, 120
        %v2579 = vpop.permute.xlu0 %2578
        %2580 = vrot.lane.b32.xlu0 %v1950, 120
        %v2581 = vpop.permute.xlu0 %2580
        %v2583 = vsel %vm1770, %v2579, 0
        %v2586 = vsel %vm1770, %v2581, 0
        %2588 = vmatpush.bf16.xpose.msra.mxu0 0
        %2589 = vmatpush.bf16.xpose.msra.mxu0 0
        %2590 = vmatpush.bf16.xpose.msra.mxu0 0
        %2591 = vmatpush.bf16.xpose.msra.mxu0 0
        %2592 = vmatpush.bf16.xpose.msra.mxu0 0
        %2593 = vmatpush.bf16.xpose.msra.mxu0 0
        %2594 = vmatpush.bf16.xpose.msra.mxu0 0
        %2595 = vmatpush.bf16.xpose.msra.mxu0 %v2586
        %2596 = vmatmul.bf16.gmra.mxu0 %v2583
        %v2597 = vpop.f32.mrf.mxu0
        %v2598 = vadd.f32 0.0, %v2597
        %v2599 = vpop.f32.mrf.mxu0
        %v2600 = vadd.f32 0.0, %v2599
        %2601 = vdwg.mxu0
        %2602 = vrot.lane.b32.xlu0 %v1975, 120
        %v2603 = vpop.permute.xlu0 %2602
        %2604 = vrot.lane.b32.xlu0 %v1980, 120
        %v2605 = vpop.permute.xlu0 %2604
        %v2607 = vsel %vm1770, %v2603, 0
        %v2610 = vsel %vm1770, %v2605, 0
        %2612 = vmatpush.bf16.xpose.msra.mxu0 0
        %2613 = vmatpush.bf16.xpose.msra.mxu0 0
        %2614 = vmatpush.bf16.xpose.msra.mxu0 0
        %2615 = vmatpush.bf16.xpose.msra.mxu0 0
        %2616 = vmatpush.bf16.xpose.msra.mxu0 0
        %2617 = vmatpush.bf16.xpose.msra.mxu0 0
        %2618 = vmatpush.bf16.xpose.msra.mxu0 0
        %2619 = vmatpush.bf16.xpose.msra.mxu0 %v2610
        %2620 = vmatmul.bf16.gmra.mxu0 %v2607
        %v2621 = vpop.f32.mrf.mxu0
        %v2622 = vadd.f32 0.0, %v2621
        %v2623 = vpop.f32.mrf.mxu0
        %v2624 = vadd.f32 0.0, %v2623
        %2625 = vdwg.mxu0
        %v2626 = vsel %vm2001, %v2454, -inf
        %2627 = vmax.xlane.f32.xlu0 %v2626
        %v2628 = vpop.xlane.xlu0 %2627
        %v2629 = vsel %vm2001, %v2456, -inf
        %2630 = vmax.xlane.f32.xlu0 %v2629
        %v2631 = vpop.xlane.xlu0 %2630
        %v2632 = vsel %vm2001, %v2478, -inf
        %2633 = vmax.xlane.f32.xlu0 %v2632
        %v2634 = vpop.xlane.xlu0 %2633
        %v2635 = vsel %vm2001, %v2480, -inf
        %2636 = vmax.xlane.f32.xlu0 %v2635
        %v2637 = vpop.xlane.xlu0 %2636
        %v2638 = vsel %vm2001, %v2502, -inf
        %2639 = vmax.xlane.f32.xlu0 %v2638
        %v2640 = vpop.xlane.xlu0 %2639
        %v2641 = vsel %vm2001, %v2504, -inf
        %2642 = vmax.xlane.f32.xlu0 %v2641
        %v2643 = vpop.xlane.xlu0 %2642
        %v2644 = vsel %vm2001, %v2526, -inf
        %2645 = vmax.xlane.f32.xlu0 %v2644
        %v2646 = vpop.xlane.xlu0 %2645
        %v2647 = vsel %vm2001, %v2528, -inf
        %2648 = vmax.xlane.f32.xlu0 %v2647
        %v2649 = vpop.xlane.xlu0 %2648
        %v2650 = vsel %vm2001, %v2550, -inf
        %2651 = vmax.xlane.f32.xlu0 %v2650
        %v2652 = vpop.xlane.xlu0 %2651
        %v2653 = vsel %vm2001, %v2552, -inf
        %2654 = vmax.xlane.f32.xlu0 %v2653
        %v2655 = vpop.xlane.xlu0 %2654
        %v2656 = vsel %vm2001, %v2574, -inf
        %2657 = vmax.xlane.f32.xlu0 %v2656
        %v2658 = vpop.xlane.xlu0 %2657
        %v2659 = vsel %vm2001, %v2576, -inf
        %2660 = vmax.xlane.f32.xlu0 %v2659
        %v2661 = vpop.xlane.xlu0 %2660
        %v2662 = vsel %vm2001, %v2598, -inf
        %2663 = vmax.xlane.f32.xlu0 %v2662
        %v2664 = vpop.xlane.xlu0 %2663
        %v2665 = vsel %vm2001, %v2600, -inf
        %2666 = vmax.xlane.f32.xlu0 %v2665
        %v2667 = vpop.xlane.xlu0 %2666
        %v2668 = vsel %vm2001, %v2622, -inf
        %2669 = vmax.xlane.f32.xlu0 %v2668
        %v2670 = vpop.xlane.xlu0 %2669
        %v2671 = vsel %vm2001, %v2624, -inf
        %2672 = vmax.xlane.f32.xlu0 %v2671
        %v2673 = vpop.xlane.xlu0 %2672
        %v2674 = vsub.f32 %v2454, %v2628
        %v2675 = vsub.f32 %v2456, %v2631
        %v2676 = vsub.f32 %v2478, %v2634
        %v2677 = vsub.f32 %v2480, %v2637
        %v2678 = vsub.f32 %v2502, %v2640
        %v2679 = vsub.f32 %v2504, %v2643
        %v2680 = vsub.f32 %v2526, %v2646
        %v2681 = vsub.f32 %v2528, %v2649
        %v2682 = vsub.f32 %v2550, %v2652
        %v2683 = vsub.f32 %v2552, %v2655
        %v2684 = vsub.f32 %v2574, %v2658
        %v2685 = vsub.f32 %v2576, %v2661
        %v2686 = vsub.f32 %v2598, %v2664
        %v2687 = vsub.f32 %v2600, %v2667
        %v2688 = vsub.f32 %v2622, %v2670
        %v2689 = vsub.f32 %v2624, %v2673
        %v2690 = vmul.f32 %v2674, 1.442695
        %v2691 = vpow.pop %v2690
        %v2692 = vmul.f32 %v2675, 1.442695
        %v2693 = vpow.pop %v2692
        %v2694 = vmul.f32 %v2676, 1.442695
        %v2695 = vpow.pop %v2694
        %v2696 = vmul.f32 %v2677, 1.442695
        %v2697 = vpow.pop %v2696
        %v2698 = vmul.f32 %v2678, 1.442695
        %v2699 = vpow.pop %v2698
        %v2700 = vmul.f32 %v2679, 1.442695
        %v2701 = vpow.pop %v2700
        %v2702 = vmul.f32 %v2680, 1.442695
        %v2703 = vpow.pop %v2702
        %v2704 = vmul.f32 %v2681, 1.442695
        %v2705 = vpow.pop %v2704
        %v2706 = vmul.f32 %v2682, 1.442695
        %v2707 = vpow.pop %v2706
        %v2708 = vmul.f32 %v2683, 1.442695
        %v2709 = vpow.pop %v2708
        %v2710 = vmul.f32 %v2684, 1.442695
        %v2711 = vpow.pop %v2710
        %v2712 = vmul.f32 %v2685, 1.442695
        %v2713 = vpow.pop %v2712
        %v2714 = vmul.f32 %v2686, 1.442695
        %v2715 = vpow.pop %v2714
        %v2716 = vmul.f32 %v2687, 1.442695
        %v2717 = vpow.pop %v2716
        %v2718 = vmul.f32 %v2688, 1.442695
        %v2719 = vpow.pop %v2718
        %v2720 = vmul.f32 %v2689, 1.442695
        %v2721 = vpow.pop %v2720
        %v2722 = vsel %vm2001, %v2691, 0.0
        %2723 = vadd.xlane.f32.xlu0 %v2722
        %v2724 = vpop.xlane.xlu0 %2723
        %v2725 = vsel %vm2001, %v2693, 0.0
        %2726 = vadd.xlane.f32.xlu0 %v2725
        %v2727 = vpop.xlane.xlu0 %2726
        %v2728 = vsel %vm2001, %v2695, 0.0
        %2729 = vadd.xlane.f32.xlu0 %v2728
        %v2730 = vpop.xlane.xlu0 %2729
        %v2731 = vsel %vm2001, %v2697, 0.0
        %2732 = vadd.xlane.f32.xlu0 %v2731
        %v2733 = vpop.xlane.xlu0 %2732
        %v2734 = vsel %vm2001, %v2699, 0.0
        %2735 = vadd.xlane.f32.xlu0 %v2734
        %v2736 = vpop.xlane.xlu0 %2735
        %v2737 = vsel %vm2001, %v2701, 0.0
        %2738 = vadd.xlane.f32.xlu0 %v2737
        %v2739 = vpop.xlane.xlu0 %2738
        %v2740 = vsel %vm2001, %v2703, 0.0
        %2741 = vadd.xlane.f32.xlu0 %v2740
        %v2742 = vpop.xlane.xlu0 %2741
        %v2743 = vsel %vm2001, %v2705, 0.0
        %2744 = vadd.xlane.f32.xlu0 %v2743
        %v2745 = vpop.xlane.xlu0 %2744
        %v2746 = vsel %vm2001, %v2707, 0.0
        %2747 = vadd.xlane.f32.xlu0 %v2746
        %v2748 = vpop.xlane.xlu0 %2747
        %v2749 = vsel %vm2001, %v2709, 0.0
        %2750 = vadd.xlane.f32.xlu0 %v2749
        %v2751 = vpop.xlane.xlu0 %2750
        %v2752 = vsel %vm2001, %v2711, 0.0
        %2753 = vadd.xlane.f32.xlu0 %v2752
        %v2754 = vpop.xlane.xlu0 %2753
        %v2755 = vsel %vm2001, %v2713, 0.0
        %2756 = vadd.xlane.f32.xlu0 %v2755
        %v2757 = vpop.xlane.xlu0 %2756
        %v2758 = vsel %vm2001, %v2715, 0.0
        %2759 = vadd.xlane.f32.xlu0 %v2758
        %v2760 = vpop.xlane.xlu0 %2759
        %v2761 = vsel %vm2001, %v2717, 0.0
        %2762 = vadd.xlane.f32.xlu0 %v2761
        %v2763 = vpop.xlane.xlu0 %2762
        %v2764 = vsel %vm2001, %v2719, 0.0
        %2765 = vadd.xlane.f32.xlu0 %v2764
        %v2766 = vpop.xlane.xlu0 %2765
        %v2767 = vsel %vm2001, %v2721, 0.0
        %2768 = vadd.xlane.f32.xlu0 %v2767
        %v2769 = vpop.xlane.xlu0 %2768
        %v2770 = vrcp.pop %v2724
        %v2771 = vrcp.pop %v2727
        %v2772 = vrcp.pop %v2730
        %v2773 = vrcp.pop %v2733
        %v2774 = vrcp.pop %v2736
        %v2775 = vrcp.pop %v2739
        %v2776 = vrcp.pop %v2742
        %v2777 = vrcp.pop %v2745
        %v2778 = vrcp.pop %v2748
        %v2779 = vrcp.pop %v2751
        %v2780 = vrcp.pop %v2754
        %v2781 = vrcp.pop %v2757
        %v2782 = vrcp.pop %v2760
        %v2783 = vrcp.pop %v2763
        %v2784 = vrcp.pop %v2766
        %v2785 = vrcp.pop %v2769
        %v2786 = vmul.f32 %v2691, %v2770
        %v2787 = vmul.f32 %v2693, %v2771
        %v2788 = vmul.f32 %v2695, %v2772
        %v2789 = vmul.f32 %v2697, %v2773
        %v2790 = vmul.f32 %v2699, %v2774
        %v2791 = vmul.f32 %v2701, %v2775
        %v2792 = vmul.f32 %v2703, %v2776
        %v2793 = vmul.f32 %v2705, %v2777
        %v2794 = vmul.f32 %v2707, %v2778
        %v2795 = vmul.f32 %v2709, %v2779
        %v2796 = vmul.f32 %v2711, %v2780
        %v2797 = vmul.f32 %v2713, %v2781
        %v2798 = vmul.f32 %v2715, %v2782
        %v2799 = vmul.f32 %v2717, %v2783
        %v2800 = vmul.f32 %v2719, %v2784
        %v2801 = vmul.f32 %v2721, %v2785
        %v2802 = vpack.c.bf16 %v2786, %v2786
        %v2803 = vpack.c.bf16 %v2787, %v2787
        %v2804 = vpack.c.bf16 %v2788, %v2788
        %v2805 = vpack.c.bf16 %v2789, %v2789
        %v2806 = vpack.c.bf16 %v2790, %v2790
        %v2807 = vpack.c.bf16 %v2791, %v2791
        %v2808 = vpack.c.bf16 %v2792, %v2792
        %v2809 = vpack.c.bf16 %v2793, %v2793
        %v2810 = vpack.c.bf16 %v2794, %v2794
        %v2811 = vpack.c.bf16 %v2795, %v2795
        %v2812 = vpack.c.bf16 %v2796, %v2796
        %v2813 = vpack.c.bf16 %v2797, %v2797
        %v2814 = vpack.c.bf16 %v2798, %v2798
        %v2815 = vpack.c.bf16 %v2799, %v2799
        %v2816 = vpack.c.bf16 %v2800, %v2800
        %v2817 = vpack.c.bf16 %v2801, %v2801
        %v2820 = vunpack.c.l.b16 %v2802
        %v2821 = vunpack.c.l.b16 %v2803
        %v2822 = vpack.c.b16 %v2821, %v2820
        %2823 = vrot.lane.b32.xlu0 %v2203, 120
        %v2824 = vpop.permute.xlu0 %2823
        %v2827 = vsel %vm2001, %v2822, 0
        %2829 = vmatpush.bf16.msra.mxu0 0
        %2830 = vmatpush.bf16.msra.mxu0 0
        %2831 = vmatpush.bf16.msra.mxu0 0
        %2832 = vmatpush.bf16.msra.mxu0 0
        %2833 = vmatpush.bf16.msra.mxu0 0
        %2834 = vmatpush.bf16.msra.mxu0 0
        %2835 = vmatpush.bf16.msra.mxu0 0
        %2836 = vmatpush.bf16.msra.mxu0 %v2824
        %2837 = vmatmul.bf16.gmra.mxu0 %v2827
        %v2838 = vpop.f32.mrf.mxu0
        %v2839 = vadd.f32 0.0, %v2838
        %v2840 = vpop.f32.mrf.mxu0
        %v2841 = vadd.f32 0.0, %v2840
        %2842 = vdwg.mxu0
        %v2845 = vunpack.c.l.b16 %v2804
        %v2846 = vunpack.c.l.b16 %v2805
        %v2847 = vpack.c.b16 %v2846, %v2845
        %2848 = vrot.lane.b32.xlu0 %v2231, 120
        %v2849 = vpop.permute.xlu0 %2848
        %v2852 = vsel %vm2001, %v2847, 0
        %2854 = vmatpush.bf16.msra.mxu0 0
        %2855 = vmatpush.bf16.msra.mxu0 0
        %2856 = vmatpush.bf16.msra.mxu0 0
        %2857 = vmatpush.bf16.msra.mxu0 0
        %2858 = vmatpush.bf16.msra.mxu0 0
        %2859 = vmatpush.bf16.msra.mxu0 0
        %2860 = vmatpush.bf16.msra.mxu0 0
        %2861 = vmatpush.bf16.msra.mxu0 %v2849
        %2862 = vmatmul.bf16.gmra.mxu0 %v2852
        %v2863 = vpop.f32.mrf.mxu0
        %v2864 = vadd.f32 0.0, %v2863
        %v2865 = vpop.f32.mrf.mxu0
        %v2866 = vadd.f32 0.0, %v2865
        %2867 = vdwg.mxu0
        %v2870 = vunpack.c.l.b16 %v2806
        %v2871 = vunpack.c.l.b16 %v2807
        %v2872 = vpack.c.b16 %v2871, %v2870
        %2873 = vrot.lane.b32.xlu0 %v2259, 120
        %v2874 = vpop.permute.xlu0 %2873
        %v2877 = vsel %vm2001, %v2872, 0
        %2879 = vmatpush.bf16.msra.mxu0 0
        %2880 = vmatpush.bf16.msra.mxu0 0
        %2881 = vmatpush.bf16.msra.mxu0 0
        %2882 = vmatpush.bf16.msra.mxu0 0
        %2883 = vmatpush.bf16.msra.mxu0 0
        %2884 = vmatpush.bf16.msra.mxu0 0
        %2885 = vmatpush.bf16.msra.mxu0 0
        %2886 = vmatpush.bf16.msra.mxu0 %v2874
        %2887 = vmatmul.bf16.gmra.mxu0 %v2877
        %v2888 = vpop.f32.mrf.mxu0
        %v2889 = vadd.f32 0.0, %v2888
        %v2890 = vpop.f32.mrf.mxu0
        %v2891 = vadd.f32 0.0, %v2890
        %2892 = vdwg.mxu0
        %v2895 = vunpack.c.l.b16 %v2808
        %v2896 = vunpack.c.l.b16 %v2809
        %v2897 = vpack.c.b16 %v2896, %v2895
        %2898 = vrot.lane.b32.xlu0 %v2287, 120
        %v2899 = vpop.permute.xlu0 %2898
        %v2902 = vsel %vm2001, %v2897, 0
        %2904 = vmatpush.bf16.msra.mxu0 0
        %2905 = vmatpush.bf16.msra.mxu0 0
        %2906 = vmatpush.bf16.msra.mxu0 0
        %2907 = vmatpush.bf16.msra.mxu0 0
        %2908 = vmatpush.bf16.msra.mxu0 0
        %2909 = vmatpush.bf16.msra.mxu0 0
        %2910 = vmatpush.bf16.msra.mxu0 0
        %2911 = vmatpush.bf16.msra.mxu0 %v2899
        %2912 = vmatmul.bf16.gmra.mxu0 %v2902
        %v2913 = vpop.f32.mrf.mxu0
        %v2914 = vadd.f32 0.0, %v2913
        %v2915 = vpop.f32.mrf.mxu0
        %v2916 = vadd.f32 0.0, %v2915
        %2917 = vdwg.mxu0
        %v2920 = vunpack.c.l.b16 %v2810
        %v2921 = vunpack.c.l.b16 %v2811
        %v2922 = vpack.c.b16 %v2921, %v2920
        %2923 = vrot.lane.b32.xlu0 %v2315, 120
        %v2924 = vpop.permute.xlu0 %2923
        %v2927 = vsel %vm2001, %v2922, 0
        %2929 = vmatpush.bf16.msra.mxu0 0
        %2930 = vmatpush.bf16.msra.mxu0 0
        %2931 = vmatpush.bf16.msra.mxu0 0
        %2932 = vmatpush.bf16.msra.mxu0 0
        %2933 = vmatpush.bf16.msra.mxu0 0
        %2934 = vmatpush.bf16.msra.mxu0 0
        %2935 = vmatpush.bf16.msra.mxu0 0
        %2936 = vmatpush.bf16.msra.mxu0 %v2924
        %2937 = vmatmul.bf16.gmra.mxu0 %v2927
        %v2938 = vpop.f32.mrf.mxu0
        %v2939 = vadd.f32 0.0, %v2938
        %v2940 = vpop.f32.mrf.mxu0
        %v2941 = vadd.f32 0.0, %v2940
        %2942 = vdwg.mxu0
        %v2945 = vunpack.c.l.b16 %v2812
        %v2946 = vunpack.c.l.b16 %v2813
        %v2947 = vpack.c.b16 %v2946, %v2945
        %2948 = vrot.lane.b32.xlu0 %v2343, 120
        %v2949 = vpop.permute.xlu0 %2948
        %v2952 = vsel %vm2001, %v2947, 0
        %2954 = vmatpush.bf16.msra.mxu0 0
        %2955 = vmatpush.bf16.msra.mxu0 0
        %2956 = vmatpush.bf16.msra.mxu0 0
        %2957 = vmatpush.bf16.msra.mxu0 0
        %2958 = vmatpush.bf16.msra.mxu0 0
        %2959 = vmatpush.bf16.msra.mxu0 0
        %2960 = vmatpush.bf16.msra.mxu0 0
        %2961 = vmatpush.bf16.msra.mxu0 %v2949
        %2962 = vmatmul.bf16.gmra.mxu0 %v2952
        %v2963 = vpop.f32.mrf.mxu0
        %v2964 = vadd.f32 0.0, %v2963
        %v2965 = vpop.f32.mrf.mxu0
        %v2966 = vadd.f32 0.0, %v2965
        %2967 = vdwg.mxu0
        %v2970 = vunpack.c.l.b16 %v2814
        %v2971 = vunpack.c.l.b16 %v2815
        %v2972 = vpack.c.b16 %v2971, %v2970
        %2973 = vrot.lane.b32.xlu0 %v2371, 120
        %v2974 = vpop.permute.xlu0 %2973
        %v2977 = vsel %vm2001, %v2972, 0
        %2979 = vmatpush.bf16.msra.mxu0 0
        %2980 = vmatpush.bf16.msra.mxu0 0
        %2981 = vmatpush.bf16.msra.mxu0 0
        %2982 = vmatpush.bf16.msra.mxu0 0
        %2983 = vmatpush.bf16.msra.mxu0 0
        %2984 = vmatpush.bf16.msra.mxu0 0
        %2985 = vmatpush.bf16.msra.mxu0 0
        %2986 = vmatpush.bf16.msra.mxu0 %v2974
        %2987 = vmatmul.bf16.gmra.mxu0 %v2977
        %v2988 = vpop.f32.mrf.mxu0
        %v2989 = vadd.f32 0.0, %v2988
        %v2990 = vpop.f32.mrf.mxu0
        %v2991 = vadd.f32 0.0, %v2990
        %2992 = vdwg.mxu0
        %v2995 = vunpack.c.l.b16 %v2816
        %v2996 = vunpack.c.l.b16 %v2817
        %v2997 = vpack.c.b16 %v2996, %v2995
        %2998 = vrot.lane.b32.xlu0 %v2399, 120
        %v2999 = vpop.permute.xlu0 %2998
        %v3002 = vsel %vm2001, %v2997, 0
        %3004 = vmatpush.bf16.msra.mxu0 0
        %3005 = vmatpush.bf16.msra.mxu0 0
        %3006 = vmatpush.bf16.msra.mxu0 0
        %3007 = vmatpush.bf16.msra.mxu0 0
        %3008 = vmatpush.bf16.msra.mxu0 0
        %3009 = vmatpush.bf16.msra.mxu0 0
        %3010 = vmatpush.bf16.msra.mxu0 0
        %3011 = vmatpush.bf16.msra.mxu0 %v2999
        %3012 = vmatmul.bf16.gmra.mxu0 %v3002
        %v3013 = vpop.f32.mrf.mxu0
        %v3014 = vadd.f32 0.0, %v3013
        %v3015 = vpop.f32.mrf.mxu0
        %v3016 = vadd.f32 0.0, %v3015
        %3017 = vdwg.mxu0
        %3034 = vrot.lane.b32.xlu0 %v2839, 8
        %v3035 = vpop.permute.xlu0 %3034
        %3036 = vrot.lane.b32.xlu0 %v2841, 8
        %v3037 = vpop.permute.xlu0 %3036
        %3038 = vrot.lane.b32.xlu0 %v2864, 8
        %v3039 = vpop.permute.xlu0 %3038
        %3040 = vrot.lane.b32.xlu0 %v2866, 8
        %v3041 = vpop.permute.xlu0 %3040
        %3042 = vrot.lane.b32.xlu0 %v2889, 8
        %v3043 = vpop.permute.xlu0 %3042
        %3044 = vrot.lane.b32.xlu0 %v2891, 8
        %v3045 = vpop.permute.xlu0 %3044
        %3046 = vrot.lane.b32.xlu0 %v2914, 8
        %v3047 = vpop.permute.xlu0 %3046
        %3048 = vrot.lane.b32.xlu0 %v2916, 8
        %v3049 = vpop.permute.xlu0 %3048
        %3050 = vrot.lane.b32.xlu0 %v2939, 8
        %v3051 = vpop.permute.xlu0 %3050
        %3052 = vrot.lane.b32.xlu0 %v2941, 8
        %v3053 = vpop.permute.xlu0 %3052
        %3054 = vrot.lane.b32.xlu0 %v2964, 8
        %v3055 = vpop.permute.xlu0 %3054
        %3056 = vrot.lane.b32.xlu0 %v2966, 8
        %v3057 = vpop.permute.xlu0 %3056
        %3058 = vrot.lane.b32.xlu0 %v2989, 8
        %v3059 = vpop.permute.xlu0 %3058
        %3060 = vrot.lane.b32.xlu0 %v2991, 8
        %v3061 = vpop.permute.xlu0 %3060
        %3062 = vrot.lane.b32.xlu0 %v3014, 8
        %v3063 = vpop.permute.xlu0 %3062
        %3064 = vrot.lane.b32.xlu0 %v3016, 8
        %v3065 = vpop.permute.xlu0 %3064
        %vm3082 = vcmask 130112
        %3083 = vst.msk [vmem:[#allocation2] sm:$0xff] %vm3082, %v3035
        %3084 = vst.msk [vmem:[#allocation2 + $0x8] sm:$0xff] %vm3082, %v3037
        %3085 = vst.msk [vmem:[#allocation2 + $0x10] sm:$0xff] %vm3082, %v3039
        %3086 = vst.msk [vmem:[#allocation2 + $0x18] sm:$0xff] %vm3082, %v3041
        %3087 = vst.msk [vmem:[#allocation2 + $0x20] sm:$0xff] %vm3082, %v3043
        %3088 = vst.msk [vmem:[#allocation2 + $0x28] sm:$0xff] %vm3082, %v3045
        %3089 = vst.msk [vmem:[#allocation2 + $0x30] sm:$0xff] %vm3082, %v3047
        %3090 = vst.msk [vmem:[#allocation2 + $0x38] sm:$0xff] %vm3082, %v3049
        %3091 = vst.msk [vmem:[#allocation2 + $0x40] sm:$0xff] %vm3082, %v3051
        %3092 = vst.msk [vmem:[#allocation2 + $0x48] sm:$0xff] %vm3082, %v3053
        %3093 = vst.msk [vmem:[#allocation2 + $0x50] sm:$0xff] %vm3082, %v3055
        %3094 = vst.msk [vmem:[#allocation2 + $0x58] sm:$0xff] %vm3082, %v3057
        %3095 = vst.msk [vmem:[#allocation2 + $0x60] sm:$0xff] %vm3082, %v3059
        %3096 = vst.msk [vmem:[#allocation2 + $0x68] sm:$0xff] %vm3082, %v3061
        %3097 = vst.msk [vmem:[#allocation2 + $0x70] sm:$0xff] %vm3082, %v3063
        %3098 = vst.msk [vmem:[#allocation2 + $0x78] sm:$0xff] %vm3082, %v3065
        %3099 = vrot.lane.b32.xlu0 %v1764, 112
        %v3100 = vpop.permute.xlu0 %3099
        %3101 = vrot.lane.b32.xlu0 %v1769, 112
        %v3102 = vpop.permute.xlu0 %3101
        %v3104 = vsel %vm1770, %v3100, 0
        %v3107 = vsel %vm1770, %v3102, 0
        %3109 = vmatpush.bf16.xpose.msra.mxu0 0
        %3110 = vmatpush.bf16.xpose.msra.mxu0 0
        %3111 = vmatpush.bf16.xpose.msra.mxu0 0
        %3112 = vmatpush.bf16.xpose.msra.mxu0 0
        %3113 = vmatpush.bf16.xpose.msra.mxu0 0
        %3114 = vmatpush.bf16.xpose.msra.mxu0 0
        %3115 = vmatpush.bf16.xpose.msra.mxu0 0
        %3116 = vmatpush.bf16.xpose.msra.mxu0 %v3107
        %3117 = vmatmul.bf16.gmra.mxu0 %v3104
        %v3118 = vpop.f32.mrf.mxu0
        %v3119 = vadd.f32 0.0, %v3118
        %v3120 = vpop.f32.mrf.mxu0
        %v3121 = vadd.f32 0.0, %v3120
        %3122 = vdwg.mxu0
        %3123 = vrot.lane.b32.xlu0 %v1795, 112
        %v3124 = vpop.permute.xlu0 %3123
        %3125 = vrot.lane.b32.xlu0 %v1800, 112
        %v3126 = vpop.permute.xlu0 %3125
        %v3128 = vsel %vm1770, %v3124, 0
        %v3131 = vsel %vm1770, %v3126, 0
        %3133 = vmatpush.bf16.xpose.msra.mxu0 0
        %3134 = vmatpush.bf16.xpose.msra.mxu0 0
        %3135 = vmatpush.bf16.xpose.msra.mxu0 0
        %3136 = vmatpush.bf16.xpose.msra.mxu0 0
        %3137 = vmatpush.bf16.xpose.msra.mxu0 0
        %3138 = vmatpush.bf16.xpose.msra.mxu0 0
        %3139 = vmatpush.bf16.xpose.msra.mxu0 0
        %3140 = vmatpush.bf16.xpose.msra.mxu0 %v3131
        %3141 = vmatmul.bf16.gmra.mxu0 %v3128
        %v3142 = vpop.f32.mrf.mxu0
        %v3143 = vadd.f32 0.0, %v3142
        %v3144 = vpop.f32.mrf.mxu0
        %v3145 = vadd.f32 0.0, %v3144
        %3146 = vdwg.mxu0
        %3147 = vrot.lane.b32.xlu0 %v1825, 112
        %v3148 = vpop.permute.xlu0 %3147
        %3149 = vrot.lane.b32.xlu0 %v1830, 112
        %v3150 = vpop.permute.xlu0 %3149
        %v3152 = vsel %vm1770, %v3148, 0
        %v3155 = vsel %vm1770, %v3150, 0
        %3157 = vmatpush.bf16.xpose.msra.mxu0 0
        %3158 = vmatpush.bf16.xpose.msra.mxu0 0
        %3159 = vmatpush.bf16.xpose.msra.mxu0 0
        %3160 = vmatpush.bf16.xpose.msra.mxu0 0
        %3161 = vmatpush.bf16.xpose.msra.mxu0 0
        %3162 = vmatpush.bf16.xpose.msra.mxu0 0
        %3163 = vmatpush.bf16.xpose.msra.mxu0 0
        %3164 = vmatpush.bf16.xpose.msra.mxu0 %v3155
        %3165 = vmatmul.bf16.gmra.mxu0 %v3152
        %v3166 = vpop.f32.mrf.mxu0
        %v3167 = vadd.f32 0.0, %v3166
        %v3168 = vpop.f32.mrf.mxu0
        %v3169 = vadd.f32 0.0, %v3168
        %3170 = vdwg.mxu0
        %3171 = vrot.lane.b32.xlu0 %v1855, 112
        %v3172 = vpop.permute.xlu0 %3171
        %3173 = vrot.lane.b32.xlu0 %v1860, 112
        %v3174 = vpop.permute.xlu0 %3173
        %v3176 = vsel %vm1770, %v3172, 0
        %v3179 = vsel %vm1770, %v3174, 0
        %3181 = vmatpush.bf16.xpose.msra.mxu0 0
        %3182 = vmatpush.bf16.xpose.msra.mxu0 0
        %3183 = vmatpush.bf16.xpose.msra.mxu0 0
        %3184 = vmatpush.bf16.xpose.msra.mxu0 0
        %3185 = vmatpush.bf16.xpose.msra.mxu0 0
        %3186 = vmatpush.bf16.xpose.msra.mxu0 0
        %3187 = vmatpush.bf16.xpose.msra.mxu0 0
        %3188 = vmatpush.bf16.xpose.msra.mxu0 %v3179
        %3189 = vmatmul.bf16.gmra.mxu0 %v3176
        %v3190 = vpop.f32.mrf.mxu0
        %v3191 = vadd.f32 0.0, %v3190
        %v3192 = vpop.f32.mrf.mxu0
        %v3193 = vadd.f32 0.0, %v3192
        %3194 = vdwg.mxu0
        %3195 = vrot.lane.b32.xlu0 %v1885, 112
        %v3196 = vpop.permute.xlu0 %3195
        %3197 = vrot.lane.b32.xlu0 %v1890, 112
        %v3198 = vpop.permute.xlu0 %3197
        %v3200 = vsel %vm1770, %v3196, 0
        %v3203 = vsel %vm1770, %v3198, 0
        %3205 = vmatpush.bf16.xpose.msra.mxu0 0
        %3206 = vmatpush.bf16.xpose.msra.mxu0 0
        %3207 = vmatpush.bf16.xpose.msra.mxu0 0
        %3208 = vmatpush.bf16.xpose.msra.mxu0 0
        %3209 = vmatpush.bf16.xpose.msra.mxu0 0
        %3210 = vmatpush.bf16.xpose.msra.mxu0 0
        %3211 = vmatpush.bf16.xpose.msra.mxu0 0
        %3212 = vmatpush.bf16.xpose.msra.mxu0 %v3203
        %3213 = vmatmul.bf16.gmra.mxu0 %v3200
        %v3214 = vpop.f32.mrf.mxu0
        %v3215 = vadd.f32 0.0, %v3214
        %v3216 = vpop.f32.mrf.mxu0
        %v3217 = vadd.f32 0.0, %v3216
        %3218 = vdwg.mxu0
        %3219 = vrot.lane.b32.xlu0 %v1915, 112
        %v3220 = vpop.permute.xlu0 %3219
        %3221 = vrot.lane.b32.xlu0 %v1920, 112
        %v3222 = vpop.permute.xlu0 %3221
        %v3224 = vsel %vm1770, %v3220, 0
        %v3227 = vsel %vm1770, %v3222, 0
        %3229 = vmatpush.bf16.xpose.msra.mxu0 0
        %3230 = vmatpush.bf16.xpose.msra.mxu0 0
        %3231 = vmatpush.bf16.xpose.msra.mxu0 0
        %3232 = vmatpush.bf16.xpose.msra.mxu0 0
        %3233 = vmatpush.bf16.xpose.msra.mxu0 0
        %3234 = vmatpush.bf16.xpose.msra.mxu0 0
        %3235 = vmatpush.bf16.xpose.msra.mxu0 0
        %3236 = vmatpush.bf16.xpose.msra.mxu0 %v3227
        %3237 = vmatmul.bf16.gmra.mxu0 %v3224
        %v3238 = vpop.f32.mrf.mxu0
        %v3239 = vadd.f32 0.0, %v3238
        %v3240 = vpop.f32.mrf.mxu0
        %v3241 = vadd.f32 0.0, %v3240
        %3242 = vdwg.mxu0
        %3243 = vrot.lane.b32.xlu0 %v1945, 112
        %v3244 = vpop.permute.xlu0 %3243
        %3245 = vrot.lane.b32.xlu0 %v1950, 112
        %v3246 = vpop.permute.xlu0 %3245
        %v3248 = vsel %vm1770, %v3244, 0
        %v3251 = vsel %vm1770, %v3246, 0
        %3253 = vmatpush.bf16.xpose.msra.mxu0 0
        %3254 = vmatpush.bf16.xpose.msra.mxu0 0
        %3255 = vmatpush.bf16.xpose.msra.mxu0 0
        %3256 = vmatpush.bf16.xpose.msra.mxu0 0
        %3257 = vmatpush.bf16.xpose.msra.mxu0 0
        %3258 = vmatpush.bf16.xpose.msra.mxu0 0
        %3259 = vmatpush.bf16.xpose.msra.mxu0 0
        %3260 = vmatpush.bf16.xpose.msra.mxu0 %v3251
        %3261 = vmatmul.bf16.gmra.mxu0 %v3248
        %v3262 = vpop.f32.mrf.mxu0
        %v3263 = vadd.f32 0.0, %v3262
        %v3264 = vpop.f32.mrf.mxu0
        %v3265 = vadd.f32 0.0, %v3264
        %3266 = vdwg.mxu0
        %3267 = vrot.lane.b32.xlu0 %v1975, 112
        %v3268 = vpop.permute.xlu0 %3267
        %3269 = vrot.lane.b32.xlu0 %v1980, 112
        %v3270 = vpop.permute.xlu0 %3269
        %v3272 = vsel %vm1770, %v3268, 0
        %v3275 = vsel %vm1770, %v3270, 0
        %3277 = vmatpush.bf16.xpose.msra.mxu0 0
        %3278 = vmatpush.bf16.xpose.msra.mxu0 0
        %3279 = vmatpush.bf16.xpose.msra.mxu0 0
        %3280 = vmatpush.bf16.xpose.msra.mxu0 0
        %3281 = vmatpush.bf16.xpose.msra.mxu0 0
        %3282 = vmatpush.bf16.xpose.msra.mxu0 0
        %3283 = vmatpush.bf16.xpose.msra.mxu0 0
        %3284 = vmatpush.bf16.xpose.msra.mxu0 %v3275
        %3285 = vmatmul.bf16.gmra.mxu0 %v3272
        %v3286 = vpop.f32.mrf.mxu0
        %v3287 = vadd.f32 0.0, %v3286
        %v3288 = vpop.f32.mrf.mxu0
        %v3289 = vadd.f32 0.0, %v3288
        %3290 = vdwg.mxu0
        %v3291 = vsel %vm2001, %v3119, -inf
        %3292 = vmax.xlane.f32.xlu0 %v3291
        %v3293 = vpop.xlane.xlu0 %3292
        %v3294 = vsel %vm2001, %v3121, -inf
        %3295 = vmax.xlane.f32.xlu0 %v3294
        %v3296 = vpop.xlane.xlu0 %3295
        %v3297 = vsel %vm2001, %v3143, -inf
        %3298 = vmax.xlane.f32.xlu0 %v3297
        %v3299 = vpop.xlane.xlu0 %3298
        %v3300 = vsel %vm2001, %v3145, -inf
        %3301 = vmax.xlane.f32.xlu0 %v3300
        %v3302 = vpop.xlane.xlu0 %3301
        %v3303 = vsel %vm2001, %v3167, -inf
        %3304 = vmax.xlane.f32.xlu0 %v3303
        %v3305 = vpop.xlane.xlu0 %3304
        %v3306 = vsel %vm2001, %v3169, -inf
        %3307 = vmax.xlane.f32.xlu0 %v3306
        %v3308 = vpop.xlane.xlu0 %3307
        %v3309 = vsel %vm2001, %v3191, -inf
        %3310 = vmax.xlane.f32.xlu0 %v3309
        %v3311 = vpop.xlane.xlu0 %3310
        %v3312 = vsel %vm2001, %v3193, -inf
        %3313 = vmax.xlane.f32.xlu0 %v3312
        %v3314 = vpop.xlane.xlu0 %3313
        %v3315 = vsel %vm2001, %v3215, -inf
        %3316 = vmax.xlane.f32.xlu0 %v3315
        %v3317 = vpop.xlane.xlu0 %3316
        %v3318 = vsel %vm2001, %v3217, -inf
        %3319 = vmax.xlane.f32.xlu0 %v3318
        %v3320 = vpop.xlane.xlu0 %3319
        %v3321 = vsel %vm2001, %v3239, -inf
        %3322 = vmax.xlane.f32.xlu0 %v3321
        %v3323 = vpop.xlane.xlu0 %3322
        %v3324 = vsel %vm2001, %v3241, -inf
        %3325 = vmax.xlane.f32.xlu0 %v3324
        %v3326 = vpop.xlane.xlu0 %3325
        %v3327 = vsel %vm2001, %v3263, -inf
        %3328 = vmax.xlane.f32.xlu0 %v3327
        %v3329 = vpop.xlane.xlu0 %3328
        %v3330 = vsel %vm2001, %v3265, -inf
        %3331 = vmax.xlane.f32.xlu0 %v3330
        %v3332 = vpop.xlane.xlu0 %3331
        %v3333 = vsel %vm2001, %v3287, -inf
        %3334 = vmax.xlane.f32.xlu0 %v3333
        %v3335 = vpop.xlane.xlu0 %3334
        %v3336 = vsel %vm2001, %v3289, -inf
        %3337 = vmax.xlane.f32.xlu0 %v3336
        %v3338 = vpop.xlane.xlu0 %3337
        %v3339 = vsub.f32 %v3119, %v3293
        %v3340 = vsub.f32 %v3121, %v3296
        %v3341 = vsub.f32 %v3143, %v3299
        %v3342 = vsub.f32 %v3145, %v3302
        %v3343 = vsub.f32 %v3167, %v3305
        %v3344 = vsub.f32 %v3169, %v3308
        %v3345 = vsub.f32 %v3191, %v3311
        %v3346 = vsub.f32 %v3193, %v3314
        %v3347 = vsub.f32 %v3215, %v3317
        %v3348 = vsub.f32 %v3217, %v3320
        %v3349 = vsub.f32 %v3239, %v3323
        %v3350 = vsub.f32 %v3241, %v3326
        %v3351 = vsub.f32 %v3263, %v3329
        %v3352 = vsub.f32 %v3265, %v3332
        %v3353 = vsub.f32 %v3287, %v3335
        %v3354 = vsub.f32 %v3289, %v3338
        %v3355 = vmul.f32 %v3339, 1.442695
        %v3356 = vpow.pop %v3355
        %v3357 = vmul.f32 %v3340, 1.442695
        %v3358 = vpow.pop %v3357
        %v3359 = vmul.f32 %v3341, 1.442695
        %v3360 = vpow.pop %v3359
        %v3361 = vmul.f32 %v3342, 1.442695
        %v3362 = vpow.pop %v3361
        %v3363 = vmul.f32 %v3343, 1.442695
        %v3364 = vpow.pop %v3363
        %v3365 = vmul.f32 %v3344, 1.442695
        %v3366 = vpow.pop %v3365
        %v3367 = vmul.f32 %v3345, 1.442695
        %v3368 = vpow.pop %v3367
        %v3369 = vmul.f32 %v3346, 1.442695
        %v3370 = vpow.pop %v3369
        %v3371 = vmul.f32 %v3347, 1.442695
        %v3372 = vpow.pop %v3371
        %v3373 = vmul.f32 %v3348, 1.442695
        %v3374 = vpow.pop %v3373
        %v3375 = vmul.f32 %v3349, 1.442695
        %v3376 = vpow.pop %v3375
        %v3377 = vmul.f32 %v3350, 1.442695
        %v3378 = vpow.pop %v3377
        %v3379 = vmul.f32 %v3351, 1.442695
        %v3380 = vpow.pop %v3379
        %v3381 = vmul.f32 %v3352, 1.442695
        %v3382 = vpow.pop %v3381
        %v3383 = vmul.f32 %v3353, 1.442695
        %v3384 = vpow.pop %v3383
        %v3385 = vmul.f32 %v3354, 1.442695
        %v3386 = vpow.pop %v3385
        %v3387 = vsel %vm2001, %v3356, 0.0
        %3388 = vadd.xlane.f32.xlu0 %v3387
        %v3389 = vpop.xlane.xlu0 %3388
        %v3390 = vsel %vm2001, %v3358, 0.0
        %3391 = vadd.xlane.f32.xlu0 %v3390
        %v3392 = vpop.xlane.xlu0 %3391
        %v3393 = vsel %vm2001, %v3360, 0.0
        %3394 = vadd.xlane.f32.xlu0 %v3393
        %v3395 = vpop.xlane.xlu0 %3394
        %v3396 = vsel %vm2001, %v3362, 0.0
        %3397 = vadd.xlane.f32.xlu0 %v3396
        %v3398 = vpop.xlane.xlu0 %3397
        %v3399 = vsel %vm2001, %v3364, 0.0
        %3400 = vadd.xlane.f32.xlu0 %v3399
        %v3401 = vpop.xlane.xlu0 %3400
        %v3402 = vsel %vm2001, %v3366, 0.0
        %3403 = vadd.xlane.f32.xlu0 %v3402
        %v3404 = vpop.xlane.xlu0 %3403
        %v3405 = vsel %vm2001, %v3368, 0.0
        %3406 = vadd.xlane.f32.xlu0 %v3405
        %v3407 = vpop.xlane.xlu0 %3406
        %v3408 = vsel %vm2001, %v3370, 0.0
        %3409 = vadd.xlane.f32.xlu0 %v3408
        %v3410 = vpop.xlane.xlu0 %3409
        %v3411 = vsel %vm2001, %v3372, 0.0
        %3412 = vadd.xlane.f32.xlu0 %v3411
        %v3413 = vpop.xlane.xlu0 %3412
        %v3414 = vsel %vm2001, %v3374, 0.0
        %3415 = vadd.xlane.f32.xlu0 %v3414
        %v3416 = vpop.xlane.xlu0 %3415
        %v3417 = vsel %vm2001, %v3376, 0.0
        %3418 = vadd.xlane.f32.xlu0 %v3417
        %v3419 = vpop.xlane.xlu0 %3418
        %v3420 = vsel %vm2001, %v3378, 0.0
        %3421 = vadd.xlane.f32.xlu0 %v3420
        %v3422 = vpop.xlane.xlu0 %3421
        %v3423 = vsel %vm2001, %v3380, 0.0
        %3424 = vadd.xlane.f32.xlu0 %v3423
        %v3425 = vpop.xlane.xlu0 %3424
        %v3426 = vsel %vm2001, %v3382, 0.0
        %3427 = vadd.xlane.f32.xlu0 %v3426
        %v3428 = vpop.xlane.xlu0 %3427
        %v3429 = vsel %vm2001, %v3384, 0.0
        %3430 = vadd.xlane.f32.xlu0 %v3429
        %v3431 = vpop.xlane.xlu0 %3430
        %v3432 = vsel %vm2001, %v3386, 0.0
        %3433 = vadd.xlane.f32.xlu0 %v3432
        %v3434 = vpop.xlane.xlu0 %3433
        %v3435 = vrcp.pop %v3389
        %v3436 = vrcp.pop %v3392
        %v3437 = vrcp.pop %v3395
        %v3438 = vrcp.pop %v3398
        %v3439 = vrcp.pop %v3401
        %v3440 = vrcp.pop %v3404
        %v3441 = vrcp.pop %v3407
        %v3442 = vrcp.pop %v3410
        %v3443 = vrcp.pop %v3413
        %v3444 = vrcp.pop %v3416
        %v3445 = vrcp.pop %v3419
        %v3446 = vrcp.pop %v3422
        %v3447 = vrcp.pop %v3425
        %v3448 = vrcp.pop %v3428
        %v3449 = vrcp.pop %v3431
        %v3450 = vrcp.pop %v3434
        %v3451 = vmul.f32 %v3356, %v3435
        %v3452 = vmul.f32 %v3358, %v3436
        %v3453 = vmul.f32 %v3360, %v3437
        %v3454 = vmul.f32 %v3362, %v3438
        %v3455 = vmul.f32 %v3364, %v3439
        %v3456 = vmul.f32 %v3366, %v3440
        %v3457 = vmul.f32 %v3368, %v3441
        %v3458 = vmul.f32 %v3370, %v3442
        %v3459 = vmul.f32 %v3372, %v3443
        %v3460 = vmul.f32 %v3374, %v3444
        %v3461 = vmul.f32 %v3376, %v3445
        %v3462 = vmul.f32 %v3378, %v3446
        %v3463 = vmul.f32 %v3380, %v3447
        %v3464 = vmul.f32 %v3382, %v3448
        %v3465 = vmul.f32 %v3384, %v3449
        %v3466 = vmul.f32 %v3386, %v3450
        %v3467 = vpack.c.bf16 %v3451, %v3451
        %v3468 = vpack.c.bf16 %v3452, %v3452
        %v3469 = vpack.c.bf16 %v3453, %v3453
        %v3470 = vpack.c.bf16 %v3454, %v3454
        %v3471 = vpack.c.bf16 %v3455, %v3455
        %v3472 = vpack.c.bf16 %v3456, %v3456
        %v3473 = vpack.c.bf16 %v3457, %v3457
        %v3474 = vpack.c.bf16 %v3458, %v3458
        %v3475 = vpack.c.bf16 %v3459, %v3459
        %v3476 = vpack.c.bf16 %v3460, %v3460
        %v3477 = vpack.c.bf16 %v3461, %v3461
        %v3478 = vpack.c.bf16 %v3462, %v3462
        %v3479 = vpack.c.bf16 %v3463, %v3463
        %v3480 = vpack.c.bf16 %v3464, %v3464
        %v3481 = vpack.c.bf16 %v3465, %v3465
        %v3482 = vpack.c.bf16 %v3466, %v3466
        %v3485 = vunpack.c.l.b16 %v3467
        %v3486 = vunpack.c.l.b16 %v3468
        %v3487 = vpack.c.b16 %v3486, %v3485
        %3488 = vrot.lane.b32.xlu0 %v2203, 112
        %v3489 = vpop.permute.xlu0 %3488
        %v3492 = vsel %vm2001, %v3487, 0
        %3494 = vmatpush.bf16.msra.mxu0 0
        %3495 = vmatpush.bf16.msra.mxu0 0
        %3496 = vmatpush.bf16.msra.mxu0 0
        %3497 = vmatpush.bf16.msra.mxu0 0
        %3498 = vmatpush.bf16.msra.mxu0 0
        %3499 = vmatpush.bf16.msra.mxu0 0
        %3500 = vmatpush.bf16.msra.mxu0 0
        %3501 = vmatpush.bf16.msra.mxu0 %v3489
        %3502 = vmatmul.bf16.gmra.mxu0 %v3492
        %v3503 = vpop.f32.mrf.mxu0
        %v3504 = vadd.f32 0.0, %v3503
        %v3505 = vpop.f32.mrf.mxu0
        %v3506 = vadd.f32 0.0, %v3505
        %3507 = vdwg.mxu0
        %v3510 = vunpack.c.l.b16 %v3469
        %v3511 = vunpack.c.l.b16 %v3470
        %v3512 = vpack.c.b16 %v3511, %v3510
        %3513 = vrot.lane.b32.xlu0 %v2231, 112
        %v3514 = vpop.permute.xlu0 %3513
        %v3517 = vsel %vm2001, %v3512, 0
        %3519 = vmatpush.bf16.msra.mxu0 0
        %3520 = vmatpush.bf16.msra.mxu0 0
        %3521 = vmatpush.bf16.msra.mxu0 0
        %3522 = vmatpush.bf16.msra.mxu0 0
        %3523 = vmatpush.bf16.msra.mxu0 0
        %3524 = vmatpush.bf16.msra.mxu0 0
        %3525 = vmatpush.bf16.msra.mxu0 0
        %3526 = vmatpush.bf16.msra.mxu0 %v3514
        %3527 = vmatmul.bf16.gmra.mxu0 %v3517
        %v3528 = vpop.f32.mrf.mxu0
        %v3529 = vadd.f32 0.0, %v3528
        %v3530 = vpop.f32.mrf.mxu0
        %v3531 = vadd.f32 0.0, %v3530
        %3532 = vdwg.mxu0
        %v3535 = vunpack.c.l.b16 %v3471
        %v3536 = vunpack.c.l.b16 %v3472
        %v3537 = vpack.c.b16 %v3536, %v3535
        %3538 = vrot.lane.b32.xlu0 %v2259, 112
        %v3539 = vpop.permute.xlu0 %3538
        %v3542 = vsel %vm2001, %v3537, 0
        %3544 = vmatpush.bf16.msra.mxu0 0
        %3545 = vmatpush.bf16.msra.mxu0 0
        %3546 = vmatpush.bf16.msra.mxu0 0
        %3547 = vmatpush.bf16.msra.mxu0 0
        %3548 = vmatpush.bf16.msra.mxu0 0
        %3549 = vmatpush.bf16.msra.mxu0 0
        %3550 = vmatpush.bf16.msra.mxu0 0
        %3551 = vmatpush.bf16.msra.mxu0 %v3539
        %3552 = vmatmul.bf16.gmra.mxu0 %v3542
        %v3553 = vpop.f32.mrf.mxu0
        %v3554 = vadd.f32 0.0, %v3553
        %v3555 = vpop.f32.mrf.mxu0
        %v3556 = vadd.f32 0.0, %v3555
        %3557 = vdwg.mxu0
        %v3560 = vunpack.c.l.b16 %v3473
        %v3561 = vunpack.c.l.b16 %v3474
        %v3562 = vpack.c.b16 %v3561, %v3560
        %3563 = vrot.lane.b32.xlu0 %v2287, 112
        %v3564 = vpop.permute.xlu0 %3563
        %v3567 = vsel %vm2001, %v3562, 0
        %3569 = vmatpush.bf16.msra.mxu0 0
        %3570 = vmatpush.bf16.msra.mxu0 0
        %3571 = vmatpush.bf16.msra.mxu0 0
        %3572 = vmatpush.bf16.msra.mxu0 0
        %3573 = vmatpush.bf16.msra.mxu0 0
        %3574 = vmatpush.bf16.msra.mxu0 0
        %3575 = vmatpush.bf16.msra.mxu0 0
        %3576 = vmatpush.bf16.msra.mxu0 %v3564
        %3577 = vmatmul.bf16.gmra.mxu0 %v3567
        %v3578 = vpop.f32.mrf.mxu0
        %v3579 = vadd.f32 0.0, %v3578
        %v3580 = vpop.f32.mrf.mxu0
        %v3581 = vadd.f32 0.0, %v3580
        %3582 = vdwg.mxu0
        %v3585 = vunpack.c.l.b16 %v3475
        %v3586 = vunpack.c.l.b16 %v3476
        %v3587 = vpack.c.b16 %v3586, %v3585
        %3588 = vrot.lane.b32.xlu0 %v2315, 112
        %v3589 = vpop.permute.xlu0 %3588
        %v3592 = vsel %vm2001, %v3587, 0
        %3594 = vmatpush.bf16.msra.mxu0 0
        %3595 = vmatpush.bf16.msra.mxu0 0
        %3596 = vmatpush.bf16.msra.mxu0 0
        %3597 = vmatpush.bf16.msra.mxu0 0
        %3598 = vmatpush.bf16.msra.mxu0 0
        %3599 = vmatpush.bf16.msra.mxu0 0
        %3600 = vmatpush.bf16.msra.mxu0 0
        %3601 = vmatpush.bf16.msra.mxu0 %v3589
        %3602 = vmatmul.bf16.gmra.mxu0 %v3592
        %v3603 = vpop.f32.mrf.mxu0
        %v3604 = vadd.f32 0.0, %v3603
        %v3605 = vpop.f32.mrf.mxu0
        %v3606 = vadd.f32 0.0, %v3605
        %3607 = vdwg.mxu0
        %v3610 = vunpack.c.l.b16 %v3477
        %v3611 = vunpack.c.l.b16 %v3478
        %v3612 = vpack.c.b16 %v3611, %v3610
        %3613 = vrot.lane.b32.xlu0 %v2343, 112
        %v3614 = vpop.permute.xlu0 %3613
        %v3617 = vsel %vm2001, %v3612, 0
        %3619 = vmatpush.bf16.msra.mxu0 0
        %3620 = vmatpush.bf16.msra.mxu0 0
        %3621 = vmatpush.bf16.msra.mxu0 0
        %3622 = vmatpush.bf16.msra.mxu0 0
        %3623 = vmatpush.bf16.msra.mxu0 0
        %3624 = vmatpush.bf16.msra.mxu0 0
        %3625 = vmatpush.bf16.msra.mxu0 0
        %3626 = vmatpush.bf16.msra.mxu0 %v3614
        %3627 = vmatmul.bf16.gmra.mxu0 %v3617
        %v3628 = vpop.f32.mrf.mxu0
        %v3629 = vadd.f32 0.0, %v3628
        %v3630 = vpop.f32.mrf.mxu0
        %v3631 = vadd.f32 0.0, %v3630
        %3632 = vdwg.mxu0
        %v3635 = vunpack.c.l.b16 %v3479
        %v3636 = vunpack.c.l.b16 %v3480
        %v3637 = vpack.c.b16 %v3636, %v3635
        %3638 = vrot.lane.b32.xlu0 %v2371, 112
        %v3639 = vpop.permute.xlu0 %3638
        %v3642 = vsel %vm2001, %v3637, 0
        %3644 = vmatpush.bf16.msra.mxu0 0
        %3645 = vmatpush.bf16.msra.mxu0 0
        %3646 = vmatpush.bf16.msra.mxu0 0
        %3647 = vmatpush.bf16.msra.mxu0 0
        %3648 = vmatpush.bf16.msra.mxu0 0
        %3649 = vmatpush.bf16.msra.mxu0 0
        %3650 = vmatpush.bf16.msra.mxu0 0
        %3651 = vmatpush.bf16.msra.mxu0 %v3639
        %3652 = vmatmul.bf16.gmra.mxu0 %v3642
        %v3653 = vpop.f32.mrf.mxu0
        %v3654 = vadd.f32 0.0, %v3653
        %v3655 = vpop.f32.mrf.mxu0
        %v3656 = vadd.f32 0.0, %v3655
        %3657 = vdwg.mxu0
        %v3660 = vunpack.c.l.b16 %v3481
        %v3661 = vunpack.c.l.b16 %v3482
        %v3662 = vpack.c.b16 %v3661, %v3660
        %3663 = vrot.lane.b32.xlu0 %v2399, 112
        %v3664 = vpop.permute.xlu0 %3663
        %v3667 = vsel %vm2001, %v3662, 0
        %3669 = vmatpush.bf16.msra.mxu0 0
        %3670 = vmatpush.bf16.msra.mxu0 0
        %3671 = vmatpush.bf16.msra.mxu0 0
        %3672 = vmatpush.bf16.msra.mxu0 0
        %3673 = vmatpush.bf16.msra.mxu0 0
        %3674 = vmatpush.bf16.msra.mxu0 0
        %3675 = vmatpush.bf16.msra.mxu0 0
        %3676 = vmatpush.bf16.msra.mxu0 %v3664
        %3677 = vmatmul.bf16.gmra.mxu0 %v3667
        %v3678 = vpop.f32.mrf.mxu0
        %v3679 = vadd.f32 0.0, %v3678
        %v3680 = vpop.f32.mrf.mxu0
        %v3681 = vadd.f32 0.0, %v3680
        %3682 = vdwg.mxu0
        %3699 = vrot.lane.b32.xlu0 %v3504, 16
        %v3700 = vpop.permute.xlu0 %3699
        %3701 = vrot.lane.b32.xlu0 %v3506, 16
        %v3702 = vpop.permute.xlu0 %3701
        %3703 = vrot.lane.b32.xlu0 %v3529, 16
        %v3704 = vpop.permute.xlu0 %3703
        %3705 = vrot.lane.b32.xlu0 %v3531, 16
        %v3706 = vpop.permute.xlu0 %3705
        %3707 = vrot.lane.b32.xlu0 %v3554, 16
        %v3708 = vpop.permute.xlu0 %3707
        %3709 = vrot.lane.b32.xlu0 %v3556, 16
        %v3710 = vpop.permute.xlu0 %3709
        %3711 = vrot.lane.b32.xlu0 %v3579, 16
        %v3712 = vpop.permute.xlu0 %3711
        %3713 = vrot.lane.b32.xlu0 %v3581, 16
        %v3714 = vpop.permute.xlu0 %3713
        %3715 = vrot.lane.b32.xlu0 %v3604, 16
        %v3716 = vpop.permute.xlu0 %3715
        %3717 = vrot.lane.b32.xlu0 %v3606, 16
        %v3718 = vpop.permute.xlu0 %3717
        %3719 = vrot.lane.b32.xlu0 %v3629, 16
        %v3720 = vpop.permute.xlu0 %3719
        %3721 = vrot.lane.b32.xlu0 %v3631, 16
        %v3722 = vpop.permute.xlu0 %3721
        %3723 = vrot.lane.b32.xlu0 %v3654, 16
        %v3724 = vpop.permute.xlu0 %3723
        %3725 = vrot.lane.b32.xlu0 %v3656, 16
        %v3726 = vpop.permute.xlu0 %3725
        %3727 = vrot.lane.b32.xlu0 %v3679, 16
        %v3728 = vpop.permute.xlu0 %3727
        %3729 = vrot.lane.b32.xlu0 %v3681, 16
        %v3730 = vpop.permute.xlu0 %3729
        %vm3747 = vcmask 195712
        %3748 = vst.msk [vmem:[#allocation2] sm:$0xff] %vm3747, %v3700
        %3749 = vst.msk [vmem:[#allocation2 + $0x8] sm:$0xff] %vm3747, %v3702
        %3750 = vst.msk [vmem:[#allocation2 + $0x10] sm:$0xff] %vm3747, %v3704
        %3751 = vst.msk [vmem:[#allocation2 + $0x18] sm:$0xff] %vm3747, %v3706
        %3752 = vst.msk [vmem:[#allocation2 + $0x20] sm:$0xff] %vm3747, %v3708
        %3753 = vst.msk [vmem:[#allocation2 + $0x28] sm:$0xff] %vm3747, %v3710
        %3754 = vst.msk [vmem:[#allocation2 + $0x30] sm:$0xff] %vm3747, %v3712
        %3755 = vst.msk [vmem:[#allocation2 + $0x38] sm:$0xff] %vm3747, %v3714
        %3756 = vst.msk [vmem:[#allocation2 + $0x40] sm:$0xff] %vm3747, %v3716
        %3757 = vst.msk [vmem:[#allocation2 + $0x48] sm:$0xff] %vm3747, %v3718
        %3758 = vst.msk [vmem:[#allocation2 + $0x50] sm:$0xff] %vm3747, %v3720
        %3759 = vst.msk [vmem:[#allocation2 + $0x58] sm:$0xff] %vm3747, %v3722
        %3760 = vst.msk [vmem:[#allocation2 + $0x60] sm:$0xff] %vm3747, %v3724
        %3761 = vst.msk [vmem:[#allocation2 + $0x68] sm:$0xff] %vm3747, %v3726
        %3762 = vst.msk [vmem:[#allocation2 + $0x70] sm:$0xff] %vm3747, %v3728
        %3763 = vst.msk [vmem:[#allocation2 + $0x78] sm:$0xff] %vm3747, %v3730
        %3764 = vrot.lane.b32.xlu0 %v1764, 104
        %v3765 = vpop.permute.xlu0 %3764
        %3766 = vrot.lane.b32.xlu0 %v1769, 104
        %v3767 = vpop.permute.xlu0 %3766
        %v3769 = vsel %vm1770, %v3765, 0
        %v3772 = vsel %vm1770, %v3767, 0
        %3774 = vmatpush.bf16.xpose.msra.mxu0 0
        %3775 = vmatpush.bf16.xpose.msra.mxu0 0
        %3776 = vmatpush.bf16.xpose.msra.mxu0 0
        %3777 = vmatpush.bf16.xpose.msra.mxu0 0
        %3778 = vmatpush.bf16.xpose.msra.mxu0 0
        %3779 = vmatpush.bf16.xpose.msra.mxu0 0
        %3780 = vmatpush.bf16.xpose.msra.mxu0 0
        %3781 = vmatpush.bf16.xpose.msra.mxu0 %v3772
        %3782 = vmatmul.bf16.gmra.mxu0 %v3769
        %v3783 = vpop.f32.mrf.mxu0
        %v3784 = vadd.f32 0.0, %v3783
        %v3785 = vpop.f32.mrf.mxu0
        %v3786 = vadd.f32 0.0, %v3785
        %3787 = vdwg.mxu0
        %3788 = vrot.lane.b32.xlu0 %v1795, 104
        %v3789 = vpop.permute.xlu0 %3788
        %3790 = vrot.lane.b32.xlu0 %v1800, 104
        %v3791 = vpop.permute.xlu0 %3790
        %v3793 = vsel %vm1770, %v3789, 0
        %v3796 = vsel %vm1770, %v3791, 0
        %3798 = vmatpush.bf16.xpose.msra.mxu0 0
        %3799 = vmatpush.bf16.xpose.msra.mxu0 0
        %3800 = vmatpush.bf16.xpose.msra.mxu0 0
        %3801 = vmatpush.bf16.xpose.msra.mxu0 0
        %3802 = vmatpush.bf16.xpose.msra.mxu0 0
        %3803 = vmatpush.bf16.xpose.msra.mxu0 0
        %3804 = vmatpush.bf16.xpose.msra.mxu0 0
        %3805 = vmatpush.bf16.xpose.msra.mxu0 %v3796
        %3806 = vmatmul.bf16.gmra.mxu0 %v3793
        %v3807 = vpop.f32.mrf.mxu0
        %v3808 = vadd.f32 0.0, %v3807
        %v3809 = vpop.f32.mrf.mxu0
        %v3810 = vadd.f32 0.0, %v3809
        %3811 = vdwg.mxu0
        %3812 = vrot.lane.b32.xlu0 %v1825, 104
        %v3813 = vpop.permute.xlu0 %3812
        %3814 = vrot.lane.b32.xlu0 %v1830, 104
        %v3815 = vpop.permute.xlu0 %3814
        %v3817 = vsel %vm1770, %v3813, 0
        %v3820 = vsel %vm1770, %v3815, 0
        %3822 = vmatpush.bf16.xpose.msra.mxu0 0
        %3823 = vmatpush.bf16.xpose.msra.mxu0 0
        %3824 = vmatpush.bf16.xpose.msra.mxu0 0
        %3825 = vmatpush.bf16.xpose.msra.mxu0 0
        %3826 = vmatpush.bf16.xpose.msra.mxu0 0
        %3827 = vmatpush.bf16.xpose.msra.mxu0 0
        %3828 = vmatpush.bf16.xpose.msra.mxu0 0
        %3829 = vmatpush.bf16.xpose.msra.mxu0 %v3820
        %3830 = vmatmul.bf16.gmra.mxu0 %v3817
        %v3831 = vpop.f32.mrf.mxu0
        %v3832 = vadd.f32 0.0, %v3831
        %v3833 = vpop.f32.mrf.mxu0
        %v3834 = vadd.f32 0.0, %v3833
        %3835 = vdwg.mxu0
        %3836 = vrot.lane.b32.xlu0 %v1855, 104
        %v3837 = vpop.permute.xlu0 %3836
        %3838 = vrot.lane.b32.xlu0 %v1860, 104
        %v3839 = vpop.permute.xlu0 %3838
        %v3841 = vsel %vm1770, %v3837, 0
        %v3844 = vsel %vm1770, %v3839, 0
        %3846 = vmatpush.bf16.xpose.msra.mxu0 0
        %3847 = vmatpush.bf16.xpose.msra.mxu0 0
        %3848 = vmatpush.bf16.xpose.msra.mxu0 0
        %3849 = vmatpush.bf16.xpose.msra.mxu0 0
        %3850 = vmatpush.bf16.xpose.msra.mxu0 0
        %3851 = vmatpush.bf16.xpose.msra.mxu0 0
        %3852 = vmatpush.bf16.xpose.msra.mxu0 0
        %3853 = vmatpush.bf16.xpose.msra.mxu0 %v3844
        %3854 = vmatmul.bf16.gmra.mxu0 %v3841
        %v3855 = vpop.f32.mrf.mxu0
        %v3856 = vadd.f32 0.0, %v3855
        %v3857 = vpop.f32.mrf.mxu0
        %v3858 = vadd.f32 0.0, %v3857
        %3859 = vdwg.mxu0
        %3860 = vrot.lane.b32.xlu0 %v1885, 104
        %v3861 = vpop.permute.xlu0 %3860
        %3862 = vrot.lane.b32.xlu0 %v1890, 104
        %v3863 = vpop.permute.xlu0 %3862
        %v3865 = vsel %vm1770, %v3861, 0
        %v3868 = vsel %vm1770, %v3863, 0
        %3870 = vmatpush.bf16.xpose.msra.mxu0 0
        %3871 = vmatpush.bf16.xpose.msra.mxu0 0
        %3872 = vmatpush.bf16.xpose.msra.mxu0 0
        %3873 = vmatpush.bf16.xpose.msra.mxu0 0
        %3874 = vmatpush.bf16.xpose.msra.mxu0 0
        %3875 = vmatpush.bf16.xpose.msra.mxu0 0
        %3876 = vmatpush.bf16.xpose.msra.mxu0 0
        %3877 = vmatpush.bf16.xpose.msra.mxu0 %v3868
        %3878 = vmatmul.bf16.gmra.mxu0 %v3865
        %v3879 = vpop.f32.mrf.mxu0
        %v3880 = vadd.f32 0.0, %v3879
        %v3881 = vpop.f32.mrf.mxu0
        %v3882 = vadd.f32 0.0, %v3881
        %3883 = vdwg.mxu0
        %3884 = vrot.lane.b32.xlu0 %v1915, 104
        %v3885 = vpop.permute.xlu0 %3884
        %3886 = vrot.lane.b32.xlu0 %v1920, 104
        %v3887 = vpop.permute.xlu0 %3886
        %v3889 = vsel %vm1770, %v3885, 0
        %v3892 = vsel %vm1770, %v3887, 0
        %3894 = vmatpush.bf16.xpose.msra.mxu0 0
        %3895 = vmatpush.bf16.xpose.msra.mxu0 0
        %3896 = vmatpush.bf16.xpose.msra.mxu0 0
        %3897 = vmatpush.bf16.xpose.msra.mxu0 0
        %3898 = vmatpush.bf16.xpose.msra.mxu0 0
        %3899 = vmatpush.bf16.xpose.msra.mxu0 0
        %3900 = vmatpush.bf16.xpose.msra.mxu0 0
        %3901 = vmatpush.bf16.xpose.msra.mxu0 %v3892
        %3902 = vmatmul.bf16.gmra.mxu0 %v3889
        %v3903 = vpop.f32.mrf.mxu0
        %v3904 = vadd.f32 0.0, %v3903
        %v3905 = vpop.f32.mrf.mxu0
        %v3906 = vadd.f32 0.0, %v3905
        %3907 = vdwg.mxu0
        %3908 = vrot.lane.b32.xlu0 %v1945, 104
        %v3909 = vpop.permute.xlu0 %3908
        %3910 = vrot.lane.b32.xlu0 %v1950, 104
        %v3911 = vpop.permute.xlu0 %3910
        %v3913 = vsel %vm1770, %v3909, 0
        %v3916 = vsel %vm1770, %v3911, 0
        %3918 = vmatpush.bf16.xpose.msra.mxu0 0
        %3919 = vmatpush.bf16.xpose.msra.mxu0 0
        %3920 = vmatpush.bf16.xpose.msra.mxu0 0
        %3921 = vmatpush.bf16.xpose.msra.mxu0 0
        %3922 = vmatpush.bf16.xpose.msra.mxu0 0
        %3923 = vmatpush.bf16.xpose.msra.mxu0 0
        %3924 = vmatpush.bf16.xpose.msra.mxu0 0
        %3925 = vmatpush.bf16.xpose.msra.mxu0 %v3916
        %3926 = vmatmul.bf16.gmra.mxu0 %v3913
        %v3927 = vpop.f32.mrf.mxu0
        %v3928 = vadd.f32 0.0, %v3927
        %v3929 = vpop.f32.mrf.mxu0
        %v3930 = vadd.f32 0.0, %v3929
        %3931 = vdwg.mxu0
        %3932 = vrot.lane.b32.xlu0 %v1975, 104
        %v3933 = vpop.permute.xlu0 %3932
        %3934 = vrot.lane.b32.xlu0 %v1980, 104
        %v3935 = vpop.permute.xlu0 %3934
        %v3937 = vsel %vm1770, %v3933, 0
        %v3940 = vsel %vm1770, %v3935, 0
        %3942 = vmatpush.bf16.xpose.msra.mxu0 0
        %3943 = vmatpush.bf16.xpose.msra.mxu0 0
        %3944 = vmatpush.bf16.xpose.msra.mxu0 0
        %3945 = vmatpush.bf16.xpose.msra.mxu0 0
        %3946 = vmatpush.bf16.xpose.msra.mxu0 0
        %3947 = vmatpush.bf16.xpose.msra.mxu0 0
        %3948 = vmatpush.bf16.xpose.msra.mxu0 0
        %3949 = vmatpush.bf16.xpose.msra.mxu0 %v3940
        %3950 = vmatmul.bf16.gmra.mxu0 %v3937
        %v3951 = vpop.f32.mrf.mxu0
        %v3952 = vadd.f32 0.0, %v3951
        %v3953 = vpop.f32.mrf.mxu0
        %v3954 = vadd.f32 0.0, %v3953
        %3955 = vdwg.mxu0
        %v3956 = vsel %vm2001, %v3784, -inf
        %3957 = vmax.xlane.f32.xlu0 %v3956
        %v3958 = vpop.xlane.xlu0 %3957
        %v3959 = vsel %vm2001, %v3786, -inf
        %3960 = vmax.xlane.f32.xlu0 %v3959
        %v3961 = vpop.xlane.xlu0 %3960
        %v3962 = vsel %vm2001, %v3808, -inf
        %3963 = vmax.xlane.f32.xlu0 %v3962
        %v3964 = vpop.xlane.xlu0 %3963
        %v3965 = vsel %vm2001, %v3810, -inf
        %3966 = vmax.xlane.f32.xlu0 %v3965
        %v3967 = vpop.xlane.xlu0 %3966
        %v3968 = vsel %vm2001, %v3832, -inf
        %3969 = vmax.xlane.f32.xlu0 %v3968
        %v3970 = vpop.xlane.xlu0 %3969
        %v3971 = vsel %vm2001, %v3834, -inf
        %3972 = vmax.xlane.f32.xlu0 %v3971
        %v3973 = vpop.xlane.xlu0 %3972
        %v3974 = vsel %vm2001, %v3856, -inf
        %3975 = vmax.xlane.f32.xlu0 %v3974
        %v3976 = vpop.xlane.xlu0 %3975
        %v3977 = vsel %vm2001, %v3858, -inf
        %3978 = vmax.xlane.f32.xlu0 %v3977
        %v3979 = vpop.xlane.xlu0 %3978
        %v3980 = vsel %vm2001, %v3880, -inf
        %3981 = vmax.xlane.f32.xlu0 %v3980
        %v3982 = vpop.xlane.xlu0 %3981
        %v3983 = vsel %vm2001, %v3882, -inf
        %3984 = vmax.xlane.f32.xlu0 %v3983
        %v3985 = vpop.xlane.xlu0 %3984
        %v3986 = vsel %vm2001, %v3904, -inf
        %3987 = vmax.xlane.f32.xlu0 %v3986
        %v3988 = vpop.xlane.xlu0 %3987
        %v3989 = vsel %vm2001, %v3906, -inf
        %3990 = vmax.xlane.f32.xlu0 %v3989
        %v3991 = vpop.xlane.xlu0 %3990
        %v3992 = vsel %vm2001, %v3928, -inf
        %3993 = vmax.xlane.f32.xlu0 %v3992
        %v3994 = vpop.xlane.xlu0 %3993
        %v3995 = vsel %vm2001, %v3930, -inf
        %3996 = vmax.xlane.f32.xlu0 %v3995
        %v3997 = vpop.xlane.xlu0 %3996
        %v3998 = vsel %vm2001, %v3952, -inf
        %3999 = vmax.xlane.f32.xlu0 %v3998
        %v4000 = vpop.xlane.xlu0 %3999
        %v4001 = vsel %vm2001, %v3954, -inf
        %4002 = vmax.xlane.f32.xlu0 %v4001
        %v4003 = vpop.xlane.xlu0 %4002
        %v4004 = vsub.f32 %v3784, %v3958
        %v4005 = vsub.f32 %v3786, %v3961
        %v4006 = vsub.f32 %v3808, %v3964
        %v4007 = vsub.f32 %v3810, %v3967
        %v4008 = vsub.f32 %v3832, %v3970
        %v4009 = vsub.f32 %v3834, %v3973
        %v4010 = vsub.f32 %v3856, %v3976
        %v4011 = vsub.f32 %v3858, %v3979
        %v4012 = vsub.f32 %v3880, %v3982
        %v4013 = vsub.f32 %v3882, %v3985
        %v4014 = vsub.f32 %v3904, %v3988
        %v4015 = vsub.f32 %v3906, %v3991
        %v4016 = vsub.f32 %v3928, %v3994
        %v4017 = vsub.f32 %v3930, %v3997
        %v4018 = vsub.f32 %v3952, %v4000
        %v4019 = vsub.f32 %v3954, %v4003
        %v4020 = vmul.f32 %v4004, 1.442695
        %v4021 = vpow.pop %v4020
        %v4022 = vmul.f32 %v4005, 1.442695
        %v4023 = vpow.pop %v4022
        %v4024 = vmul.f32 %v4006, 1.442695
        %v4025 = vpow.pop %v4024
        %v4026 = vmul.f32 %v4007, 1.442695
        %v4027 = vpow.pop %v4026
        %v4028 = vmul.f32 %v4008, 1.442695
        %v4029 = vpow.pop %v4028
        %v4030 = vmul.f32 %v4009, 1.442695
        %v4031 = vpow.pop %v4030
        %v4032 = vmul.f32 %v4010, 1.442695
        %v4033 = vpow.pop %v4032
        %v4034 = vmul.f32 %v4011, 1.442695
        %v4035 = vpow.pop %v4034
        %v4036 = vmul.f32 %v4012, 1.442695
        %v4037 = vpow.pop %v4036
        %v4038 = vmul.f32 %v4013, 1.442695
        %v4039 = vpow.pop %v4038
        %v4040 = vmul.f32 %v4014, 1.442695
        %v4041 = vpow.pop %v4040
        %v4042 = vmul.f32 %v4015, 1.442695
        %v4043 = vpow.pop %v4042
        %v4044 = vmul.f32 %v4016, 1.442695
        %v4045 = vpow.pop %v4044
        %v4046 = vmul.f32 %v4017, 1.442695
        %v4047 = vpow.pop %v4046
        %v4048 = vmul.f32 %v4018, 1.442695
        %v4049 = vpow.pop %v4048
        %v4050 = vmul.f32 %v4019, 1.442695
        %v4051 = vpow.pop %v4050
        %v4052 = vsel %vm2001, %v4021, 0.0
        %4053 = vadd.xlane.f32.xlu0 %v4052
        %v4054 = vpop.xlane.xlu0 %4053
        %v4055 = vsel %vm2001, %v4023, 0.0
        %4056 = vadd.xlane.f32.xlu0 %v4055
        %v4057 = vpop.xlane.xlu0 %4056
        %v4058 = vsel %vm2001, %v4025, 0.0
        %4059 = vadd.xlane.f32.xlu0 %v4058
        %v4060 = vpop.xlane.xlu0 %4059
        %v4061 = vsel %vm2001, %v4027, 0.0
        %4062 = vadd.xlane.f32.xlu0 %v4061
        %v4063 = vpop.xlane.xlu0 %4062
        %v4064 = vsel %vm2001, %v4029, 0.0
        %4065 = vadd.xlane.f32.xlu0 %v4064
        %v4066 = vpop.xlane.xlu0 %4065
        %v4067 = vsel %vm2001, %v4031, 0.0
        %4068 = vadd.xlane.f32.xlu0 %v4067
        %v4069 = vpop.xlane.xlu0 %4068
        %v4070 = vsel %vm2001, %v4033, 0.0
        %4071 = vadd.xlane.f32.xlu0 %v4070
        %v4072 = vpop.xlane.xlu0 %4071
        %v4073 = vsel %vm2001, %v4035, 0.0
        %4074 = vadd.xlane.f32.xlu0 %v4073
        %v4075 = vpop.xlane.xlu0 %4074
        %v4076 = vsel %vm2001, %v4037, 0.0
        %4077 = vadd.xlane.f32.xlu0 %v4076
        %v4078 = vpop.xlane.xlu0 %4077
        %v4079 = vsel %vm2001, %v4039, 0.0
        %4080 = vadd.xlane.f32.xlu0 %v4079
        %v4081 = vpop.xlane.xlu0 %4080
        %v4082 = vsel %vm2001, %v4041, 0.0
        %4083 = vadd.xlane.f32.xlu0 %v4082
        %v4084 = vpop.xlane.xlu0 %4083
        %v4085 = vsel %vm2001, %v4043, 0.0
        %4086 = vadd.xlane.f32.xlu0 %v4085
        %v4087 = vpop.xlane.xlu0 %4086
        %v4088 = vsel %vm2001, %v4045, 0.0
        %4089 = vadd.xlane.f32.xlu0 %v4088
        %v4090 = vpop.xlane.xlu0 %4089
        %v4091 = vsel %vm2001, %v4047, 0.0
        %4092 = vadd.xlane.f32.xlu0 %v4091
        %v4093 = vpop.xlane.xlu0 %4092
        %v4094 = vsel %vm2001, %v4049, 0.0
        %4095 = vadd.xlane.f32.xlu0 %v4094
        %v4096 = vpop.xlane.xlu0 %4095
        %v4097 = vsel %vm2001, %v4051, 0.0
        %4098 = vadd.xlane.f32.xlu0 %v4097
        %v4099 = vpop.xlane.xlu0 %4098
        %v4100 = vrcp.pop %v4054
        %v4101 = vrcp.pop %v4057
        %v4102 = vrcp.pop %v4060
        %v4103 = vrcp.pop %v4063
        %v4104 = vrcp.pop %v4066
        %v4105 = vrcp.pop %v4069
        %v4106 = vrcp.pop %v4072
        %v4107 = vrcp.pop %v4075
        %v4108 = vrcp.pop %v4078
        %v4109 = vrcp.pop %v4081
        %v4110 = vrcp.pop %v4084
        %v4111 = vrcp.pop %v4087
        %v4112 = vrcp.pop %v4090
        %v4113 = vrcp.pop %v4093
        %v4114 = vrcp.pop %v4096
        %v4115 = vrcp.pop %v4099
        %v4116 = vmul.f32 %v4021, %v4100
        %v4117 = vmul.f32 %v4023, %v4101
        %v4118 = vmul.f32 %v4025, %v4102
        %v4119 = vmul.f32 %v4027, %v4103
        %v4120 = vmul.f32 %v4029, %v4104
        %v4121 = vmul.f32 %v4031, %v4105
        %v4122 = vmul.f32 %v4033, %v4106
        %v4123 = vmul.f32 %v4035, %v4107
        %v4124 = vmul.f32 %v4037, %v4108
        %v4125 = vmul.f32 %v4039, %v4109
        %v4126 = vmul.f32 %v4041, %v4110
        %v4127 = vmul.f32 %v4043, %v4111
        %v4128 = vmul.f32 %v4045, %v4112
        %v4129 = vmul.f32 %v4047, %v4113
        %v4130 = vmul.f32 %v4049, %v4114
        %v4131 = vmul.f32 %v4051, %v4115
        %v4132 = vpack.c.bf16 %v4116, %v4116
        %v4133 = vpack.c.bf16 %v4117, %v4117
        %v4134 = vpack.c.bf16 %v4118, %v4118
        %v4135 = vpack.c.bf16 %v4119, %v4119
        %v4136 = vpack.c.bf16 %v4120, %v4120
        %v4137 = vpack.c.bf16 %v4121, %v4121
        %v4138 = vpack.c.bf16 %v4122, %v4122
        %v4139 = vpack.c.bf16 %v4123, %v4123
        %v4140 = vpack.c.bf16 %v4124, %v4124
        %v4141 = vpack.c.bf16 %v4125, %v4125
        %v4142 = vpack.c.bf16 %v4126, %v4126
        %v4143 = vpack.c.bf16 %v4127, %v4127
        %v4144 = vpack.c.bf16 %v4128, %v4128
        %v4145 = vpack.c.bf16 %v4129, %v4129
        %v4146 = vpack.c.bf16 %v4130, %v4130
        %v4147 = vpack.c.bf16 %v4131, %v4131
        %v4150 = vunpack.c.l.b16 %v4132
        %v4151 = vunpack.c.l.b16 %v4133
        %v4152 = vpack.c.b16 %v4151, %v4150
        %4153 = vrot.lane.b32.xlu0 %v2203, 104
        %v4154 = vpop.permute.xlu0 %4153
        %v4157 = vsel %vm2001, %v4152, 0
        %4159 = vmatpush.bf16.msra.mxu0 0
        %4160 = vmatpush.bf16.msra.mxu0 0
        %4161 = vmatpush.bf16.msra.mxu0 0
        %4162 = vmatpush.bf16.msra.mxu0 0
        %4163 = vmatpush.bf16.msra.mxu0 0
        %4164 = vmatpush.bf16.msra.mxu0 0
        %4165 = vmatpush.bf16.msra.mxu0 0
        %4166 = vmatpush.bf16.msra.mxu0 %v4154
        %4167 = vmatmul.bf16.gmra.mxu0 %v4157
        %v4168 = vpop.f32.mrf.mxu0
        %v4169 = vadd.f32 0.0, %v4168
        %v4170 = vpop.f32.mrf.mxu0
        %v4171 = vadd.f32 0.0, %v4170
        %4172 = vdwg.mxu0
        %v4175 = vunpack.c.l.b16 %v4134
        %v4176 = vunpack.c.l.b16 %v4135
        %v4177 = vpack.c.b16 %v4176, %v4175
        %4178 = vrot.lane.b32.xlu0 %v2231, 104
        %v4179 = vpop.permute.xlu0 %4178
        %v4182 = vsel %vm2001, %v4177, 0
        %4184 = vmatpush.bf16.msra.mxu0 0
        %4185 = vmatpush.bf16.msra.mxu0 0
        %4186 = vmatpush.bf16.msra.mxu0 0
        %4187 = vmatpush.bf16.msra.mxu0 0
        %4188 = vmatpush.bf16.msra.mxu0 0
        %4189 = vmatpush.bf16.msra.mxu0 0
        %4190 = vmatpush.bf16.msra.mxu0 0
        %4191 = vmatpush.bf16.msra.mxu0 %v4179
        %4192 = vmatmul.bf16.gmra.mxu0 %v4182
        %v4193 = vpop.f32.mrf.mxu0
        %v4194 = vadd.f32 0.0, %v4193
        %v4195 = vpop.f32.mrf.mxu0
        %v4196 = vadd.f32 0.0, %v4195
        %4197 = vdwg.mxu0
        %v4200 = vunpack.c.l.b16 %v4136
        %v4201 = vunpack.c.l.b16 %v4137
        %v4202 = vpack.c.b16 %v4201, %v4200
        %4203 = vrot.lane.b32.xlu0 %v2259, 104
        %v4204 = vpop.permute.xlu0 %4203
        %v4207 = vsel %vm2001, %v4202, 0
        %4209 = vmatpush.bf16.msra.mxu0 0
        %4210 = vmatpush.bf16.msra.mxu0 0
        %4211 = vmatpush.bf16.msra.mxu0 0
        %4212 = vmatpush.bf16.msra.mxu0 0
        %4213 = vmatpush.bf16.msra.mxu0 0
        %4214 = vmatpush.bf16.msra.mxu0 0
        %4215 = vmatpush.bf16.msra.mxu0 0
        %4216 = vmatpush.bf16.msra.mxu0 %v4204
        %4217 = vmatmul.bf16.gmra.mxu0 %v4207
        %v4218 = vpop.f32.mrf.mxu0
        %v4219 = vadd.f32 0.0, %v4218
        %v4220 = vpop.f32.mrf.mxu0
        %v4221 = vadd.f32 0.0, %v4220
        %4222 = vdwg.mxu0
        %v4225 = vunpack.c.l.b16 %v4138
        %v4226 = vunpack.c.l.b16 %v4139
        %v4227 = vpack.c.b16 %v4226, %v4225
        %4228 = vrot.lane.b32.xlu0 %v2287, 104
        %v4229 = vpop.permute.xlu0 %4228
        %v4232 = vsel %vm2001, %v4227, 0
        %4234 = vmatpush.bf16.msra.mxu0 0
        %4235 = vmatpush.bf16.msra.mxu0 0
        %4236 = vmatpush.bf16.msra.mxu0 0
        %4237 = vmatpush.bf16.msra.mxu0 0
        %4238 = vmatpush.bf16.msra.mxu0 0
        %4239 = vmatpush.bf16.msra.mxu0 0
        %4240 = vmatpush.bf16.msra.mxu0 0
        %4241 = vmatpush.bf16.msra.mxu0 %v4229
        %4242 = vmatmul.bf16.gmra.mxu0 %v4232
        %v4243 = vpop.f32.mrf.mxu0
        %v4244 = vadd.f32 0.0, %v4243
        %v4245 = vpop.f32.mrf.mxu0
        %v4246 = vadd.f32 0.0, %v4245
        %4247 = vdwg.mxu0
        %v4250 = vunpack.c.l.b16 %v4140
        %v4251 = vunpack.c.l.b16 %v4141
        %v4252 = vpack.c.b16 %v4251, %v4250
        %4253 = vrot.lane.b32.xlu0 %v2315, 104
        %v4254 = vpop.permute.xlu0 %4253
        %v4257 = vsel %vm2001, %v4252, 0
        %4259 = vmatpush.bf16.msra.mxu0 0
        %4260 = vmatpush.bf16.msra.mxu0 0
        %4261 = vmatpush.bf16.msra.mxu0 0
        %4262 = vmatpush.bf16.msra.mxu0 0
        %4263 = vmatpush.bf16.msra.mxu0 0
        %4264 = vmatpush.bf16.msra.mxu0 0
        %4265 = vmatpush.bf16.msra.mxu0 0
        %4266 = vmatpush.bf16.msra.mxu0 %v4254
        %4267 = vmatmul.bf16.gmra.mxu0 %v4257
        %v4268 = vpop.f32.mrf.mxu0
        %v4269 = vadd.f32 0.0, %v4268
        %v4270 = vpop.f32.mrf.mxu0
        %v4271 = vadd.f32 0.0, %v4270
        %4272 = vdwg.mxu0
        %v4275 = vunpack.c.l.b16 %v4142
        %v4276 = vunpack.c.l.b16 %v4143
        %v4277 = vpack.c.b16 %v4276, %v4275
        %4278 = vrot.lane.b32.xlu0 %v2343, 104
        %v4279 = vpop.permute.xlu0 %4278
        %v4282 = vsel %vm2001, %v4277, 0
        %4284 = vmatpush.bf16.msra.mxu0 0
        %4285 = vmatpush.bf16.msra.mxu0 0
        %4286 = vmatpush.bf16.msra.mxu0 0
        %4287 = vmatpush.bf16.msra.mxu0 0
        %4288 = vmatpush.bf16.msra.mxu0 0
        %4289 = vmatpush.bf16.msra.mxu0 0
        %4290 = vmatpush.bf16.msra.mxu0 0
        %4291 = vmatpush.bf16.msra.mxu0 %v4279
        %4292 = vmatmul.bf16.gmra.mxu0 %v4282
        %v4293 = vpop.f32.mrf.mxu0
        %v4294 = vadd.f32 0.0, %v4293
        %v4295 = vpop.f32.mrf.mxu0
        %v4296 = vadd.f32 0.0, %v4295
        %4297 = vdwg.mxu0
        %v4300 = vunpack.c.l.b16 %v4144
        %v4301 = vunpack.c.l.b16 %v4145
        %v4302 = vpack.c.b16 %v4301, %v4300
        %4303 = vrot.lane.b32.xlu0 %v2371, 104
        %v4304 = vpop.permute.xlu0 %4303
        %v4307 = vsel %vm2001, %v4302, 0
        %4309 = vmatpush.bf16.msra.mxu0 0
        %4310 = vmatpush.bf16.msra.mxu0 0
        %4311 = vmatpush.bf16.msra.mxu0 0
        %4312 = vmatpush.bf16.msra.mxu0 0
        %4313 = vmatpush.bf16.msra.mxu0 0
        %4314 = vmatpush.bf16.msra.mxu0 0
        %4315 = vmatpush.bf16.msra.mxu0 0
        %4316 = vmatpush.bf16.msra.mxu0 %v4304
        %4317 = vmatmul.bf16.gmra.mxu0 %v4307
        %v4318 = vpop.f32.mrf.mxu0
        %v4319 = vadd.f32 0.0, %v4318
        %v4320 = vpop.f32.mrf.mxu0
        %v4321 = vadd.f32 0.0, %v4320
        %4322 = vdwg.mxu0
        %v4325 = vunpack.c.l.b16 %v4146
        %v4326 = vunpack.c.l.b16 %v4147
        %v4327 = vpack.c.b16 %v4326, %v4325
        %4328 = vrot.lane.b32.xlu0 %v2399, 104
        %v4329 = vpop.permute.xlu0 %4328
        %v4332 = vsel %vm2001, %v4327, 0
        %4334 = vmatpush.bf16.msra.mxu0 0
        %4335 = vmatpush.bf16.msra.mxu0 0
        %4336 = vmatpush.bf16.msra.mxu0 0
        %4337 = vmatpush.bf16.msra.mxu0 0
        %4338 = vmatpush.bf16.msra.mxu0 0
        %4339 = vmatpush.bf16.msra.mxu0 0
        %4340 = vmatpush.bf16.msra.mxu0 0
        %4341 = vmatpush.bf16.msra.mxu0 %v4329
        %4342 = vmatmul.bf16.gmra.mxu0 %v4332
        %v4343 = vpop.f32.mrf.mxu0
        %v4344 = vadd.f32 0.0, %v4343
        %v4345 = vpop.f32.mrf.mxu0
        %v4346 = vadd.f32 0.0, %v4345
        %4347 = vdwg.mxu0
        %4364 = vrot.lane.b32.xlu0 %v4169, 24
        %v4365 = vpop.permute.xlu0 %4364
        %4366 = vrot.lane.b32.xlu0 %v4171, 24
        %v4367 = vpop.permute.xlu0 %4366
        %4368 = vrot.lane.b32.xlu0 %v4194, 24
        %v4369 = vpop.permute.xlu0 %4368
        %4370 = vrot.lane.b32.xlu0 %v4196, 24
        %v4371 = vpop.permute.xlu0 %4370
        %4372 = vrot.lane.b32.xlu0 %v4219, 24
        %v4373 = vpop.permute.xlu0 %4372
        %4374 = vrot.lane.b32.xlu0 %v4221, 24
        %v4375 = vpop.permute.xlu0 %4374
        %4376 = vrot.lane.b32.xlu0 %v4244, 24
        %v4377 = vpop.permute.xlu0 %4376
        %4378 = vrot.lane.b32.xlu0 %v4246, 24
        %v4379 = vpop.permute.xlu0 %4378
        %4380 = vrot.lane.b32.xlu0 %v4269, 24
        %v4381 = vpop.permute.xlu0 %4380
        %4382 = vrot.lane.b32.xlu0 %v4271, 24
        %v4383 = vpop.permute.xlu0 %4382
        %4384 = vrot.lane.b32.xlu0 %v4294, 24
        %v4385 = vpop.permute.xlu0 %4384
        %4386 = vrot.lane.b32.xlu0 %v4296, 24
        %v4387 = vpop.permute.xlu0 %4386
        %4388 = vrot.lane.b32.xlu0 %v4319, 24
        %v4389 = vpop.permute.xlu0 %4388
        %4390 = vrot.lane.b32.xlu0 %v4321, 24
        %v4391 = vpop.permute.xlu0 %4390
        %4392 = vrot.lane.b32.xlu0 %v4344, 24
        %v4393 = vpop.permute.xlu0 %4392
        %4394 = vrot.lane.b32.xlu0 %v4346, 24
        %v4395 = vpop.permute.xlu0 %4394
        %vm4412 = vcmask 261312
        %4413 = vst.msk [vmem:[#allocation2] sm:$0xff] %vm4412, %v4365
        %4414 = vst.msk [vmem:[#allocation2 + $0x8] sm:$0xff] %vm4412, %v4367
        %4415 = vst.msk [vmem:[#allocation2 + $0x10] sm:$0xff] %vm4412, %v4369
        %4416 = vst.msk [vmem:[#allocation2 + $0x18] sm:$0xff] %vm4412, %v4371
        %4417 = vst.msk [vmem:[#allocation2 + $0x20] sm:$0xff] %vm4412, %v4373
        %4418 = vst.msk [vmem:[#allocation2 + $0x28] sm:$0xff] %vm4412, %v4375
        %4419 = vst.msk [vmem:[#allocation2 + $0x30] sm:$0xff] %vm4412, %v4377
        %4420 = vst.msk [vmem:[#allocation2 + $0x38] sm:$0xff] %vm4412, %v4379
        %4421 = vst.msk [vmem:[#allocation2 + $0x40] sm:$0xff] %vm4412, %v4381
        %4422 = vst.msk [vmem:[#allocation2 + $0x48] sm:$0xff] %vm4412, %v4383
        %4423 = vst.msk [vmem:[#allocation2 + $0x50] sm:$0xff] %vm4412, %v4385
        %4424 = vst.msk [vmem:[#allocation2 + $0x58] sm:$0xff] %vm4412, %v4387
        %4425 = vst.msk [vmem:[#allocation2 + $0x60] sm:$0xff] %vm4412, %v4389
        %4426 = vst.msk [vmem:[#allocation2 + $0x68] sm:$0xff] %vm4412, %v4391
        %4427 = vst.msk [vmem:[#allocation2 + $0x70] sm:$0xff] %vm4412, %v4393
        %4428 = vst.msk [vmem:[#allocation2 + $0x78] sm:$0xff] %vm4412, %v4395
        %v4429 = vsub.f32 0.0, %v1497
        %v4430 = vsub.f32 0.0, %v1499
        %v4431 = vsub.f32 0.0, %v1502
        %v4432 = vsub.f32 0.0, %v1504
        %v4433 = vsub.f32 0.0, %v1507
        %v4434 = vsub.f32 0.0, %v1509
        %v4435 = vsub.f32 0.0, %v1512
        %v4436 = vsub.f32 0.0, %v1514
        %v4437 = vsub.f32 0.0, %v1517
        %v4438 = vsub.f32 0.0, %v1519
        %v4439 = vsub.f32 0.0, %v1522
        %v4440 = vsub.f32 0.0, %v1524
        %v4441 = vsub.f32 0.0, %v1527
        %v4442 = vsub.f32 0.0, %v1529
        %v4443 = vsub.f32 0.0, %v1532
        %v4444 = vsub.f32 0.0, %v1534
        %v4445 = vmul.f32 %v4429, 1.442695
        %v4446 = vpow.pop %v4445
        %v4447 = vmul.f32 %v4430, 1.442695
        %v4448 = vpow.pop %v4447
        %v4449 = vmul.f32 %v4431, 1.442695
        %v4450 = vpow.pop %v4449
        %v4451 = vmul.f32 %v4432, 1.442695
        %v4452 = vpow.pop %v4451
        %v4453 = vmul.f32 %v4433, 1.442695
        %v4454 = vpow.pop %v4453
        %v4455 = vmul.f32 %v4434, 1.442695
        %v4456 = vpow.pop %v4455
        %v4457 = vmul.f32 %v4435, 1.442695
        %v4458 = vpow.pop %v4457
        %v4459 = vmul.f32 %v4436, 1.442695
        %v4460 = vpow.pop %v4459
        %v4461 = vmul.f32 %v4437, 1.442695
        %v4462 = vpow.pop %v4461
        %v4463 = vmul.f32 %v4438, 1.442695
        %v4464 = vpow.pop %v4463
        %v4465 = vmul.f32 %v4439, 1.442695
        %v4466 = vpow.pop %v4465
        %v4467 = vmul.f32 %v4440, 1.442695
        %v4468 = vpow.pop %v4467
        %v4469 = vmul.f32 %v4441, 1.442695
        %v4470 = vpow.pop %v4469
        %v4471 = vmul.f32 %v4442, 1.442695
        %v4472 = vpow.pop %v4471
        %v4473 = vmul.f32 %v4443, 1.442695
        %v4474 = vpow.pop %v4473
        %v4475 = vmul.f32 %v4444, 1.442695
        %v4476 = vpow.pop %v4475
        %v4477 = vadd.f32 %v4446, 1.0
        %v4478 = vadd.f32 %v4448, 1.0
        %v4479 = vadd.f32 %v4450, 1.0
        %v4480 = vadd.f32 %v4452, 1.0
        %v4481 = vadd.f32 %v4454, 1.0
        %v4482 = vadd.f32 %v4456, 1.0
        %v4483 = vadd.f32 %v4458, 1.0
        %v4484 = vadd.f32 %v4460, 1.0
        %v4485 = vadd.f32 %v4462, 1.0
        %v4486 = vadd.f32 %v4464, 1.0
        %v4487 = vadd.f32 %v4466, 1.0
        %v4488 = vadd.f32 %v4468, 1.0
        %v4489 = vadd.f32 %v4470, 1.0
        %v4490 = vadd.f32 %v4472, 1.0
        %v4491 = vadd.f32 %v4474, 1.0
        %v4492 = vadd.f32 %v4476, 1.0
        %v4493 = vrcp.pop %v4477
        %v4494 = vrcp.pop %v4478
        %v4495 = vrcp.pop %v4479
        %v4496 = vrcp.pop %v4480
        %v4497 = vrcp.pop %v4481
        %v4498 = vrcp.pop %v4482
        %v4499 = vrcp.pop %v4483
        %v4500 = vrcp.pop %v4484
        %v4501 = vrcp.pop %v4485
        %v4502 = vrcp.pop %v4486
        %v4503 = vrcp.pop %v4487
        %v4504 = vrcp.pop %v4488
        %v4505 = vrcp.pop %v4489
        %v4506 = vrcp.pop %v4490
        %v4507 = vrcp.pop %v4491
        %v4508 = vrcp.pop %v4492
        %v4509 = vld [vmem:[#allocation2] sm:$0xff]
        %v4510 = vld [vmem:[#allocation2 + $0x8] sm:$0xff]
        %v4511 = vld [vmem:[#allocation2 + $0x10] sm:$0xff]
        %v4512 = vld [vmem:[#allocation2 + $0x18] sm:$0xff]
        %v4513 = vld [vmem:[#allocation2 + $0x20] sm:$0xff]
        %v4514 = vld [vmem:[#allocation2 + $0x28] sm:$0xff]
        %v4515 = vld [vmem:[#allocation2 + $0x30] sm:$0xff]
        %v4516 = vld [vmem:[#allocation2 + $0x38] sm:$0xff]
        %v4517 = vld [vmem:[#allocation2 + $0x40] sm:$0xff]
        %v4518 = vld [vmem:[#allocation2 + $0x48] sm:$0xff]
        %v4519 = vld [vmem:[#allocation2 + $0x50] sm:$0xff]
        %v4520 = vld [vmem:[#allocation2 + $0x58] sm:$0xff]
        %v4521 = vld [vmem:[#allocation2 + $0x60] sm:$0xff]
        %v4522 = vld [vmem:[#allocation2 + $0x68] sm:$0xff]
        %v4523 = vld [vmem:[#allocation2 + $0x70] sm:$0xff]
        %v4524 = vld [vmem:[#allocation2 + $0x78] sm:$0xff]
        %v4525 = vmul.f32 %v4509, %v4493
        %v4526 = vmul.f32 %v4510, %v4494
        %v4527 = vmul.f32 %v4511, %v4495
        %v4528 = vmul.f32 %v4512, %v4496
        %v4529 = vmul.f32 %v4513, %v4497
        %v4530 = vmul.f32 %v4514, %v4498
        %v4531 = vmul.f32 %v4515, %v4499
        %v4532 = vmul.f32 %v4516, %v4500
        %v4533 = vmul.f32 %v4517, %v4501
        %v4534 = vmul.f32 %v4518, %v4502
        %v4535 = vmul.f32 %v4519, %v4503
        %v4536 = vmul.f32 %v4520, %v4504
        %v4537 = vmul.f32 %v4521, %v4505
        %v4538 = vmul.f32 %v4522, %v4506
        %v4539 = vmul.f32 %v4523, %v4507
        %v4540 = vmul.f32 %v4524, %v4508
        %v4541 = vpack.c.bf16 %v4526, %v4525
        %v4542 = vpack.c.bf16 %v4528, %v4527
        %v4543 = vpack.c.bf16 %v4530, %v4529
        %v4544 = vpack.c.bf16 %v4532, %v4531
        %v4545 = vpack.c.bf16 %v4534, %v4533
        %v4546 = vpack.c.bf16 %v4536, %v4535
        %v4547 = vpack.c.bf16 %v4538, %v4537
        %v4548 = vpack.c.bf16 %v4540, %v4539
        %v4549 = vld [vmem:[#allocation12] sm:$0xf]
        %v4550 = vld [vmem:[#allocation12 + $0x4] sm:$0xf]
        %v4551 = vld [vmem:[#allocation12 + $0x8] sm:$0xf]
        %v4552 = vld [vmem:[#allocation12 + $0xc] sm:$0xf]
        %v4553 = vld [vmem:[#allocation14] sm:$0x1]
        %v4555 = vperm.slane %v4553, 0
        %v4561 = vunpack.c.l.b16 %v4549
        %v4562 = vunpack.c.l.b16 %v4550
        %v4563 = vunpack.c.l.b16 %v4551
        %v4564 = vunpack.c.l.b16 %v4552
        %v4565 = vpack.c.b16 %v4562, %v4561
        %v4566 = vpack.c.b16 %v4564, %v4563
        %vm4569 = vcmask 261120
        %v4571 = vsel %vm4569, %v4541, 0
        %v4574 = vsel %vm4569, %v4542, 0
        %v4577 = vsel %vm4569, %v4543, 0
        %v4580 = vsel %vm4569, %v4544, 0
        %v4583 = vsel %vm4569, %v4545, 0
        %v4586 = vsel %vm4569, %v4546, 0
        %v4589 = vsel %vm4569, %v4547, 0
        %v4592 = vsel %vm4569, %v4548, 0
        %4594 = vmatpush.bf16.msra.mxu0 0
        %4595 = vmatpush.bf16.msra.mxu0 0
        %4596 = vmatpush.bf16.msra.mxu0 0
        %4597 = vmatpush.bf16.msra.mxu0 0
        %4598 = vmatpush.bf16.msra.mxu0 0
        %4599 = vmatpush.bf16.msra.mxu0 0
        %4600 = vmatpush.bf16.msra.mxu0 %v4566
        %4601 = vmatpush.bf16.msra.mxu0 %v4565
        %4602 = vmatmul.bf16.gmra.mxu0 %v4571
        %v4603 = vpop.f32.mrf.mxu0
        %v4604 = vadd.f32 %v4555, %v4603
        %v4605 = vpop.f32.mrf.mxu0
        %v4606 = vadd.f32 %v4555, %v4605
        %4607 = vmatmul.bf16.gmra.mxu0 %v4574
        %v4608 = vpop.f32.mrf.mxu0
        %v4609 = vadd.f32 %v4555, %v4608
        %v4610 = vpop.f32.mrf.mxu0
        %v4611 = vadd.f32 %v4555, %v4610
        %4612 = vmatmul.bf16.gmra.mxu0 %v4577
        %v4613 = vpop.f32.mrf.mxu0
        %v4614 = vadd.f32 %v4555, %v4613
        %v4615 = vpop.f32.mrf.mxu0
        %v4616 = vadd.f32 %v4555, %v4615
        %4617 = vmatmul.bf16.gmra.mxu0 %v4580
        %v4618 = vpop.f32.mrf.mxu0
        %v4619 = vadd.f32 %v4555, %v4618
        %v4620 = vpop.f32.mrf.mxu0
        %v4621 = vadd.f32 %v4555, %v4620
        %4622 = vmatmul.bf16.gmra.mxu0 %v4583
        %v4623 = vpop.f32.mrf.mxu0
        %v4624 = vadd.f32 %v4555, %v4623
        %v4625 = vpop.f32.mrf.mxu0
        %v4626 = vadd.f32 %v4555, %v4625
        %4627 = vmatmul.bf16.gmra.mxu0 %v4586
        %v4628 = vpop.f32.mrf.mxu0
        %v4629 = vadd.f32 %v4555, %v4628
        %v4630 = vpop.f32.mrf.mxu0
        %v4631 = vadd.f32 %v4555, %v4630
        %4632 = vmatmul.bf16.gmra.mxu0 %v4589
        %v4633 = vpop.f32.mrf.mxu0
        %v4634 = vadd.f32 %v4555, %v4633
        %v4635 = vpop.f32.mrf.mxu0
        %v4636 = vadd.f32 %v4555, %v4635
        %4637 = vmatmul.bf16.gmra.mxu0 %v4592
        %v4638 = vpop.f32.mrf.mxu0
        %v4639 = vadd.f32 %v4555, %v4638
        %v4640 = vpop.f32.mrf.mxu0
        %v4641 = vadd.f32 %v4555, %v4640
        %4642 = vdwg.mxu0
        %4643 = vst.msk [vmem:[%s523] sm:$0xff] %vm546, %v4604
        %4644 = vst.msk [vmem:[%s523 + $0x8] sm:$0xff] %vm546, %v4606
        %4645 = vst.msk [vmem:[%s523 + $0x10] sm:$0xff] %vm546, %v4609
        %4646 = vst.msk [vmem:[%s523 + $0x18] sm:$0xff] %vm546, %v4611
        %4647 = vst.msk [vmem:[%s523 + $0x20] sm:$0xff] %vm546, %v4614
        %4648 = vst.msk [vmem:[%s523 + $0x28] sm:$0xff] %vm546, %v4616
        %4649 = vst.msk [vmem:[%s523 + $0x30] sm:$0xff] %vm546, %v4619
        %4650 = vst.msk [vmem:[%s523 + $0x38] sm:$0xff] %vm546, %v4621
        %4651 = vst.msk [vmem:[%s523 + $0x40] sm:$0xff] %vm546, %v4624
        %4652 = vst.msk [vmem:[%s523 + $0x48] sm:$0xff] %vm546, %v4626
        %4653 = vst.msk [vmem:[%s523 + $0x50] sm:$0xff] %vm546, %v4629
        %4654 = vst.msk [vmem:[%s523 + $0x58] sm:$0xff] %vm546, %v4631
        %4655 = vst.msk [vmem:[%s523 + $0x60] sm:$0xff] %vm546, %v4634
        %4656 = vst.msk [vmem:[%s523 + $0x68] sm:$0xff] %vm546, %v4636
        %4657 = vst.msk [vmem:[%s523 + $0x70] sm:$0xff] %vm546, %v4639
        %4658 = vst.msk [vmem:[%s523 + $0x78] sm:$0xff] %vm546, %v4641
        %s4659 = sand.u32 %s278, 1
        %s4660 = scalar_lea.sflag [#allocation5], %s4659
        %s4661 = sand.u32 %s278, 1
        %s4662 = smul.addr %s4661, 128
        %s4663 = scalar_lea.vmem [#allocation15], %s4662
        // Predicated region
        $region89: #{inter_cross_attention_forward.1} parent=59 // pred_check
          %p4664 = pneg %p288
        $region90: #{inter_cross_attention_forward.1} parent=59 // pred_check_branch
          %4666 = sbr.rel (%p4664) target = $region92
        $region91: #{inter_cross_attention_forward.1} parent=59 // pred_region
          %s4667 = smul.u32 8, %s37
          %4669 = vsyncadd %s4660, 0
          %s4670 = smul.addr %s4667, 2
          %s4671 = smul.addr %s36, 16
          %s4672 = sadd.s32 %s4670, %s4671
          %s4673 = smul.addr %s4672, 8
          %s4674 = scalar_lea.hbm %s10, %s4673
          %s4675 = sshll.u32 %s4663, 4
          %s4676 = int_to_ptr.vmem [resolvable:$true] %s4675
          %s4677 = sshll.u32 %s4674, 4
          %s4678 = int_to_ptr.hbm [resolvable:$true] %s4677
          %4683 = dma.vmem_to_hbm [thread:$0]  %s4676, 2048, %s4678, %s4660, 128, 128, 8
        $region92: #{inter_cross_attention_forward.1} parent=59 // pred_fallthru
          _
      $region60: #{inter_cross_attention_forward.1} parent=5 // pred_fallthru
        _
      %p4684 = scmp.le.s32.totalorder 2, %s27
      // Predicated region
      $region93: #{inter_cross_attention_forward.1} parent=5 // pred_check
        %p4685 = pneg %p4684
      $region94: #{inter_cross_attention_forward.1} parent=5 // pred_check_branch
        %4687 = sbr.rel (%p4685) target = $region96
      $region95: #{inter_cross_attention_forward.1} parent=5 // pred_region
        %s4688 = ssub.s32 %s27, 2
        // Predicated region
        $region97: #{inter_cross_attention_forward.1} parent=95 // pred_check
          %p4689 = pneg %p294
        $region98: #{inter_cross_attention_forward.1} parent=95 // pred_check_branch
          %4691 = sbr.rel (%p4689) target = $region100
        $region99: #{inter_cross_attention_forward.1} parent=95 // pred_region
          %s4692 = sand.u32 %s279, 1
          %s4693 = scalar_lea.sflag [#allocation5], %s4692
          %s4694 = sand.u32 %s279, 1
          %s4695 = smul.addr %s4694, 128
          %s4696 = scalar_lea.vmem [#allocation15], %s4695
          %4698 = dma.done %s4693, 2048
        $region100: #{inter_cross_attention_forward.1} parent=95 // pred_fallthru
          _
      $region96: #{inter_cross_attention_forward.1} parent=5 // pred_fallthru
        _
    $region6: #{inter_cross_attention_forward.1} parent=1 // loop_footer
      %s31 = sadd.s32 1, %s27
    $region7: #{inter_cross_attention_forward.1} parent=1 // loop_footer_branch
      %26 = sbr.rel target = $region3
    $region8: #{inter_cross_attention_forward.1} parent=1 // loop_exit
      _
    %4699 = vsyncpa [#allocation4], 1
    %s4700 = scalar_lea.sflag [#allocation4], 1
    %4701 = vsyncpa %s4700, 1
    %4702 = vsyncpa [#allocation7], 1
    %s4703 = scalar_lea.sflag [#allocation7], 1
    %4704 = vsyncpa %s4703, 1
    %4705 = vsyncpa [#allocation10], 1
    %4706 = vsyncpa [#allocation13], 1
    %4707 = vsyncpa [#allocation5], 1
    %s4708 = scalar_lea.sflag [#allocation5], 1
    %4709 = vsyncpa %s4708, 1

</llo_original>
